<compile_context>
chip_gen: v7x
topology: tpu7x:2x2x1
jax: 0.10.0
libtpu: 0.0.40
codegen_flags: <defaults>
</compile_context>

<pallas_src>
import jax
import jax.numpy as jnp
from jax import lax
from jax.experimental import pallas as pl
from jax.experimental.pallas import tpu as pltpu

# ---- module constants (from DBCNN.__init__) ---------------------------------
IN_CHANNELS = 512          # self.in_channels
SCNN_CHANNELS = 128        # projection input channels
CA_RATIO = 4               # myChannelAttention ratio
NUM_BINS = 5               # self.num_bins
NUM_CLASSES = 10           # options['numbin']
NUM_CLASSES_PAD = 16       # class dim padded only to the bf16 sublane tile
RGB_K = 8                  # 3 RGB channels zero-padded to 8 for the MXU dot

HIST_CENTERS = (-0.05, -0.025, 0.0, 0.025, 0.05)
HIST_GAMMA = 800.0


def _round_up(x, m):
    return (x + m - 1) // m * m


def _pad_rows(x2d, mp):
    m = x2d.shape[0]
    if mp == m:
        return x2d
    return jnp.pad(x2d, ((0, mp - m), (0, 0)))


def _largest_divisor_leq(n, cap):
    best = 1
    for d in range(1, min(n, cap) + 1):
        if n % d == 0:
            best = d
    return best


def _pick_k_tile(f, max_tf=2048, min_steps=4):
    """Largest K tile (multiple of 128, divides f) with >= min_steps grid steps."""
    tf = f
    while (tf % 2 == 0 and (tf // 2) % 128 == 0
           and (tf > max_tf or f // tf < min_steps)):
        tf //= 2
    return tf


# ---------------------------------------------------------------------------
# Kernel 1: fused SCNN stand-in + projection
#   rgb (tm, 8) f32 -> tanh(rgb @ w_scnn + b) -> (tm,128) -> MXU 128->512
#   -> folded BatchNorm + ReLU, emitted as bf16.
# ---------------------------------------------------------------------------
def scnn_projection(rgb2d, w_rgb, b_rgb, w_proj, scale, bias, *, tm_max=1024):
    M = rgb2d.shape[0]
    cmid = w_rgb.shape[1]
    cout = w_proj.shape[1]
    tm = min(tm_max, _round_up(M, 8))
    mp = _round_up(M, tm)
    xp = _pad_rows(rgb2d, mp)

    def kernel(x_ref, wr_ref, br_ref, wp_ref, s_ref, b_ref, o_ref):
        rgb = x_ref[...]                                      # (tm, 8) f32
        h = jnp.dot(rgb.astype(jnp.bfloat16), wr_ref[...],
                    preferred_element_type=jnp.float32) + br_ref[...]
        h = jnp.tanh(h)                                       # (tm, 128) f32
        y = jnp.dot(h.astype(jnp.bfloat16), wp_ref[...],
                    preferred_element_type=jnp.float32)       # (tm, 512) f32
        y = jnp.maximum(y * s_ref[...] + b_ref[...], 0.0)
        o_ref[...] = y.astype(jnp.bfloat16)

    out = pl.pallas_call(
        kernel,
        out_shape=jax.ShapeDtypeStruct((mp, cout), jnp.bfloat16),
        grid=(mp // tm,),
        in_specs=[
            pl.BlockSpec((tm, RGB_K), lambda i: (i, 0)),
            pl.BlockSpec((RGB_K, cmid), lambda i: (0, 0)),
            pl.BlockSpec((1, cmid), lambda i: (0, 0)),
            pl.BlockSpec((cmid, cout), lambda i: (0, 0)),
            pl.BlockSpec((1, cout), lambda i: (0, 0)),
            pl.BlockSpec((1, cout), lambda i: (0, 0)),
        ],
        out_specs=pl.BlockSpec((tm, cout), lambda i: (i, 0)),
        compiler_params=pltpu.CompilerParams(dimension_semantics=("parallel",)),
    )(xp, w_rgb, b_rgb, w_proj, scale, bias)
    return out[:M]


# ---------------------------------------------------------------------------
# Kernel 2: MaxPool2d(2,2) fused with myChannelAttention
#   input x_win: (N, H2//2, 2, W2//2, 2*C) bf16 (lane-merged row-pair view)
#   gridded over (batch, row-pair chunks); sum/max accumulated in scratch,
#   MLP + sigmoid finalized on the last chunk.  output: (N, 1, C) f32.
# ---------------------------------------------------------------------------
def channel_attention(x_win, w1_bf16, w2_bf16, *, max_chunk=8):
    N, h2h, _, wh, c2 = x_win.shape
    C = c2 // 2
    rc = _largest_divisor_leq(h2h, max_chunk)
    n_chunks = h2h // rc
    inv_nwin = 1.0 / float(h2h * wh)

    def kernel(x_ref, w1_ref, w2_ref, o_ref, sum_acc, max_acc):
        j = pl.program_id(1)

        @pl.when(j == 0)
        def _():
            sum_acc[...] = jnp.zeros_like(sum_acc)
            max_acc[...] = jnp.full((1, C), -jnp.inf, jnp.float32)

        x = x_ref[...].astype(jnp.float32)                    # (rc, 2, wh, 2C)
        rowmax = jnp.maximum(x[:, 0], x[:, 1])                # (rc, wh, 2C)
        wmax = jnp.maximum(rowmax[..., :C], rowmax[..., C:])  # 2x2 window max
        s = jnp.sum(wmax, axis=0)                             # (wh, C)
        sum_acc[...] += jnp.sum(s, axis=0, keepdims=True)     # (1, C)
        m = jnp.max(wmax, axis=0)                             # (wh, C)
        max_acc[...] = jnp.maximum(max_acc[...],
                                   jnp.max(m, axis=0, keepdims=True))

        @pl.when(j == n_chunks - 1)
        def _():
            avg = sum_acc[...] * inv_nwin
            feats = jnp.concatenate([avg, max_acc[...]], axis=0)   # (2, C)
            h = jnp.dot(feats.astype(jnp.bfloat16), w1_ref[...],
                        preferred_element_type=jnp.float32)
            h = jnp.maximum(h, 0.0)
            y = jnp.dot(h.astype(jnp.bfloat16), w2_ref[...],
                        preferred_element_type=jnp.float32)        # (2, C)
            o_ref[...] = jax.nn.sigmoid(y[0:1, :] + y[1:2, :])     # (1, C)

    return pl.pallas_call(
        kernel,
        out_shape=jax.ShapeDtypeStruct((N, 1, C), jnp.float32),
        grid=(N, n_chunks),
        in_specs=[
            pl.BlockSpec((None, rc, 2, wh, c2), lambda n, j: (n, j, 0, 0, 0)),
            pl.BlockSpec((C, C // CA_RATIO), lambda n, j: (0, 0)),
            pl.BlockSpec((C // CA_RATIO, C), lambda n, j: (0, 0)),
        ],
        out_specs=pl.BlockSpec((None, 1, C), lambda n, j: (n, 0, 0)),
        scratch_shapes=[pltpu.VMEM((1, C), jnp.float32),
                        pltpu.VMEM((1, C), jnp.float32)],
        compiler_params=pltpu.CompilerParams(
            dimension_semantics=("parallel", "arbitrary")),
    )(x_win, w1_bf16, w2_bf16)


# ---------------------------------------------------------------------------
# Kernel 3: fused VGG stand-in + channel weighting + double F.normalize
#   rgb (HW, 8) -> x1 = tanh(rgb @ w_vgg + b); y = x1 * x2_w;
#   normalize over C per location, then normalize the flat per-sample vector
#   (derived from the first-pass norms: single elementwise pass, rsqrt on EUP).
# ---------------------------------------------------------------------------
def vgg_weighted_normalize(rgb, w_rgb, b_rgb, x2w):
    N, HW, _ = rgb.shape
    C = w_rgb.shape[1]
    EPS2 = 1e-24  # == (1e-12)^2 ; rsqrt(max(n^2, eps^2)) == 1/max(||x||, eps)

    def kernel(rgb_ref, wr_ref, br_ref, w_ref, o_ref):
        rgb_v = rgb_ref[...]                                   # (HW, 8) f32
        x1 = jnp.tanh(jnp.dot(rgb_v.astype(jnp.bfloat16), wr_ref[...],
                              preferred_element_type=jnp.float32)
                      + br_ref[...])                           # (HW, C)
        y = x1 * w_ref[...]
        n2 = jnp.sum(y * y, axis=-1, keepdims=True)            # (HW, 1)
        inv1 = lax.rsqrt(jnp.maximum(n2, EPS2))
        y1 = y * inv1
        # ||y1||^2 per row == n2 * inv1^2 -> flat norm without a 2nd pass
        total = jnp.sum(n2 * inv1 * inv1, axis=0, keepdims=True)   # (1, 1)
        inv2 = lax.rsqrt(jnp.maximum(total, EPS2))
        o_ref[...] = y1 * inv2

    return pl.pallas_call(
        kernel,
        out_shape=jax.ShapeDtypeStruct((N, HW, C), jnp.float32),
        grid=(N,),
        in_specs=[
            pl.BlockSpec((None, HW, RGB_K), lambda n: (n, 0, 0)),
            pl.BlockSpec((RGB_K, C), lambda n: (0, 0)),
            pl.BlockSpec((1, C), lambda n: (0, 0)),
            pl.BlockSpec((None, 1, C), lambda n: (n, 0, 0)),
        ],
        out_specs=pl.BlockSpec((None, HW, C), lambda n: (n, 0, 0)),
        compiler_params=pltpu.CompilerParams(dimension_semantics=("parallel",)),
    )(rgb, w_rgb, b_rgb, x2w)


# ---------------------------------------------------------------------------
# Kernel 4: fused SoftHistogram + fc, K-tiled and split across TensorCores.
#   x: (N, F) f32, w_bins: (NUM_BINS, 16, F) bf16 (features minor!, zero in the
#   padded class rows), bias: (1, 16) f32.  Never materializes the (N, 5F)
#   histogram; partial logits per core-split combined by a tiny finalize kernel
#   that applies the class mask + softmax.
# ---------------------------------------------------------------------------
def _softmax_finalize_kernel(p_ref, b_ref, o_ref):
    logits = jnp.sum(p_ref[...], axis=0) + b_ref[...]          # (N, 16)
    col = lax.broadcasted_iota(jnp.int32, logits.shape, 1)
    logits = jnp.where(col < NUM_CLASSES, logits, -jnp.inf)
    m = jnp.max(logits, axis=-1, keepdims=True)
    e = jnp.exp(logits - m)
    o_ref[...] = e / jnp.sum(e, axis=-1, keepdims=True)


def hist_fc_softmax(x, w_bins, bias):
    N, F = x.shape
    assert F % 128 == 0
    assert w_bins.shape == (NUM_BINS, NUM_CLASSES_PAD, F)
    tf = _pick_k_tile(F)
    ksteps = F // tf
    n_split = 2 if (ksteps % 2 == 0 and ksteps >= 2) else 1    # v7x: one half per TC
    kpc = ksteps // n_split

    def kernel(x_ref, w_ref, o_ref, acc_ref):
        j = pl.program_id(1)

        @pl.when(j == 0)
        def _():
            acc_ref[...] = jnp.zeros_like(acc_ref)

        xv = x_ref[...]                                        # (N, tf) f32
        acc = acc_ref[...]
        for b in range(NUM_BINS):                              # unrolled: 5 exp + dot
            d = xv - HIST_CENTERS[b]
            h = jnp.exp(-HIST_GAMMA * (d * d))                 # EUP, f32
            acc = acc + lax.dot_general(
                h.astype(jnp.bfloat16), w_ref[b],
                dimension_numbers=(((1,), (1,)), ((), ())),
                preferred_element_type=jnp.float32)            # (N, 16)
        acc_ref[...] = acc

        @pl.when(j == kpc - 1)
        def _():
            o_ref[...] = acc_ref[...]

    partial = pl.pallas_call(
        kernel,
        out_shape=jax.ShapeDtypeStruct((n_split, N, NUM_CLASSES_PAD), jnp.float32),
        grid=(n_split, kpc),
        in_specs=[
            pl.BlockSpec((N, tf), lambda c, j: (0, c * kpc + j)),
            pl.BlockSpec((NUM_BINS, NUM_CLASSES_PAD, tf),
                         lambda c, j: (0, 0, c * kpc + j)),
        ],
        out_specs=pl.BlockSpec((None, N, NUM_CLASSES_PAD), lambda c, j: (c, 0, 0)),
        scratch_shapes=[pltpu.VMEM((N, NUM_CLASSES_PAD), jnp.float32)],
        compiler_params=pltpu.CompilerParams(
            dimension_semantics=("parallel", "arbitrary")),
    )(x, w_bins)

    probs = pl.pallas_call(
        _softmax_finalize_kernel,
        out_shape=jax.ShapeDtypeStruct((N, NUM_CLASSES_PAD), jnp.float32),
    )(partial, bias)
    return probs[:, :NUM_CLASSES]


# ---------------------------------------------------------------------------
# Parameters (deterministic, synthetic) and full forward pass
# ---------------------------------------------------------------------------
def _avgpool_nchw(x, k):
    N, C, H, W = x.shape
    return x.reshape(N, C, H // k, k, W // k, k).mean(axis=(3, 5))


def init_params(key, *, h1, w1):
    ks = jax.random.split(key, 14)

    def nrm(k, shape, fan_in):
        return (jax.random.normal(k, shape, jnp.float32) /
                jnp.sqrt(jnp.float32(fan_in)))

    p = {}
    # stand-in SCNN pointwise (features2), RGB rows 3..7 are zero padding
    w_scnn = jnp.zeros((RGB_K, SCNN_CHANNELS), jnp.float32)
    p["w_scnn"] = w_scnn.at[:3].set(nrm(ks[0], (3, SCNN_CHANNELS), 3.0)
                                    ).astype(jnp.bfloat16)
    p["b_scnn"] = 0.1 * jax.random.normal(ks[1], (1, SCNN_CHANNELS), jnp.float32)
    # stand-in VGG16 pointwise (features1_3)
    w_vgg = jnp.zeros((RGB_K, IN_CHANNELS), jnp.float32)
    p["w_vgg"] = w_vgg.at[:3].set(nrm(ks[2], (3, IN_CHANNELS), 3.0)
                                  ).astype(jnp.bfloat16)
    p["b_vgg"] = 0.1 * jax.random.normal(ks[3], (1, IN_CHANNELS), jnp.float32)
    # projection: Conv2d(128,512,1) + BatchNorm2d(512) (eval) folded into scale/bias
    p["w_proj"] = nrm(ks[4], (SCNN_CHANNELS, IN_CHANNELS),
                      SCNN_CHANNELS).astype(jnp.bfloat16)
    b_conv = 0.05 * jax.random.normal(ks[5], (IN_CHANNELS,), jnp.float32)
    gamma = 0.5 + jax.random.uniform(ks[6], (IN_CHANNELS,), jnp.float32)
    beta = 0.05 * jax.random.normal(ks[7], (IN_CHANNELS,), jnp.float32)
    mean = 0.05 * jax.random.normal(ks[8], (IN_CHANNELS,), jnp.float32)
    var = 0.5 + jax.random.uniform(ks[9], (IN_CHANNELS,), jnp.float32)
    scale = gamma / jnp.sqrt(var + 1e-5)
    p["proj_scale"] = scale.reshape(1, IN_CHANNELS)
    p["proj_bias"] = (beta + scale * (b_conv - mean)).reshape(1, IN_CHANNELS)
    # myChannelAttention (bias-free 1x1 convs), bf16 for the MXU
    p["ca_w1"] = nrm(ks[10], (IN_CHANNELS, IN_CHANNELS // CA_RATIO),
                     IN_CHANNELS).astype(jnp.bfloat16)
    p["ca_w2"] = nrm(ks[11], (IN_CHANNELS // CA_RATIO, IN_CHANNELS),
                     IN_CHANNELS // CA_RATIO).astype(jnp.bfloat16)
    # fc: Linear(in_channels*num_bins*h1*w1, numbin), stored bin-major with the
    # feature dim (HWC order, matching xn.reshape(N,-1)) minor and the class
    # dim padded only to 16, zero in the padded class rows; bf16 for the MXU.
    f_real = IN_CHANNELS * h1 * w1
    w_real = nrm(ks[12], (NUM_BINS, NUM_CLASSES, f_real), NUM_BINS * f_real)
    fc_w = jnp.zeros((NUM_BINS, NUM_CLASSES_PAD, f_real), jnp.float32)
    p["fc_w"] = fc_w.at[:, :NUM_CLASSES, :].set(w_real).astype(jnp.bfloat16)
    fc_b = jnp.zeros((1, NUM_CLASSES_PAD), jnp.float32)
    p["fc_b"] = fc_b.at[0, :NUM_CLASSES].set(
        0.05 * jax.random.normal(ks[13], (NUM_CLASSES,), jnp.float32))
    return p


def dbcnn_forward(X, params):
    """X: (N, 3, H, W) float32, NCHW (matching the PyTorch module)."""
    N = X.shape[0]
    x = X.astype(jnp.float32)

    # pooling in NCHW (layout-agnostic); only the small pooled tensors are
    # transposed to channels-last.  /8 pool derived from the /4 pool.
    p4 = _avgpool_nchw(x, 4)                                   # (N, 3, H/4, W/4)
    p8 = _avgpool_nchw(p4, 2)                                  # (N, 3, H/8, W/8)
    _, _, H2, W2 = p4.shape
    _, _, H1, W1 = p8.shape

    # --- features2 (SCNN stand-in) fused with projection + BN + ReLU ---------
    rgb2 = jnp.transpose(p4, (0, 2, 3, 1)).reshape(N * H2 * W2, 3)
    rgb2 = jnp.pad(rgb2, ((0, 0), (0, RGB_K - 3)))
    x2p = scnn_projection(rgb2, params["w_scnn"], params["b_scnn"],
                          params["w_proj"], params["proj_scale"],
                          params["proj_bias"])                 # (M, 512) bf16

    # --- MaxPool2d(2,2) + channel attention ----------------------------------
    # lane-merged row-pair view: row pairs on an outer dim, column pairs in
    # adjacent 512-lane halves -> in-kernel 2x2 max with no window gather.
    x2_win = x2p.reshape(N, H2 // 2, 2, W2 // 2, 2 * IN_CHANNELS)
    x2_w = channel_attention(x2_win, params["ca_w1"], params["ca_w2"])  # (N,1,512)

    # --- features1_3 (VGG stand-in) fused with weighting + double normalize --
    rgb1 = jnp.transpose(p8, (0, 2, 3, 1)).reshape(N, H1 * W1, 3)
    rgb1 = jnp.pad(rgb1, ((0, 0), (0, 0), (0, RGB_K - 3)))
    xn = vgg_weighted_normalize(rgb1, params["w_vgg"], params["b_vgg"], x2_w)

    # features flattened in HWC order (fc weight was built in this order at
    # init), so no runtime transpose is needed.
    xf = xn.reshape(N, H1 * W1 * IN_CHANNELS)

    # --- SoftHistogram + fc + softmax (fused) ---------------------------------
    return hist_fc_softmax(xf, params["fc_w"], params["fc_b"])


if __name__ == "__main__":
    key = jax.random.PRNGKey(0)
    kx, kp = jax.random.split(key)

    # small shapes: N=2, 3-channel 32x32 image -> stand-in features at 8x8 / 4x4
    X = jax.random.normal(kx, (2, 3, 32, 32), jnp.float32)
    params = init_params(kp, h1=4, w1=4)

    fwd = jax.jit(dbcnn_forward)
    out = jax.block_until_ready(fwd(X, params))

    assert out.shape == (2, NUM_CLASSES)
    assert bool(jnp.all(jnp.isfinite(out)))
    assert bool(jnp.allclose(jnp.sum(out, axis=1), 1.0, atol=1e-4))
    print("KERNEL_OK")
</pallas_src>

<mosaic_0001>
module attributes {stable_mosaic.version = 11 : i64} {
  func.func @kernel(%arg0: i32, %arg1: memref<128x8xf32, #tpu.memory_space<vmem>>, %arg2: memref<8x128xbf16, #tpu.memory_space<vmem>>, %arg3: memref<1x128xf32, #tpu.memory_space<vmem>>, %arg4: memref<128x512xbf16, #tpu.memory_space<vmem>>, %arg5: memref<1x512xf32, #tpu.memory_space<vmem>>, %arg6: memref<1x512xf32, #tpu.memory_space<vmem>>, %arg7: memref<128x512xbf16, #tpu.memory_space<vmem>>) attributes {dimension_semantics = [#tpu.dimension_semantics<parallel>], iteration_bounds = array<i64: 1>, scalar_prefetch = 0 : i64, scratch_operands = 0 : i64, tpu.core_type = #tpu.core_type<tc>, window_params = [{transform_indices = @transform_0, window_bounds = array<i64: 128, 8>}, {pipeline_mode = #tpu.pipeline_mode<synchronous>, transform_indices = @transform_1, window_bounds = array<i64: 8, 128>}, {pipeline_mode = #tpu.pipeline_mode<synchronous>, transform_indices = @transform_2, window_bounds = array<i64: 1, 128>}, {pipeline_mode = #tpu.pipeline_mode<synchronous>, transform_indices = @transform_3, window_bounds = array<i64: 128, 512>}, {pipeline_mode = #tpu.pipeline_mode<synchronous>, transform_indices = @transform_4, window_bounds = array<i64: 1, 512>}, {pipeline_mode = #tpu.pipeline_mode<synchronous>, transform_indices = @transform_5, window_bounds = array<i64: 1, 512>}, {transform_indices = @transform_6, window_bounds = array<i64: 128, 512>}]} {
    %c0 = arith.constant 0 : index
    %c0_0 = arith.constant 0 : index
    %0 = vector.load %arg1[%c0, %c0_0] : memref<128x8xf32, #tpu.memory_space<vmem>>, vector<128x8xf32>
    %1 = arith.truncf %0 : vector<128x8xf32> to vector<128x8xbf16>
    %c0_1 = arith.constant 0 : index
    %c0_2 = arith.constant 0 : index
    %2 = vector.load %arg2[%c0_1, %c0_2] : memref<8x128xbf16, #tpu.memory_space<vmem>>, vector<8x128xbf16>
    %cst = arith.constant dense<0.000000e+00> : vector<128x128xf32>
    %3 = tpu.matmul %1, %2, %cst {dimension_numbers = #tpu.dot_dimension_numbers<[1], [0], [0], [1], [0, 0, 1, 1], [], []>} : vector<128x8xbf16>, vector<8x128xbf16>, vector<128x128xf32> -> vector<128x128xf32>
    %c0_3 = arith.constant 0 : index
    %c0_4 = arith.constant 0 : index
    %4 = vector.load %arg3[%c0_3, %c0_4] : memref<1x128xf32, #tpu.memory_space<vmem>>, vector<1x128xf32>
    %5 = vector.broadcast %4 : vector<1x128xf32> to vector<128x128xf32>
    %6 = arith.addf %3, %5 : vector<128x128xf32>
    %7 = math.tanh %6 : vector<128x128xf32>
    %8 = arith.truncf %7 : vector<128x128xf32> to vector<128x128xbf16>
    %c0_5 = arith.constant 0 : index
    %c0_6 = arith.constant 0 : index
    %9 = vector.load %arg4[%c0_5, %c0_6] : memref<128x512xbf16, #tpu.memory_space<vmem>>, vector<128x512xbf16>
    %cst_7 = arith.constant dense<0.000000e+00> : vector<128x512xf32>
    %10 = tpu.matmul %8, %9, %cst_7 {dimension_numbers = #tpu.dot_dimension_numbers<[1], [0], [0], [1], [0, 0, 1, 1], [], []>} : vector<128x128xbf16>, vector<128x512xbf16>, vector<128x512xf32> -> vector<128x512xf32>
    %c0_8 = arith.constant 0 : index
    %c0_9 = arith.constant 0 : index
    %11 = vector.load %arg5[%c0_8, %c0_9] : memref<1x512xf32, #tpu.memory_space<vmem>>, vector<1x512xf32>
    %12 = vector.broadcast %11 : vector<1x512xf32> to vector<128x512xf32>
    %13 = arith.mulf %10, %12 : vector<128x512xf32>
    %c0_10 = arith.constant 0 : index
    %c0_11 = arith.constant 0 : index
    %14 = vector.load %arg6[%c0_10, %c0_11] : memref<1x512xf32, #tpu.memory_space<vmem>>, vector<1x512xf32>
    %15 = vector.broadcast %14 : vector<1x512xf32> to vector<128x512xf32>
    %16 = arith.addf %13, %15 : vector<128x512xf32>
    %cst_12 = arith.constant 0.000000e+00 : f32
    %17 = vector.broadcast %cst_12 : f32 to vector<128x512xf32>
    %18 = arith.maximumf %16, %17 : vector<128x512xf32>
    %19 = arith.truncf %18 : vector<128x512xf32> to vector<128x512xbf16>
    %c0_13 = arith.constant 0 : index
    %c0_14 = arith.constant 0 : index
    %20 = vector.load %arg7[%c0_13, %c0_14] : memref<128x512xbf16, #tpu.memory_space<vmem>>, vector<128x512xbf16>
    tpu.vector_store %arg7[%c0_13, %c0_14], %19 {strides = array<i32>} : memref<128x512xbf16, #tpu.memory_space<vmem>>, vector<128x512xbf16>,
    return
  }
  func.func @transform_0(%arg0: i32) -> (i32, i32) {
    %c0_i32 = arith.constant 0 : i32
    %c0_i32_0 = arith.constant 0 : i32
    return %arg0, %c0_i32 : i32, i32
  }
  func.func @transform_1(%arg0: i32) -> (i32, i32) {
    %c0_i32 = arith.constant 0 : i32
    %c0_i32_0 = arith.constant 0 : i32
    %c0_i32_1 = arith.constant 0 : i32
    return %c0_i32, %c0_i32_0 : i32, i32
  }
  func.func @transform_2(%arg0: i32) -> (i32, i32) {
    %c0_i32 = arith.constant 0 : i32
    %c0_i32_0 = arith.constant 0 : i32
    %c0_i32_1 = arith.constant 0 : i32
    return %c0_i32, %c0_i32_0 : i32, i32
  }
  func.func @transform_3(%arg0: i32) -> (i32, i32) {
    %c0_i32 = arith.constant 0 : i32
    %c0_i32_0 = arith.constant 0 : i32
    %c0_i32_1 = arith.constant 0 : i32
    return %c0_i32, %c0_i32_0 : i32, i32
  }
  func.func @transform_4(%arg0: i32) -> (i32, i32) {
    %c0_i32 = arith.constant 0 : i32
    %c0_i32_0 = arith.constant 0 : i32
    %c0_i32_1 = arith.constant 0 : i32
    return %c0_i32, %c0_i32_0 : i32, i32
  }
  func.func @transform_5(%arg0: i32) -> (i32, i32) {
    %c0_i32 = arith.constant 0 : i32
    %c0_i32_0 = arith.constant 0 : i32
    %c0_i32_1 = arith.constant 0 : i32
    return %c0_i32, %c0_i32_0 : i32, i32
  }
  func.func @transform_6(%arg0: i32) -> (i32, i32) {
    %c0_i32 = arith.constant 0 : i32
    %c0_i32_0 = arith.constant 0 : i32
    return %arg0, %c0_i32 : i32, i32
  }
}

module attributes {stable_mosaic.version = 11 : i64} {
  func.func @kernel(%arg0: i32, %arg1: i32, %arg2: memref<1x4x2x4x1024xbf16, #tpu.memory_space<vmem>>, %arg3: memref<512x128xbf16, #tpu.memory_space<vmem>>, %arg4: memref<128x512xbf16, #tpu.memory_space<vmem>>, %arg5: memref<1x1x512xf32, #tpu.memory_space<vmem>>, %arg6: memref<1x512xf32, #tpu.memory_space<vmem>>, %arg7: memref<1x512xf32, #tpu.memory_space<vmem>>) attributes {dimension_semantics = [#tpu.dimension_semantics<parallel>, #tpu.dimension_semantics<arbitrary>], iteration_bounds = array<i64: 2, 1>, scalar_prefetch = 0 : i64, scratch_operands = 2 : i64, tpu.core_type = #tpu.core_type<tc>, window_params = [{transform_indices = @transform_0, window_bounds = array<i64: 1, 4, 2, 4, 1024>}, {pipeline_mode = #tpu.pipeline_mode<synchronous>, transform_indices = @transform_1, window_bounds = array<i64: 512, 128>}, {pipeline_mode = #tpu.pipeline_mode<synchronous>, transform_indices = @transform_2, window_bounds = array<i64: 128, 512>}, {transform_indices = @transform_3, window_bounds = array<i64: 1, 1, 512>}]} {
    %c0_i32 = arith.constant 0 : i32
    %0 = arith.cmpi eq, %arg1, %c0_i32 : i32
    %1 = arith.extui %0 : i1 to i32
    %c0_i32_0 = arith.constant 0 : i32
    %2 = arith.cmpi ne, %1, %c0_i32_0 : i32
    scf.if %2 {
      %cst_18 = arith.constant 0.000000e+00 : f32
      %29 = vector.broadcast %cst_18 : f32 to vector<1x512xf32>
      %c0_19 = arith.constant 0 : index
      %c0_20 = arith.constant 0 : index
      %30 = vector.load %arg6[%c0_19, %c0_20] : memref<1x512xf32, #tpu.memory_space<vmem>>, vector<1x512xf32>
      tpu.vector_store %arg6[%c0_19, %c0_20], %29 {strides = array<i32>} : memref<1x512xf32, #tpu.memory_space<vmem>>, vector<1x512xf32>,
      %cst_21 = arith.constant 0xFF800000 : f32
      %31 = vector.broadcast %cst_21 : f32 to vector<1x512xf32>
      %c0_22 = arith.constant 0 : index
      %c0_23 = arith.constant 0 : index
      %32 = vector.load %arg7[%c0_22, %c0_23] : memref<1x512xf32, #tpu.memory_space<vmem>>, vector<1x512xf32>
      tpu.vector_store %arg7[%c0_22, %c0_23], %31 {strides = array<i32>} : memref<1x512xf32, #tpu.memory_space<vmem>>, vector<1x512xf32>,
    } else {
    }
    %c0 = arith.constant 0 : index
    %c0_1 = arith.constant 0 : index
    %c0_2 = arith.constant 0 : index
    %c0_3 = arith.constant 0 : index
    %c0_4 = arith.constant 0 : index
    %3 = vector.load %arg2[%c0, %c0_1, %c0_2, %c0_3, %c0_4] : memref<1x4x2x4x1024xbf16, #tpu.memory_space<vmem>>, vector<1x4x2x4x1024xbf16>
    %4 = vector.shape_cast %3 : vector<1x4x2x4x1024xbf16> to vector<4x2x4x1024xbf16>
    %5 = arith.extf %4 : vector<4x2x4x1024xbf16> to vector<4x2x4x1024xf32>
    %6 = vector.extract_strided_slice %5 {offsets = [0, 0, 0, 0], sizes = [4, 1, 4, 1024], strides = [1, 1, 1, 1]} : vector<4x2x4x1024xf32> to vector<4x1x4x1024xf32>
    %7 = vector.shape_cast %6 : vector<4x1x4x1024xf32> to vector<4x4x1024xf32>
    %8 = vector.extract_strided_slice %5 {offsets = [0, 1, 0, 0], sizes = [4, 1, 4, 1024], strides = [1, 1, 1, 1]} : vector<4x2x4x1024xf32> to vector<4x1x4x1024xf32>
    %9 = vector.shape_cast %8 : vector<4x1x4x1024xf32> to vector<4x4x1024xf32>
    %10 = arith.maximumf %7, %9 : vector<4x4x1024xf32>
    %11 = vector.extract_strided_slice %10 {offsets = [0, 0, 0], sizes = [4, 4, 512], strides = [1, 1, 1]} : vector<4x4x1024xf32> to vector<4x4x512xf32>
    %12 = vector.extract_strided_slice %10 {offsets = [0, 0, 512], sizes = [4, 4, 512], strides = [1, 1, 1]} : vector<4x4x1024xf32> to vector<4x4x512xf32>
    %13 = arith.maximumf %11, %12 : vector<4x4x512xf32>
    %cst = arith.constant dense<0.000000e+00> : vector<4x512xf32>
    %14 = vector.multi_reduction <add>, %13, %cst [0] : vector<4x4x512xf32> to vector<4x512xf32>
    %c0_5 = arith.constant 0 : index
    %c0_6 = arith.constant 0 : index
    %15 = vector.load %arg6[%c0_5, %c0_6] : memref<1x512xf32, #tpu.memory_space<vmem>>, vector<1x512xf32>
    %cst_7 = arith.constant dense<0.000000e+00> : vector<512xf32>
    %16 = vector.multi_reduction <add>, %14, %cst_7 [0] : vector<4x512xf32> to vector<512xf32>
    %17 = vector.shape_cast %16 : vector<512xf32> to vector<1x512xf32>
    %18 = arith.addf %15, %17 : vector<1x512xf32>
    %c0_8 = arith.constant 0 : index
    %c0_9 = arith.constant 0 : index
    %19 = vector.load %arg6[%c0_8, %c0_9] : memref<1x512xf32, #tpu.memory_space<vmem>>, vector<1x512xf32>
    tpu.vector_store %arg6[%c0_8, %c0_9], %18 {strides = array<i32>} : memref<1x512xf32, #tpu.memory_space<vmem>>, vector<1x512xf32>,
    %cst_10 = arith.constant dense<0xFF800000> : vector<4x512xf32>
    %20 = vector.multi_reduction <maximumf>, %13, %cst_10 [0] : vector<4x4x512xf32> to vector<4x512xf32>
    %c0_11 = arith.constant 0 : index
    %c0_12 = arith.constant 0 : index
    %21 = vector.load %arg7[%c0_11, %c0_12] : memref<1x512xf32, #tpu.memory_space<vmem>>, vector<1x512xf32>
    %cst_13 = arith.constant dense<0xFF800000> : vector<512xf32>
    %22 = vector.multi_reduction <maximumf>, %20, %cst_13 [0] : vector<4x512xf32> to vector<512xf32>
    %23 = vector.shape_cast %22 : vector<512xf32> to vector<1x512xf32>
    %24 = arith.maximumf %21, %23 : vector<1x512xf32>
    %c0_14 = arith.constant 0 : index
    %c0_15 = arith.constant 0 : index
    %25 = vector.load %arg7[%c0_14, %c0_15] : memref<1x512xf32, #tpu.memory_space<vmem>>, vector<1x512xf32>
    tpu.vector_store %arg7[%c0_14, %c0_15], %24 {strides = array<i32>} : memref<1x512xf32, #tpu.memory_space<vmem>>, vector<1x512xf32>,
    %c0_i32_16 = arith.constant 0 : i32
    %26 = arith.cmpi eq, %arg1, %c0_i32_16 : i32
    %27 = arith.extui %26 : i1 to i32
    %c0_i32_17 = arith.constant 0 : i32
    %28 = arith.cmpi ne, %27, %c0_i32_17 : i32
    scf.if %28 {
      %c0_18 = arith.constant 0 : index
      %c0_19 = arith.constant 0 : index
      %29 = vector.load %arg6[%c0_18, %c0_19] : memref<1x512xf32, #tpu.memory_space<vmem>>, vector<1x512xf32>
      %cst_20 = arith.constant 6.250000e-02 : f32
      %30 = vector.broadcast %cst_20 : f32 to vector<1x512xf32>
      %31 = arith.mulf %29, %30 : vector<1x512xf32>
      %c0_21 = arith.constant 0 : index
      %c0_22 = arith.constant 0 : index
      %32 = vector.load %arg7[%c0_21, %c0_22] : memref<1x512xf32, #tpu.memory_space<vmem>>, vector<1x512xf32>
      %33 = tpu.concatenate %31, %32 in 0 : vector<1x512xf32>, vector<1x512xf32> -> vector<2x512xf32>
      %34 = arith.truncf %33 : vector<2x512xf32> to vector<2x512xbf16>
      %c0_23 = arith.constant 0 : index
      %c0_24 = arith.constant 0 : index
      %35 = vector.load %arg3[%c0_23, %c0_24] : memref<512x128xbf16, #tpu.memory_space<vmem>>, vector<512x128xbf16>
      %cst_25 = arith.constant dense<0.000000e+00> : vector<2x128xf32>
      %36 = tpu.matmul %34, %35, %cst_25 {dimension_numbers = #tpu.dot_dimension_numbers<[1], [0], [0], [1], [0, 0, 1, 1], [], []>} : vector<2x512xbf16>, vector<512x128xbf16>, vector<2x128xf32> -> vector<2x128xf32>
      %cst_26 = arith.constant 0.000000e+00 : f32
      %37 = vector.broadcast %cst_26 : f32 to vector<2x128xf32>
      %38 = arith.maximumf %36, %37 : vector<2x128xf32>
      %39 = arith.truncf %38 : vector<2x128xf32> to vector<2x128xbf16>
      %c0_27 = arith.constant 0 : index
      %c0_28 = arith.constant 0 : index
      %40 = vector.load %arg4[%c0_27, %c0_28] : memref<128x512xbf16, #tpu.memory_space<vmem>>, vector<128x512xbf16>
      %cst_29 = arith.constant dense<0.000000e+00> : vector<2x512xf32>
      %41 = tpu.matmul %39, %40, %cst_29 {dimension_numbers = #tpu.dot_dimension_numbers<[1], [0], [0], [1], [0, 0, 1, 1], [], []>} : vector<2x128xbf16>, vector<128x512xbf16>, vector<2x512xf32> -> vector<2x512xf32>
      %42 = vector.extract_strided_slice %41 {offsets = [0, 0], sizes = [1, 512], strides = [1, 1]} : vector<2x512xf32> to vector<1x512xf32>
      %43 = vector.extract_strided_slice %41 {offsets = [1, 0], sizes = [1, 512], strides = [1, 1]} : vector<2x512xf32> to vector<1x512xf32>
      %44 = arith.addf %42, %43 : vector<1x512xf32>
      %45 = arith.negf %44 : vector<1x512xf32>
      %46 = math.exp %45 : vector<1x512xf32>
      %cst_30 = arith.constant 1.000000e+00 : f32
      %47 = vector.broadcast %cst_30 : f32 to vector<1x512xf32>
      %48 = arith.addf %47, %46 : vector<1x512xf32>
      %49 = arith.divf %47, %48 : vector<1x512xf32>
      %c0_31 = arith.constant 0 : index
      %c0_32 = arith.constant 0 : index
      %c0_33 = arith.constant 0 : index
      %50 = vector.load %arg5[%c0_31, %c0_32, %c0_33] : memref<1x1x512xf32, #tpu.memory_space<vmem>>, vector<1x1x512xf32>
      %51 = vector.shape_cast %50 : vector<1x1x512xf32> to vector<1x512xf32>
      %52 = vector.shape_cast %49 : vector<1x512xf32> to vector<1x1x512xf32>
      tpu.vector_store %arg5[%c0_31, %c0_32, %c0_33], %52 {strides = array<i32>} : memref<1x1x512xf32, #tpu.memory_space<vmem>>, vector<1x1x512xf32>,
    } else {
    }
    return
  }
  func.func @transform_0(%arg0: i32, %arg1: i32) -> (i32, i32, i32, i32, i32) {
    %c0_i32 = arith.constant 0 : i32
    %c0_i32_0 = arith.constant 0 : i32
    %c0_i32_1 = arith.constant 0 : i32
    %c0_i32_2 = arith.constant 0 : i32
    return %arg0, %arg1, %c0_i32, %c0_i32_0, %c0_i32_1 : i32, i32, i32, i32, i32
  }
  func.func @transform_1(%arg0: i32, %arg1: i32) -> (i32, i32) {
    %c0_i32 = arith.constant 0 : i32
    %c0_i32_0 = arith.constant 0 : i32
    %c0_i32_1 = arith.constant 0 : i32
    return %c0_i32, %c0_i32_0 : i32, i32
  }
  func.func @transform_2(%arg0: i32, %arg1: i32) -> (i32, i32) {
    %c0_i32 = arith.constant 0 : i32
    %c0_i32_0 = arith.constant 0 : i32
    %c0_i32_1 = arith.constant 0 : i32
    return %c0_i32, %c0_i32_0 : i32, i32
  }
  func.func @transform_3(%arg0: i32, %arg1: i32) -> (i32, i32, i32) {
    %c0_i32 = arith.constant 0 : i32
    %c0_i32_0 = arith.constant 0 : i32
    %c0_i32_1 = arith.constant 0 : i32
    return %arg0, %c0_i32, %c0_i32_0 : i32, i32, i32
  }
}

module attributes {stable_mosaic.version = 11 : i64} {
  func.func @kernel(%arg0: i32, %arg1: memref<1x16x8xf32, #tpu.memory_space<vmem>>, %arg2: memref<8x512xbf16, #tpu.memory_space<vmem>>, %arg3: memref<1x512xf32, #tpu.memory_space<vmem>>, %arg4: memref<1x1x512xf32, #tpu.memory_space<vmem>>, %arg5: memref<1x16x512xf32, #tpu.memory_space<vmem>>) attributes {dimension_semantics = [#tpu.dimension_semantics<parallel>], iteration_bounds = array<i64: 2>, scalar_prefetch = 0 : i64, scratch_operands = 0 : i64, tpu.core_type = #tpu.core_type<tc>, window_params = [{transform_indices = @transform_0, window_bounds = array<i64: 1, 16, 8>}, {pipeline_mode = #tpu.pipeline_mode<synchronous>, transform_indices = @transform_1, window_bounds = array<i64: 8, 512>}, {pipeline_mode = #tpu.pipeline_mode<synchronous>, transform_indices = @transform_2, window_bounds = array<i64: 1, 512>}, {transform_indices = @transform_3, window_bounds = array<i64: 1, 1, 512>}, {transform_indices = @transform_4, window_bounds = array<i64: 1, 16, 512>}]} {
    %c0 = arith.constant 0 : index
    %c0_0 = arith.constant 0 : index
    %c0_1 = arith.constant 0 : index
    %0 = vector.load %arg1[%c0, %c0_0, %c0_1] : memref<1x16x8xf32, #tpu.memory_space<vmem>>, vector<1x16x8xf32>
    %1 = vector.shape_cast %0 : vector<1x16x8xf32> to vector<16x8xf32>
    %2 = arith.truncf %1 : vector<16x8xf32> to vector<16x8xbf16>
    %c0_2 = arith.constant 0 : index
    %c0_3 = arith.constant 0 : index
    %3 = vector.load %arg2[%c0_2, %c0_3] : memref<8x512xbf16, #tpu.memory_space<vmem>>, vector<8x512xbf16>
    %cst = arith.constant dense<0.000000e+00> : vector<16x512xf32>
    %4 = tpu.matmul %2, %3, %cst {dimension_numbers = #tpu.dot_dimension_numbers<[1], [0], [0], [1], [0, 0, 1, 1], [], []>} : vector<16x8xbf16>, vector<8x512xbf16>, vector<16x512xf32> -> vector<16x512xf32>
    %c0_4 = arith.constant 0 : index
    %c0_5 = arith.constant 0 : index
    %5 = vector.load %arg3[%c0_4, %c0_5] : memref<1x512xf32, #tpu.memory_space<vmem>>, vector<1x512xf32>
    %6 = vector.broadcast %5 : vector<1x512xf32> to vector<16x512xf32>
    %7 = arith.addf %4, %6 : vector<16x512xf32>
    %8 = math.tanh %7 : vector<16x512xf32>
    %c0_6 = arith.constant 0 : index
    %c0_7 = arith.constant 0 : index
    %c0_8 = arith.constant 0 : index
    %9 = vector.load %arg4[%c0_6, %c0_7, %c0_8] : memref<1x1x512xf32, #tpu.memory_space<vmem>>, vector<1x1x512xf32>
    %10 = vector.shape_cast %9 : vector<1x1x512xf32> to vector<1x512xf32>
    %11 = vector.broadcast %10 : vector<1x512xf32> to vector<16x512xf32>
    %12 = arith.mulf %8, %11 : vector<16x512xf32>
    %13 = arith.mulf %12, %12 : vector<16x512xf32>
    %cst_9 = arith.constant dense<0.000000e+00> : vector<16xf32>
    %14 = vector.multi_reduction <add>, %13, %cst_9 [1] : vector<16x512xf32> to vector<16xf32>
    %15 = vector.shape_cast %14 : vector<16xf32> to vector<16x1xf32>
    %cst_10 = arith.constant 1.000000e-24 : f32
    %16 = vector.broadcast %cst_10 : f32 to vector<16x1xf32>
    %17 = arith.maximumf %15, %16 : vector<16x1xf32>
    %18 = math.rsqrt %17 : vector<16x1xf32>
    %19 = vector.broadcast %18 : vector<16x1xf32> to vector<16x512xf32>
    %20 = arith.mulf %12, %19 : vector<16x512xf32>
    %21 = arith.mulf %15, %18 : vector<16x1xf32>
    %22 = arith.mulf %21, %18 : vector<16x1xf32>
    %cst_11 = arith.constant dense<0.000000e+00> : vector<1xf32>
    %23 = vector.multi_reduction <add>, %22, %cst_11 [0] : vector<16x1xf32> to vector<1xf32>
    %24 = vector.shape_cast %23 : vector<1xf32> to vector<1x1xf32>
    %cst_12 = arith.constant 1.000000e-24 : f32
    %25 = vector.broadcast %cst_12 : f32 to vector<1x1xf32>
    %26 = arith.maximumf %24, %25 : vector<1x1xf32>
    %27 = math.rsqrt %26 : vector<1x1xf32>
    %28 = vector.broadcast %27 : vector<1x1xf32> to vector<16x512xf32>
    %29 = arith.mulf %20, %28 : vector<16x512xf32>
    %c0_13 = arith.constant 0 : index
    %c0_14 = arith.constant 0 : index
    %c0_15 = arith.constant 0 : index
    %30 = vector.load %arg5[%c0_13, %c0_14, %c0_15] : memref<1x16x512xf32, #tpu.memory_space<vmem>>, vector<1x16x512xf32>
    %31 = vector.shape_cast %30 : vector<1x16x512xf32> to vector<16x512xf32>
    %32 = vector.shape_cast %29 : vector<16x512xf32> to vector<1x16x512xf32>
    tpu.vector_store %arg5[%c0_13, %c0_14, %c0_15], %32 {strides = array<i32>} : memref<1x16x512xf32, #tpu.memory_space<vmem>>, vector<1x16x512xf32>,
    return
  }
  func.func @transform_0(%arg0: i32) -> (i32, i32, i32) {
    %c0_i32 = arith.constant 0 : i32
    %c0_i32_0 = arith.constant 0 : i32
    %c0_i32_1 = arith.constant 0 : i32
    return %arg0, %c0_i32, %c0_i32_0 : i32, i32, i32
  }
  func.func @transform_1(%arg0: i32) -> (i32, i32) {
    %c0_i32 = arith.constant 0 : i32
    %c0_i32_0 = arith.constant 0 : i32
    %c0_i32_1 = arith.constant 0 : i32
    return %c0_i32, %c0_i32_0 : i32, i32
  }
  func.func @transform_2(%arg0: i32) -> (i32, i32) {
    %c0_i32 = arith.constant 0 : i32
    %c0_i32_0 = arith.constant 0 : i32
    %c0_i32_1 = arith.constant 0 : i32
    return %c0_i32, %c0_i32_0 : i32, i32
  }
  func.func @transform_3(%arg0: i32) -> (i32, i32, i32) {
    %c0_i32 = arith.constant 0 : i32
    %c0_i32_0 = arith.constant 0 : i32
    %c0_i32_1 = arith.constant 0 : i32
    return %arg0, %c0_i32, %c0_i32_0 : i32, i32, i32
  }
  func.func @transform_4(%arg0: i32) -> (i32, i32, i32) {
    %c0_i32 = arith.constant 0 : i32
    %c0_i32_0 = arith.constant 0 : i32
    %c0_i32_1 = arith.constant 0 : i32
    return %arg0, %c0_i32, %c0_i32_0 : i32, i32, i32
  }
}

module attributes {stable_mosaic.version = 11 : i64} {
  func.func @_softmax_finalize_kernel(%arg0: memref<2x2x16xf32, #tpu.memory_space<vmem>>, %arg1: memref<1x16xf32, #tpu.memory_space<vmem>>, %arg2: memref<2x16xf32, #tpu.memory_space<vmem>>) attributes {dimension_semantics = [], scalar_prefetch = 0 : i64, scratch_operands = 0 : i64, tpu.core_type = #tpu.core_type<tc>} {
    %c0 = arith.constant 0 : index
    %c0_0 = arith.constant 0 : index
    %c0_1 = arith.constant 0 : index
    %0 = vector.load %arg0[%c0, %c0_0, %c0_1] : memref<2x2x16xf32, #tpu.memory_space<vmem>>, vector<2x2x16xf32>
    %cst = arith.constant dense<0.000000e+00> : vector<2x16xf32>
    %1 = vector.multi_reduction <add>, %0, %cst [0] : vector<2x2x16xf32> to vector<2x16xf32>
    %c0_2 = arith.constant 0 : index
    %c0_3 = arith.constant 0 : index
    %2 = vector.load %arg1[%c0_2, %c0_3] : memref<1x16xf32, #tpu.memory_space<vmem>>, vector<1x16xf32>
    %3 = vector.broadcast %2 : vector<1x16xf32> to vector<2x16xf32>
    %4 = arith.addf %1, %3 : vector<2x16xf32>
    %5 = tpu.iota {dimensions = array<i32: 1>} : vector<2x16xi32>
    %c10_i32 = arith.constant 10 : i32
    %6 = vector.broadcast %c10_i32 : i32 to vector<2x16xi32>
    %7 = arith.cmpi slt, %5, %6 : vector<2x16xi32>
    %cst_4 = arith.constant 0xFF800000 : f32
    %8 = vector.broadcast %cst_4 : f32 to vector<2x16xf32>
    %9 = arith.select %7, %4, %8 : vector<2x16xi1>, vector<2x16xf32>
    %cst_5 = arith.constant dense<0xFF800000> : vector<2xf32>
    %10 = vector.multi_reduction <maximumf>, %9, %cst_5 [1] : vector<2x16xf32> to vector<2xf32>
    %11 = vector.shape_cast %10 : vector<2xf32> to vector<2x1xf32>
    %12 = vector.broadcast %11 : vector<2x1xf32> to vector<2x16xf32>
    %13 = arith.subf %9, %12 : vector<2x16xf32>
    %14 = math.exp %13 : vector<2x16xf32>
    %cst_6 = arith.constant dense<0.000000e+00> : vector<2xf32>
    %15 = vector.multi_reduction <add>, %14, %cst_6 [1] : vector<2x16xf32> to vector<2xf32>
    %16 = vector.shape_cast %15 : vector<2xf32> to vector<2x1xf32>
    %17 = vector.broadcast %16 : vector<2x1xf32> to vector<2x16xf32>
    %18 = arith.divf %14, %17 : vector<2x16xf32>
    %c0_7 = arith.constant 0 : index
    %c0_8 = arith.constant 0 : index
    %19 = vector.load %arg2[%c0_7, %c0_8] : memref<2x16xf32, #tpu.memory_space<vmem>>, vector<2x16xf32>
    tpu.vector_store %arg2[%c0_7, %c0_8], %18 {strides = array<i32>} : memref<2x16xf32, #tpu.memory_space<vmem>>, vector<2x16xf32>,
    return
  }
}

module attributes {stable_mosaic.version = 11 : i64} {
  func.func @kernel(%arg0: i32, %arg1: i32, %arg2: memref<2x2048xf32, #tpu.memory_space<vmem>>, %arg3: memref<5x16x2048xbf16, #tpu.memory_space<vmem>>, %arg4: memref<1x2x16xf32, #tpu.memory_space<vmem>>, %arg5: memref<2x16xf32, #tpu.memory_space<vmem>>) attributes {dimension_semantics = [#tpu.dimension_semantics<parallel>, #tpu.dimension_semantics<arbitrary>], iteration_bounds = array<i64: 2, 2>, scalar_prefetch = 0 : i64, scratch_operands = 1 : i64, tpu.core_type = #tpu.core_type<tc>, window_params = [{transform_indices = @transform_0, window_bounds = array<i64: 2, 2048>}, {transform_indices = @transform_1, window_bounds = array<i64: 5, 16, 2048>}, {transform_indices = @transform_2, window_bounds = array<i64: 1, 2, 16>}]} {
    %c0_i32 = arith.constant 0 : i32
    %0 = arith.cmpi eq, %arg1, %c0_i32 : i32
    %1 = arith.extui %0 : i1 to i32
    %c0_i32_0 = arith.constant 0 : i32
    %2 = arith.cmpi ne, %1, %c0_i32_0 : i32
    scf.if %2 {
      %cst_32 = arith.constant 0.000000e+00 : f32
      %64 = vector.broadcast %cst_32 : f32 to vector<2x16xf32>
      %c0_33 = arith.constant 0 : index
      %c0_34 = arith.constant 0 : index
      %65 = vector.load %arg5[%c0_33, %c0_34] : memref<2x16xf32, #tpu.memory_space<vmem>>, vector<2x16xf32>
      tpu.vector_store %arg5[%c0_33, %c0_34], %64 {strides = array<i32>} : memref<2x16xf32, #tpu.memory_space<vmem>>, vector<2x16xf32>,
    } else {
    }
    %c0 = arith.constant 0 : index
    %c0_1 = arith.constant 0 : index
    %3 = vector.load %arg2[%c0, %c0_1] : memref<2x2048xf32, #tpu.memory_space<vmem>>, vector<2x2048xf32>
    %c0_2 = arith.constant 0 : index
    %c0_3 = arith.constant 0 : index
    %4 = vector.load %arg5[%c0_2, %c0_3] : memref<2x16xf32, #tpu.memory_space<vmem>>, vector<2x16xf32>
    %cst = arith.constant -5.000000e-02 : f32
    %5 = vector.broadcast %cst : f32 to vector<2x2048xf32>
    %6 = arith.subf %3, %5 : vector<2x2048xf32>
    %7 = arith.mulf %6, %6 : vector<2x2048xf32>
    %cst_4 = arith.constant -8.000000e+02 : f32
    %8 = vector.broadcast %cst_4 : f32 to vector<2x2048xf32>
    %9 = arith.mulf %8, %7 : vector<2x2048xf32>
    %10 = math.exp %9 : vector<2x2048xf32>
    %11 = arith.truncf %10 : vector<2x2048xf32> to vector<2x2048xbf16>
    %c0_5 = arith.constant 0 : index
    %c0_6 = arith.constant 0 : index
    %c0_7 = arith.constant 0 : index
    %12 = vector.load %arg3[%c0_5, %c0_6, %c0_7] : memref<5x16x2048xbf16, #tpu.memory_space<vmem>>, vector<1x16x2048xbf16>
    %13 = vector.shape_cast %12 : vector<1x16x2048xbf16> to vector<16x2048xbf16>
    %cst_8 = arith.constant dense<0.000000e+00> : vector<2x16xf32>
    %14 = tpu.matmul %11, %13, %cst_8 {dimension_numbers = #tpu.dot_dimension_numbers<[1], [1], [0], [0], [0, 0, 1, 0], [], []>} : vector<2x2048xbf16>, vector<16x2048xbf16>, vector<2x16xf32> -> vector<2x16xf32>
    %15 = arith.addf %4, %14 : vector<2x16xf32>
    %cst_9 = arith.constant -2.500000e-02 : f32
    %16 = vector.broadcast %cst_9 : f32 to vector<2x2048xf32>
    %17 = arith.subf %3, %16 : vector<2x2048xf32>
    %18 = arith.mulf %17, %17 : vector<2x2048xf32>
    %cst_10 = arith.constant -8.000000e+02 : f32
    %19 = vector.broadcast %cst_10 : f32 to vector<2x2048xf32>
    %20 = arith.mulf %19, %18 : vector<2x2048xf32>
    %21 = math.exp %20 : vector<2x2048xf32>
    %22 = arith.truncf %21 : vector<2x2048xf32> to vector<2x2048xbf16>
    %c1 = arith.constant 1 : index
    %c0_11 = arith.constant 0 : index
    %c0_12 = arith.constant 0 : index
    %23 = vector.load %arg3[%c1, %c0_11, %c0_12] : memref<5x16x2048xbf16, #tpu.memory_space<vmem>>, vector<1x16x2048xbf16>
    %24 = vector.shape_cast %23 : vector<1x16x2048xbf16> to vector<16x2048xbf16>
    %cst_13 = arith.constant dense<0.000000e+00> : vector<2x16xf32>
    %25 = tpu.matmul %22, %24, %cst_13 {dimension_numbers = #tpu.dot_dimension_numbers<[1], [1], [0], [0], [0, 0, 1, 0], [], []>} : vector<2x2048xbf16>, vector<16x2048xbf16>, vector<2x16xf32> -> vector<2x16xf32>
    %26 = arith.addf %15, %25 : vector<2x16xf32>
    %cst_14 = arith.constant 0.000000e+00 : f32
    %27 = vector.broadcast %cst_14 : f32 to vector<2x2048xf32>
    %28 = arith.subf %3, %27 : vector<2x2048xf32>
    %29 = arith.mulf %28, %28 : vector<2x2048xf32>
    %cst_15 = arith.constant -8.000000e+02 : f32
    %30 = vector.broadcast %cst_15 : f32 to vector<2x2048xf32>
    %31 = arith.mulf %30, %29 : vector<2x2048xf32>
    %32 = math.exp %31 : vector<2x2048xf32>
    %33 = arith.truncf %32 : vector<2x2048xf32> to vector<2x2048xbf16>
    %c2 = arith.constant 2 : index
    %c0_16 = arith.constant 0 : index
    %c0_17 = arith.constant 0 : index
    %34 = vector.load %arg3[%c2, %c0_16, %c0_17] : memref<5x16x2048xbf16, #tpu.memory_space<vmem>>, vector<1x16x2048xbf16>
    %35 = vector.shape_cast %34 : vector<1x16x2048xbf16> to vector<16x2048xbf16>
    %cst_18 = arith.constant dense<0.000000e+00> : vector<2x16xf32>
    %36 = tpu.matmul %33, %35, %cst_18 {dimension_numbers = #tpu.dot_dimension_numbers<[1], [1], [0], [0], [0, 0, 1, 0], [], []>} : vector<2x2048xbf16>, vector<16x2048xbf16>, vector<2x16xf32> -> vector<2x16xf32>
    %37 = arith.addf %26, %36 : vector<2x16xf32>
    %cst_19 = arith.constant 2.500000e-02 : f32
    %38 = vector.broadcast %cst_19 : f32 to vector<2x2048xf32>
    %39 = arith.subf %3, %38 : vector<2x2048xf32>
    %40 = arith.mulf %39, %39 : vector<2x2048xf32>
    %cst_20 = arith.constant -8.000000e+02 : f32
    %41 = vector.broadcast %cst_20 : f32 to vector<2x2048xf32>
    %42 = arith.mulf %41, %40 : vector<2x2048xf32>
    %43 = math.exp %42 : vector<2x2048xf32>
    %44 = arith.truncf %43 : vector<2x2048xf32> to vector<2x2048xbf16>
    %c3 = arith.constant 3 : index
    %c0_21 = arith.constant 0 : index
    %c0_22 = arith.constant 0 : index
    %45 = vector.load %arg3[%c3, %c0_21, %c0_22] : memref<5x16x2048xbf16, #tpu.memory_space<vmem>>, vector<1x16x2048xbf16>
    %46 = vector.shape_cast %45 : vector<1x16x2048xbf16> to vector<16x2048xbf16>
    %cst_23 = arith.constant dense<0.000000e+00> : vector<2x16xf32>
    %47 = tpu.matmul %44, %46, %cst_23 {dimension_numbers = #tpu.dot_dimension_numbers<[1], [1], [0], [0], [0, 0, 1, 0], [], []>} : vector<2x2048xbf16>, vector<16x2048xbf16>, vector<2x16xf32> -> vector<2x16xf32>
    %48 = arith.addf %37, %47 : vector<2x16xf32>
    %cst_24 = arith.constant 5.000000e-02 : f32
    %49 = vector.broadcast %cst_24 : f32 to vector<2x2048xf32>
    %50 = arith.subf %3, %49 : vector<2x2048xf32>
    %51 = arith.mulf %50, %50 : vector<2x2048xf32>
    %cst_25 = arith.constant -8.000000e+02 : f32
    %52 = vector.broadcast %cst_25 : f32 to vector<2x2048xf32>
    %53 = arith.mulf %52, %51 : vector<2x2048xf32>
    %54 = math.exp %53 : vector<2x2048xf32>
    %55 = arith.truncf %54 : vector<2x2048xf32> to vector<2x2048xbf16>
    %c4 = arith.constant 4 : index
    %c0_26 = arith.constant 0 : index
    %c0_27 = arith.constant 0 : index
    %56 = vector.load %arg3[%c4, %c0_26, %c0_27] : memref<5x16x2048xbf16, #tpu.memory_space<vmem>>, vector<1x16x2048xbf16>
    %57 = vector.shape_cast %56 : vector<1x16x2048xbf16> to vector<16x2048xbf16>
    %cst_28 = arith.constant dense<0.000000e+00> : vector<2x16xf32>
    %58 = tpu.matmul %55, %57, %cst_28 {dimension_numbers = #tpu.dot_dimension_numbers<[1], [1], [0], [0], [0, 0, 1, 0], [], []>} : vector<2x2048xbf16>, vector<16x2048xbf16>, vector<2x16xf32> -> vector<2x16xf32>
    %59 = arith.addf %48, %58 : vector<2x16xf32>
    %c0_29 = arith.constant 0 : index
    %c0_30 = arith.constant 0 : index
    %60 = vector.load %arg5[%c0_29, %c0_30] : memref<2x16xf32, #tpu.memory_space<vmem>>, vector<2x16xf32>
    tpu.vector_store %arg5[%c0_29, %c0_30], %59 {strides = array<i32>} : memref<2x16xf32, #tpu.memory_space<vmem>>, vector<2x16xf32>,
    %c1_i32 = arith.constant 1 : i32
    %61 = arith.cmpi eq, %arg1, %c1_i32 : i32
    %62 = arith.extui %61 : i1 to i32
    %c0_i32_31 = arith.constant 0 : i32
    %63 = arith.cmpi ne, %62, %c0_i32_31 : i32
    scf.if %63 {
      %c0_32 = arith.constant 0 : index
      %c0_33 = arith.constant 0 : index
      %64 = vector.load %arg5[%c0_32, %c0_33] : memref<2x16xf32, #tpu.memory_space<vmem>>, vector<2x16xf32>
      %c0_34 = arith.constant 0 : index
      %c0_35 = arith.constant 0 : index
      %c0_36 = arith.constant 0 : index
      %65 = vector.load %arg4[%c0_34, %c0_35, %c0_36] : memref<1x2x16xf32, #tpu.memory_space<vmem>>, vector<1x2x16xf32>
      %66 = vector.shape_cast %65 : vector<1x2x16xf32> to vector<2x16xf32>
      %67 = vector.shape_cast %64 : vector<2x16xf32> to vector<1x2x16xf32>
      tpu.vector_store %arg4[%c0_34, %c0_35, %c0_36], %67 {strides = array<i32>} : memref<1x2x16xf32, #tpu.memory_space<vmem>>, vector<1x2x16xf32>,
    } else {
    }
    return
  }
  func.func @transform_0(%arg0: i32, %arg1: i32) -> (i32, i32) {
    %c2_i32 = arith.constant 2 : i32
    %0 = arith.muli %arg0, %c2_i32 : i32
    %1 = arith.addi %0, %arg1 : i32
    %c0_i32 = arith.constant 0 : i32
    %c0_i32_0 = arith.constant 0 : i32
    return %c0_i32, %1 : i32, i32
  }
  func.func @transform_1(%arg0: i32, %arg1: i32) -> (i32, i32, i32) {
    %c2_i32 = arith.constant 2 : i32
    %0 = arith.muli %arg0, %c2_i32 : i32
    %1 = arith.addi %0, %arg1 : i32
    %c0_i32 = arith.constant 0 : i32
    %c0_i32_0 = arith.constant 0 : i32
    %c0_i32_1 = arith.constant 0 : i32
    return %c0_i32, %c0_i32_0, %1 : i32, i32, i32
  }
  func.func @transform_2(%arg0: i32, %arg1: i32) -> (i32, i32, i32) {
    %c0_i32 = arith.constant 0 : i32
    %c0_i32_0 = arith.constant 0 : i32
    %c0_i32_1 = arith.constant 0 : i32
    return %arg0, %c0_i32, %c0_i32_0 : i32, i32, i32
  }
}

</mosaic_0001>

<llo_original>
// kernel: dbcnn_forward.6
$region0: #{dbcnn_forward.6}
  #allocation0 [shape = 'u32[]', space=smem, size = 0x4, offset = 0x4, fixed_abs, tag = 'smem constant byte address 0x4 - core index']
  #allocation1 [shape = 'u32[144,128]{1,0:T(1,128)}', space=vmem, size = 0x12000, scoped, tag = 'internal scratch']
  #allocation2 [shape = 'f32[1,512]{1,0:T(1,128)}', space=vmem, size = 0x800, scoped, tag = 'scratch operand']
  #allocation3 [shape = 'f32[1,512]{1,0:T(1,128)}', space=vmem, size = 0x800, scoped, tag = 'scratch operand']
  %s0 = inlined_call_operand.vmem [shape: bf16[2,4,2,4,1024], index: 0, kind: input, shape index: {}]
  %s1 = inlined_call_operand.vmem [shape: bf16[512,128], index: 1, kind: input, shape index: {}]
  %s2 = inlined_call_operand.vmem [shape: bf16[128,512], index: 2, kind: input, shape index: {}]
  %s3 = inlined_call_operand.vmem [shape: f32[2,1,512], index: 3, kind: output, shape index: {}]
  %s4 = sld [smem:[#allocation0]]
  $region53: #{dbcnn_forward.6} parent=0
    _
  %s6 = ssub.s32 1, %s4
  %s7 = scalar_select 0, %s6, %s4
  loop: start=0, step=1, limit=4
  $region2: #{dbcnn_forward.6} parent=0 // loop_pre_header
    _
  $region3: #{dbcnn_forward.6} parent=0 // loop_header
    %s9 = sphi 0, %s13
    %p10 = scmp.ge.s32.totalorder %s9, 4
    %s16 = sphi 0, %s28
    %s17 = sphi 0, %s24
    %s18 = sphi 0, %s16
    %s19 = sphi 0, %s17
    %s20 = sphi 0, %s18
    %s21 = sphi 0, %s19
    %s33 = sphi 0, %s35
    %s36 = sphi 0, %s33
    %s37 = sphi 0, %s36
    %s53 = sphi 0, %s37
    %s57 = sphi 0, %s57
    %s59 = sphi 0, %s57
    %s60 = sphi 0, %s59
    %s74 = sphi 0, %s60
    %s78 = sphi 0, %s78
    %s80 = sphi 0, %s78
    %s81 = sphi 0, %s80
    %s95 = sphi 0, %s81
    %s101 = sphi 0, %s103
    %s104 = sphi 0, %s101
    %s105 = sphi 0, %s104
    %s121 = sphi 0, %s105
  $region4: #{dbcnn_forward.6} parent=0 // loop_header_branch
    %12 = sbr.rel (%p10) target = $region8
  $region5: #{dbcnn_forward.6} parent=0 // loop_body
    %s14 = ssub.s32 %s9, 1
    %s15 = ssub.s32 %s9, 2
    %s22 = sadd.s32 1, %s17
    %p23 = scmp.ge.s32.totalorder %s22, 1
    %s24 = scalar_select %p23, 0, %s22
    %s25 = sadd.s32 1, %s16
    %s26 = scalar_select %p23, %s25, %s16
    %p27 = scmp.ge.s32.totalorder %s26, 2
    %s28 = scalar_select %p27, 0, %s26
    %s29 = ssub.s32 %s16, %s28
    %s30 = ssub.s32 %s17, %s24
    %s31 = sor.u32 %s29, %s30
    %p32 = scmp.eq.s32.totalorder %s31, 0
    %s34 = sadd.s32 %s33, 1
    %s35 = scalar_select %p32, %s33, %s34
    %p38 = pneg %p32
    %p39 = scmp.eq.s32.totalorder %s9, 1
    %p40 = por %p38, %p39
    %p41 = scmp.ne.s32.totalorder %s33, %s36
    %p42 = scmp.eq.s32.totalorder %s9, 0
    %p43 = por %p41, %p42
    %p44 = scmp.ne.s32.totalorder %s33, %s36
    %p45 = scmp.eq.s32.totalorder %s14, 1
    %p46 = por %p44, %p45
    %p47 = scmp.ne.s32.totalorder %s36, %s37
    %p48 = scmp.eq.s32.totalorder %s14, 0
    %p49 = por %p47, %p48
    %p50 = scmp.ne.s32.totalorder %s36, %s37
    %p51 = scmp.eq.s32.totalorder %s15, 1
    %p52 = por %p50, %p51
    %p54 = scmp.ne.s32.totalorder %s37, %s53
    %p55 = scmp.eq.s32.totalorder %s15, 0
    %p56 = por %p54, %p55
    %s58 = sadd.s32 %s57, 1
    %p61 = scmp.eq.s32.totalorder %s9, 1
    %p62 = scmp.ne.s32.totalorder %s57, %s59
    %p63 = scmp.eq.s32.totalorder %s9, 0
    %p64 = por %p62, %p63
    %p65 = scmp.ne.s32.totalorder %s57, %s59
    %p66 = scmp.eq.s32.totalorder %s14, 1
    %p67 = por %p65, %p66
    %p68 = scmp.ne.s32.totalorder %s59, %s60
    %p69 = scmp.eq.s32.totalorder %s14, 0
    %p70 = por %p68, %p69
    %p71 = scmp.ne.s32.totalorder %s59, %s60
    %p72 = scmp.eq.s32.totalorder %s15, 1
    %p73 = por %p71, %p72
    %p75 = scmp.ne.s32.totalorder %s60, %s74
    %p76 = scmp.eq.s32.totalorder %s15, 0
    %p77 = por %p75, %p76
    %s79 = sadd.s32 %s78, 1
    %p82 = scmp.eq.s32.totalorder %s9, 1
    %p83 = scmp.ne.s32.totalorder %s78, %s80
    %p84 = scmp.eq.s32.totalorder %s9, 0
    %p85 = por %p83, %p84
    %p86 = scmp.ne.s32.totalorder %s78, %s80
    %p87 = scmp.eq.s32.totalorder %s14, 1
    %p88 = por %p86, %p87
    %p89 = scmp.ne.s32.totalorder %s80, %s81
    %p90 = scmp.eq.s32.totalorder %s14, 0
    %p91 = por %p89, %p90
    %p92 = scmp.ne.s32.totalorder %s80, %s81
    %p93 = scmp.eq.s32.totalorder %s15, 1
    %p94 = por %p92, %p93
    %p96 = scmp.ne.s32.totalorder %s81, %s95
    %p97 = scmp.eq.s32.totalorder %s15, 0
    %p98 = por %p96, %p97
    %s99 = ssub.s32 %s16, %s28
    %p100 = scmp.eq.s32.totalorder %s99, 0
    %s102 = sadd.s32 %s101, 1
    %s103 = scalar_select %p100, %s101, %s102
    %p106 = pneg %p100
    %p107 = scmp.eq.s32.totalorder %s9, 1
    %p108 = por %p106, %p107
    %p109 = scmp.ne.s32.totalorder %s101, %s104
    %p110 = scmp.eq.s32.totalorder %s9, 0
    %p111 = por %p109, %p110
    %p112 = scmp.ne.s32.totalorder %s101, %s104
    %p113 = scmp.eq.s32.totalorder %s14, 1
    %p114 = por %p112, %p113
    %p115 = scmp.ne.s32.totalorder %s104, %s105
    %p116 = scmp.eq.s32.totalorder %s14, 0
    %p117 = por %p115, %p116
    %p118 = scmp.ne.s32.totalorder %s104, %s105
    %p119 = scmp.eq.s32.totalorder %s15, 1
    %p120 = por %p118, %p119
    %p122 = scmp.ne.s32.totalorder %s105, %s121
    %p123 = scmp.eq.s32.totalorder %s15, 0
    %p124 = por %p122, %p123
    %p125 = scmp.le.s32.totalorder 1, %s9
    %p126 = scmp.lt.s32.totalorder %s9, 3
    %p127 = pnand %p125, %p126
    %p128 = pneg %p127
    // Predicated region
    $region9: #{dbcnn_forward.6} parent=5 // pred_check
      _
    $region10: #{dbcnn_forward.6} parent=5 // pred_check_branch
      %130 = sbr.rel (%p127) target = $region12
    $region11: #{dbcnn_forward.6} parent=5 // pred_region
      %s131 = ssub.s32 %s9, 1
      // Predicated region
      $region13: #{dbcnn_forward.6} parent=11 // pred_check
        %p132 = pneg %p70
      $region14: #{dbcnn_forward.6} parent=11 // pred_check_branch
        %134 = sbr.rel (%p132) target = $region16
      $region15: #{dbcnn_forward.6} parent=11 // pred_region
        _
      $region16: #{dbcnn_forward.6} parent=11 // pred_fallthru
        _
      // Predicated region
      $region17: #{dbcnn_forward.6} parent=11 // pred_check
        %p135 = pneg %p91
      $region18: #{dbcnn_forward.6} parent=11 // pred_check_branch
        %137 = sbr.rel (%p135) target = $region20
      $region19: #{dbcnn_forward.6} parent=11 // pred_region
        _
      $region20: #{dbcnn_forward.6} parent=11 // pred_fallthru
        _
    $region12: #{dbcnn_forward.6} parent=5 // pred_fallthru
      _
    %p138 = scmp.lt.s32.totalorder %s9, 2
    // Predicated region
    $region21: #{dbcnn_forward.6} parent=5 // pred_check
      %p139 = pneg %p138
    $region22: #{dbcnn_forward.6} parent=5 // pred_check_branch
      %141 = sbr.rel (%p139) target = $region24
    $region23: #{dbcnn_forward.6} parent=5 // pred_region
      // Predicated region
      $region25: #{dbcnn_forward.6} parent=23 // pred_check
        %p142 = pneg %p43
      $region26: #{dbcnn_forward.6} parent=23 // pred_check_branch
        %144 = sbr.rel (%p142) target = $region28
      $region27: #{dbcnn_forward.6} parent=23 // pred_region
        %s145 = smul.u32 4, %s17
        %p146 = scmp.lt.s32.totalorder %s16, 1
        %s147 = scalar_select %p146, %s16, 1
        %p148 = scmp.lt.s32.totalorder %s145, 3
        %s149 = scalar_select %p148, %s145, 3
        %s150 = smul.addr %s149, 16
        %s151 = smul.addr %s147, 64
        %s152 = sadd.s32 %s150, %s151
        %s153 = smul.addr %s152, 2
        %s154 = scalar_lea.vmem %s0, %s153
        %s155 = smul.u32 4, %s17
      $region28: #{dbcnn_forward.6} parent=23 // pred_fallthru
        _
    $region24: #{dbcnn_forward.6} parent=5 // pred_fallthru
      _
    %p156 = scmp.le.s32.totalorder 1, %s9
    %p157 = scmp.lt.s32.totalorder %s9, 3
    %p158 = pnand %p156, %p157
    %p159 = pneg %p158
    // Predicated region
    $region29: #{dbcnn_forward.6} parent=5 // pred_check
      _
    $region30: #{dbcnn_forward.6} parent=5 // pred_check_branch
      %161 = sbr.rel (%p158) target = $region32
    $region31: #{dbcnn_forward.6} parent=5 // pred_region
      %s162 = ssub.s32 %s9, 1
      %s163 = smul.u32 4, %s19
      %p164 = scmp.lt.s32.totalorder %s18, 1
      %s165 = scalar_select %p164, %s18, 1
      %p166 = scmp.lt.s32.totalorder %s163, 3
      %s167 = scalar_select %p166, %s163, 3
      %s168 = smul.addr %s167, 16
      %s169 = smul.addr %s165, 64
      %s170 = sadd.s32 %s168, %s169
      %s171 = smul.addr %s170, 2
      %s172 = scalar_lea.vmem %s0, %s171
      %p173 = pneg %p49
      %p174 = pneg %p46
      %p175 = pneg %p70
      %p176 = pneg %p67
      %p177 = pneg %p91
      %p178 = pneg %p88
      %p179 = pneg %p117
      %p180 = pneg %p114
      %p181 = scmp.lt.s32.totalorder %s18, 1
      %s182 = scalar_select %p181, %s18, 1
      %s183 = smul.addr %s182, 4
      %s184 = scalar_lea.vmem %s3, %s183
      %s185 = smul.u32 4, %s19
      %p186 = scmp.lt.s32.totalorder %s18, 1
      %s187 = scalar_select %p186, %s18, 1
      %p188 = scmp.lt.s32.totalorder %s185, 3
      %s189 = scalar_select %p188, %s185, 3
      %s190 = smul.addr %s189, 16
      %s191 = smul.addr %s187, 64
      %s192 = sadd.s32 %s190, %s191
      %s193 = smul.addr %s192, 2
      %s194 = scalar_lea.vmem %s0, %s193
      %s195 = smul.u32 4, %s19
      %p196 = scmp.lt.s32.totalorder %s18, 1
      %s197 = scalar_select %p196, %s18, 1
      %s198 = smul.addr %s197, 4
      %s199 = scalar_lea.vmem %s3, %s198
      %p201 = scmp.eq.s32.totalorder %s19, 0
      // Predicated region
      $region33: #{dbcnn_forward.6} parent=31 // pred_check
        %p202 = pneg %p201
      $region34: #{dbcnn_forward.6} parent=31 // pred_check_branch
        %204 = sbr.rel (%p202) target = $region36
      $region35: #{dbcnn_forward.6} parent=31 // pred_region
        %v205 = vlaneseq
        %vm206 = vcmp.ge.s32.totalorder %v205, 0
        %vm207 = vcmp.lt.s32.totalorder %v205, 512
        %vm208 = vmand %vm206, %vm207
        %209 = vst.msk [vmem:[#allocation2] sm:$0xf] %vm208, 0.0
        %210 = vst.msk [vmem:[#allocation3] sm:$0xf] %vm208, -inf
      $region36: #{dbcnn_forward.6} parent=31 // pred_fallthru
        _
      %v211 = vld [vmem:[%s194] sm:$0xff]
      %v212 = vld [vmem:[%s194 + $0x8] sm:$0xff]
      %v213 = vld [vmem:[%s194 + $0x10] sm:$0xff]
      %v214 = vld [vmem:[%s194 + $0x18] sm:$0xff]
      %v215 = vld [vmem:[%s194 + $0x20] sm:$0xff]
      %v216 = vld [vmem:[%s194 + $0x28] sm:$0xff]
      %v217 = vld [vmem:[%s194 + $0x30] sm:$0xff]
      %v218 = vld [vmem:[%s194 + $0x38] sm:$0xff]
      %v219 = vld [vmem:[%s194 + $0x40] sm:$0xff]
      %v220 = vld [vmem:[%s194 + $0x48] sm:$0xff]
      %v221 = vld [vmem:[%s194 + $0x50] sm:$0xff]
      %v222 = vld [vmem:[%s194 + $0x58] sm:$0xff]
      %v223 = vld [vmem:[%s194 + $0x60] sm:$0xff]
      %v224 = vld [vmem:[%s194 + $0x68] sm:$0xff]
      %v225 = vld [vmem:[%s194 + $0x70] sm:$0xff]
      %v226 = vld [vmem:[%s194 + $0x78] sm:$0xff]
      %v227 = vunpack.c.l.bf16 %v211
      %v228 = vunpack.c.h.bf16 %v211
      %v229 = vunpack.c.l.bf16 %v212
      %v230 = vunpack.c.h.bf16 %v212
      %v231 = vunpack.c.l.bf16 %v213
      %v232 = vunpack.c.h.bf16 %v213
      %v233 = vunpack.c.l.bf16 %v214
      %v234 = vunpack.c.h.bf16 %v214
      %v235 = vunpack.c.l.bf16 %v215
      %v236 = vunpack.c.h.bf16 %v215
      %v237 = vunpack.c.l.bf16 %v216
      %v238 = vunpack.c.h.bf16 %v216
      %v239 = vunpack.c.l.bf16 %v217
      %v240 = vunpack.c.h.bf16 %v217
      %v241 = vunpack.c.l.bf16 %v218
      %v242 = vunpack.c.h.bf16 %v218
      %v243 = vunpack.c.l.bf16 %v219
      %v244 = vunpack.c.h.bf16 %v219
      %v245 = vunpack.c.l.bf16 %v220
      %v246 = vunpack.c.h.bf16 %v220
      %v247 = vunpack.c.l.bf16 %v221
      %v248 = vunpack.c.h.bf16 %v221
      %v249 = vunpack.c.l.bf16 %v222
      %v250 = vunpack.c.h.bf16 %v222
      %v251 = vunpack.c.l.bf16 %v223
      %v252 = vunpack.c.h.bf16 %v223
      %v253 = vunpack.c.l.bf16 %v224
      %v254 = vunpack.c.h.bf16 %v224
      %v255 = vunpack.c.l.bf16 %v225
      %v256 = vunpack.c.h.bf16 %v225
      %v257 = vunpack.c.l.bf16 %v226
      %v258 = vunpack.c.h.bf16 %v226
      %v259 = vmax.f32 %v227, %v231
      %v260 = vmax.f32 %v228, %v232
      %v261 = vmax.f32 %v229, %v233
      %v262 = vmax.f32 %v230, %v234
      %v263 = vmax.f32 %v235, %v239
      %v264 = vmax.f32 %v236, %v240
      %v265 = vmax.f32 %v237, %v241
      %v266 = vmax.f32 %v238, %v242
      %v267 = vmax.f32 %v243, %v247
      %v268 = vmax.f32 %v244, %v248
      %v269 = vmax.f32 %v245, %v249
      %v270 = vmax.f32 %v246, %v250
      %v271 = vmax.f32 %v251, %v255
      %v272 = vmax.f32 %v252, %v256
      %v273 = vmax.f32 %v253, %v257
      %v274 = vmax.f32 %v254, %v258
      %v275 = vmax.f32 %v259, %v261
      %v276 = vmax.f32 %v260, %v262
      %v277 = vmax.f32 %v263, %v265
      %v278 = vmax.f32 %v264, %v266
      %v279 = vmax.f32 %v267, %v269
      %v280 = vmax.f32 %v268, %v270
      %v281 = vmax.f32 %v271, %v273
      %v282 = vmax.f32 %v272, %v274
      %v291 = vcombine.high %v275, %v275
      %v292 = vcombine.high %v276, %v276
      %v293 = vcombine.high %v277, %v277
      %v294 = vcombine.high %v278, %v278
      %v295 = vcombine.high %v279, %v279
      %v296 = vcombine.high %v280, %v280
      %v297 = vcombine.high %v281, %v281
      %v298 = vcombine.high %v282, %v282
      %vm307 = vcmask 1043456
      %v308 = vsel %vm307, %v275, 0.0
      %v309 = vsel %vm307, %v277, 0.0
      %v310 = vadd.f32 %v308, %v309
      %v311 = vsel %vm307, %v279, 0.0
      %v312 = vadd.f32 %v310, %v311
      %v313 = vsel %vm307, %v281, 0.0
      %v314 = vadd.f32 %v312, %v313
      %v315 = vsel %vm307, %v291, 0.0
      %v316 = vsel %vm307, %v293, 0.0
      %v317 = vadd.f32 %v315, %v316
      %v318 = vsel %vm307, %v295, 0.0
      %v319 = vadd.f32 %v317, %v318
      %v320 = vsel %vm307, %v297, 0.0
      %v321 = vadd.f32 %v319, %v320
      %v322 = vsel %vm307, %v276, 0.0
      %v323 = vsel %vm307, %v278, 0.0
      %v324 = vadd.f32 %v322, %v323
      %v325 = vsel %vm307, %v280, 0.0
      %v326 = vadd.f32 %v324, %v325
      %v327 = vsel %vm307, %v282, 0.0
      %v328 = vadd.f32 %v326, %v327
      %v329 = vsel %vm307, %v292, 0.0
      %v330 = vsel %vm307, %v294, 0.0
      %v331 = vadd.f32 %v329, %v330
      %v332 = vsel %vm307, %v296, 0.0
      %v333 = vadd.f32 %v331, %v332
      %v334 = vsel %vm307, %v298, 0.0
      %v335 = vadd.f32 %v333, %v334
      %v336 = vld [vmem:[#allocation2] sm:$0xf]
      %v337 = vsel %vm307, %v314, 0.0
      %v338 = vrot.slane %v337, 4
      %v339 = vadd.f32 %v337, %v338
      %v340 = vrot.slane %v339, 2
      %v341 = vadd.f32 %v339, %v340
      %v342 = vrot.slane %v341, 1
      %v343 = vadd.f32 %v341, %v342
      %v344 = vsel %vm307, %v321, 0.0
      %v345 = vrot.slane %v344, 4
      %v346 = vadd.f32 %v344, %v345
      %v347 = vrot.slane %v346, 2
      %v348 = vadd.f32 %v346, %v347
      %v349 = vrot.slane %v348, 1
      %v350 = vadd.f32 %v348, %v349
      %v351 = vsel %vm307, %v328, 0.0
      %v352 = vrot.slane %v351, 4
      %v353 = vadd.f32 %v351, %v352
      %v354 = vrot.slane %v353, 2
      %v355 = vadd.f32 %v353, %v354
      %v356 = vrot.slane %v355, 1
      %v357 = vadd.f32 %v355, %v356
      %v358 = vsel %vm307, %v335, 0.0
      %v359 = vrot.slane %v358, 4
      %v360 = vadd.f32 %v358, %v359
      %v361 = vrot.slane %v360, 2
      %v362 = vadd.f32 %v360, %v361
      %v363 = vrot.slane %v362, 1
      %v364 = vadd.f32 %v362, %v363
      %v369 = vcombine.low %v343, %v350
      %v370 = vcombine.low %v357, %v364
      %v372 = vunpack.c.l.s4 1966171168
      %v373 = vunpack.c.0.s8 %v372
      %v374 = vlaneseq
      %v375 = vshrl.u32 %v374, 7
      %v376 = vsub.s32 %v373, %v375
      %v377 = vrot.slane %v369, %v376
      %v379 = vunpack.c.l.s4 1966171168
      %v380 = vunpack.c.0.s8 %v379
      %v381 = vlaneseq
      %v382 = vshrl.u32 %v381, 7
      %v383 = vsub.s32 %v380, %v382
      %v384 = vrot.slane %v370, %v383
      %v385 = vcombine.low %v377, %v384
      %v387 = vunpack.c.l.s4 1966171168
      %v388 = vunpack.c.0.s8 %v387
      %v389 = vlaneseq
      %v390 = vshrl.u32 %v389, 7
      %v391 = vsub.s32 %v388, %v390
      %v392 = vrot.slane %v385, %v391
      %v394 = vadd.f32 %v336, %v392
      %v395 = vlaneseq
      %vm396 = vcmp.ge.s32.totalorder %v395, 0
      %vm397 = vcmp.lt.s32.totalorder %v395, 512
      %vm398 = vmand %vm396, %vm397
      %399 = vst.msk [vmem:[#allocation2] sm:$0xf] %vm398, %v394
      %v400 = vmax.f32 %v275, %v279
      %v401 = vmax.f32 %v277, %v281
      %v402 = vmax.f32 %v400, %v401
      %v403 = vmax.f32 %v276, %v280
      %v404 = vmax.f32 %v278, %v282
      %v405 = vmax.f32 %v403, %v404
      %v406 = vld [vmem:[#allocation3] sm:$0xf]
      %v409 = vcombine.high %v402, %v402
      %v410 = vcombine.high %v405, %v405
      %v413 = vsel %vm307, %v402, -inf
      %v414 = vrot.slane %v413, 4
      %v415 = vmax.f32 %v413, %v414
      %v416 = vrot.slane %v415, 2
      %v417 = vmax.f32 %v415, %v416
      %v418 = vrot.slane %v417, 1
      %v419 = vmax.f32 %v417, %v418
      %v420 = vsel %vm307, %v409, -inf
      %v421 = vrot.slane %v420, 4
      %v422 = vmax.f32 %v420, %v421
      %v423 = vrot.slane %v422, 2
      %v424 = vmax.f32 %v422, %v423
      %v425 = vrot.slane %v424, 1
      %v426 = vmax.f32 %v424, %v425
      %v427 = vsel %vm307, %v405, -inf
      %v428 = vrot.slane %v427, 4
      %v429 = vmax.f32 %v427, %v428
      %v430 = vrot.slane %v429, 2
      %v431 = vmax.f32 %v429, %v430
      %v432 = vrot.slane %v431, 1
      %v433 = vmax.f32 %v431, %v432
      %v434 = vsel %vm307, %v410, -inf
      %v435 = vrot.slane %v434, 4
      %v436 = vmax.f32 %v434, %v435
      %v437 = vrot.slane %v436, 2
      %v438 = vmax.f32 %v436, %v437
      %v439 = vrot.slane %v438, 1
      %v440 = vmax.f32 %v438, %v439
      %v445 = vcombine.low %v419, %v426
      %v446 = vcombine.low %v433, %v440
      %v448 = vunpack.c.l.s4 1966171168
      %v449 = vunpack.c.0.s8 %v448
      %v450 = vlaneseq
      %v451 = vshrl.u32 %v450, 7
      %v452 = vsub.s32 %v449, %v451
      %v453 = vrot.slane %v445, %v452
      %v455 = vunpack.c.l.s4 1966171168
      %v456 = vunpack.c.0.s8 %v455
      %v457 = vlaneseq
      %v458 = vshrl.u32 %v457, 7
      %v459 = vsub.s32 %v456, %v458
      %v460 = vrot.slane %v446, %v459
      %v461 = vcombine.low %v453, %v460
      %v463 = vunpack.c.l.s4 1966171168
      %v464 = vunpack.c.0.s8 %v463
      %v465 = vlaneseq
      %v466 = vshrl.u32 %v465, 7
      %v467 = vsub.s32 %v464, %v466
      %v468 = vrot.slane %v461, %v467
      %v470 = vmax.f32 %v406, %v468
      %471 = vst.msk [vmem:[#allocation3] sm:$0xf] %vm398, %v470
      // Predicated region
      $region37: #{dbcnn_forward.6} parent=31 // pred_check
        %p472 = pneg %p201
      $region38: #{dbcnn_forward.6} parent=31 // pred_check_branch
        %474 = sbr.rel (%p472) target = $region40
      $region39: #{dbcnn_forward.6} parent=31 // pred_region
        %v475 = vld [vmem:[#allocation2] sm:$0xf]
        %v476 = vmul.f32 %v475, 0.0625
        %v477 = vld [vmem:[#allocation3] sm:$0xf]
        %v479 = vlaneseq
        %v480 = vshrl.u32 %v479, 7
        %v481 = vsub.s32 0, %v480
        %v482 = vrot.slane %v476, %v481
        %v483 = vlaneseq
        %v484 = vshrl.u32 %v483, 7
        %v485 = vsub.s32 1, %v484
        %v486 = vrot.slane %v476, %v485
        %v487 = vlaneseq
        %v488 = vshrl.u32 %v487, 7
        %v489 = vsub.s32 2, %v488
        %v490 = vrot.slane %v476, %v489
        %v491 = vlaneseq
        %v492 = vshrl.u32 %v491, 7
        %v493 = vsub.s32 3, %v492
        %v494 = vrot.slane %v476, %v493
        %v500 = vlaneseq
        %v501 = vshrl.u32 %v500, 7
        %v502 = vsub.s32 0, %v501
        %v503 = vrot.slane %v477, %v502
        %v504 = vlaneseq
        %v505 = vshrl.u32 %v504, 7
        %v506 = vsub.s32 1, %v505
        %v507 = vrot.slane %v477, %v506
        %v508 = vlaneseq
        %v509 = vshrl.u32 %v508, 7
        %v510 = vsub.s32 2, %v509
        %v511 = vrot.slane %v477, %v510
        %v512 = vlaneseq
        %v513 = vshrl.u32 %v512, 7
        %v514 = vsub.s32 3, %v513
        %v515 = vrot.slane %v477, %v514
        %vm520 = vcmask 1040384
        %v521 = vsel %vm520, %v482, %v503
        %v522 = vsel %vm520, %v486, %v507
        %v523 = vsel %vm520, %v490, %v511
        %v524 = vsel %vm520, %v494, %v515
        %v525 = vpack.c.bf16 %v521, %v521
        %v526 = vpack.c.bf16 %v522, %v522
        %v527 = vpack.c.bf16 %v523, %v523
        %v528 = vpack.c.bf16 %v524, %v524
        %v529 = vld [vmem:[%s1] sm:$0xf]
        %v530 = vld [vmem:[%s1 + $0x4] sm:$0xf]
        %v531 = vld [vmem:[%s1 + $0x8] sm:$0xf]
        %v532 = vld [vmem:[%s1 + $0xc] sm:$0xf]
        %v533 = vld [vmem:[%s1 + $0x10] sm:$0xf]
        %v534 = vld [vmem:[%s1 + $0x14] sm:$0xf]
        %v535 = vld [vmem:[%s1 + $0x18] sm:$0xf]
        %v536 = vld [vmem:[%s1 + $0x1c] sm:$0xf]
        %v537 = vld [vmem:[%s1 + $0x20] sm:$0xf]
        %v538 = vld [vmem:[%s1 + $0x24] sm:$0xf]
        %v539 = vld [vmem:[%s1 + $0x28] sm:$0xf]
        %v540 = vld [vmem:[%s1 + $0x2c] sm:$0xf]
        %v541 = vld [vmem:[%s1 + $0x30] sm:$0xf]
        %v542 = vld [vmem:[%s1 + $0x34] sm:$0xf]
        %v543 = vld [vmem:[%s1 + $0x38] sm:$0xf]
        %v544 = vld [vmem:[%s1 + $0x3c] sm:$0xf]
        %v545 = vld [vmem:[%s1 + $0x40] sm:$0xf]
        %v546 = vld [vmem:[%s1 + $0x44] sm:$0xf]
        %v547 = vld [vmem:[%s1 + $0x48] sm:$0xf]
        %v548 = vld [vmem:[%s1 + $0x4c] sm:$0xf]
        %v549 = vld [vmem:[%s1 + $0x50] sm:$0xf]
        %v550 = vld [vmem:[%s1 + $0x54] sm:$0xf]
        %v551 = vld [vmem:[%s1 + $0x58] sm:$0xf]
        %v552 = vld [vmem:[%s1 + $0x5c] sm:$0xf]
        %v553 = vld [vmem:[%s1 + $0x60] sm:$0xf]
        %v554 = vld [vmem:[%s1 + $0x64] sm:$0xf]
        %v555 = vld [vmem:[%s1 + $0x68] sm:$0xf]
        %v556 = vld [vmem:[%s1 + $0x6c] sm:$0xf]
        %v557 = vld [vmem:[%s1 + $0x70] sm:$0xf]
        %v558 = vld [vmem:[%s1 + $0x74] sm:$0xf]
        %v559 = vld [vmem:[%s1 + $0x78] sm:$0xf]
        %v560 = vld [vmem:[%s1 + $0x7c] sm:$0xf]
        %v561 = vld [vmem:[%s1 + $0x80] sm:$0xf]
        %v562 = vld [vmem:[%s1 + $0x84] sm:$0xf]
        %v563 = vld [vmem:[%s1 + $0x88] sm:$0xf]
        %v564 = vld [vmem:[%s1 + $0x8c] sm:$0xf]
        %v565 = vld [vmem:[%s1 + $0x90] sm:$0xf]
        %v566 = vld [vmem:[%s1 + $0x94] sm:$0xf]
        %v567 = vld [vmem:[%s1 + $0x98] sm:$0xf]
        %v568 = vld [vmem:[%s1 + $0x9c] sm:$0xf]
        %v569 = vld [vmem:[%s1 + $0xa0] sm:$0xf]
        %v570 = vld [vmem:[%s1 + $0xa4] sm:$0xf]
        %v571 = vld [vmem:[%s1 + $0xa8] sm:$0xf]
        %v572 = vld [vmem:[%s1 + $0xac] sm:$0xf]
        %v573 = vld [vmem:[%s1 + $0xb0] sm:$0xf]
        %v574 = vld [vmem:[%s1 + $0xb4] sm:$0xf]
        %v575 = vld [vmem:[%s1 + $0xb8] sm:$0xf]
        %v576 = vld [vmem:[%s1 + $0xbc] sm:$0xf]
        %v577 = vld [vmem:[%s1 + $0xc0] sm:$0xf]
        %v578 = vld [vmem:[%s1 + $0xc4] sm:$0xf]
        %v579 = vld [vmem:[%s1 + $0xc8] sm:$0xf]
        %v580 = vld [vmem:[%s1 + $0xcc] sm:$0xf]
        %v581 = vld [vmem:[%s1 + $0xd0] sm:$0xf]
        %v582 = vld [vmem:[%s1 + $0xd4] sm:$0xf]
        %v583 = vld [vmem:[%s1 + $0xd8] sm:$0xf]
        %v584 = vld [vmem:[%s1 + $0xdc] sm:$0xf]
        %v585 = vld [vmem:[%s1 + $0xe0] sm:$0xf]
        %v586 = vld [vmem:[%s1 + $0xe4] sm:$0xf]
        %v587 = vld [vmem:[%s1 + $0xe8] sm:$0xf]
        %v588 = vld [vmem:[%s1 + $0xec] sm:$0xf]
        %v589 = vld [vmem:[%s1 + $0xf0] sm:$0xf]
        %v590 = vld [vmem:[%s1 + $0xf4] sm:$0xf]
        %v591 = vld [vmem:[%s1 + $0xf8] sm:$0xf]
        %v592 = vld [vmem:[%s1 + $0xfc] sm:$0xf]
        %v657 = vunpack.c.l.b16 %v529
        %v658 = vunpack.c.l.b16 %v530
        %v659 = vunpack.c.l.b16 %v531
        %v660 = vunpack.c.l.b16 %v532
        %v661 = vunpack.c.l.b16 %v533
        %v662 = vunpack.c.l.b16 %v534
        %v663 = vunpack.c.l.b16 %v535
        %v664 = vunpack.c.l.b16 %v536
        %v665 = vunpack.c.l.b16 %v537
        %v666 = vunpack.c.l.b16 %v538
        %v667 = vunpack.c.l.b16 %v539
        %v668 = vunpack.c.l.b16 %v540
        %v669 = vunpack.c.l.b16 %v541
        %v670 = vunpack.c.l.b16 %v542
        %v671 = vunpack.c.l.b16 %v543
        %v672 = vunpack.c.l.b16 %v544
        %v673 = vunpack.c.l.b16 %v545
        %v674 = vunpack.c.l.b16 %v546
        %v675 = vunpack.c.l.b16 %v547
        %v676 = vunpack.c.l.b16 %v548
        %v677 = vunpack.c.l.b16 %v549
        %v678 = vunpack.c.l.b16 %v550
        %v679 = vunpack.c.l.b16 %v551
        %v680 = vunpack.c.l.b16 %v552
        %v681 = vunpack.c.l.b16 %v553
        %v682 = vunpack.c.l.b16 %v554
        %v683 = vunpack.c.l.b16 %v555
        %v684 = vunpack.c.l.b16 %v556
        %v685 = vunpack.c.l.b16 %v557
        %v686 = vunpack.c.l.b16 %v558
        %v687 = vunpack.c.l.b16 %v559
        %v688 = vunpack.c.l.b16 %v560
        %v689 = vunpack.c.l.b16 %v561
        %v690 = vunpack.c.l.b16 %v562
        %v691 = vunpack.c.l.b16 %v563
        %v692 = vunpack.c.l.b16 %v564
        %v693 = vunpack.c.l.b16 %v565
        %v694 = vunpack.c.l.b16 %v566
        %v695 = vunpack.c.l.b16 %v567
        %v696 = vunpack.c.l.b16 %v568
        %v697 = vunpack.c.l.b16 %v569
        %v698 = vunpack.c.l.b16 %v570
        %v699 = vunpack.c.l.b16 %v571
        %v700 = vunpack.c.l.b16 %v572
        %v701 = vunpack.c.l.b16 %v573
        %v702 = vunpack.c.l.b16 %v574
        %v703 = vunpack.c.l.b16 %v575
        %v704 = vunpack.c.l.b16 %v576
        %v705 = vunpack.c.l.b16 %v577
        %v706 = vunpack.c.l.b16 %v578
        %v707 = vunpack.c.l.b16 %v579
        %v708 = vunpack.c.l.b16 %v580
        %v709 = vunpack.c.l.b16 %v581
        %v710 = vunpack.c.l.b16 %v582
        %v711 = vunpack.c.l.b16 %v583
        %v712 = vunpack.c.l.b16 %v584
        %v713 = vunpack.c.l.b16 %v585
        %v714 = vunpack.c.l.b16 %v586
        %v715 = vunpack.c.l.b16 %v587
        %v716 = vunpack.c.l.b16 %v588
        %v717 = vunpack.c.l.b16 %v589
        %v718 = vunpack.c.l.b16 %v590
        %v719 = vunpack.c.l.b16 %v591
        %v720 = vunpack.c.l.b16 %v592
        %v721 = vpack.c.b16 %v658, %v657
        %v722 = vpack.c.b16 %v660, %v659
        %v723 = vpack.c.b16 %v662, %v661
        %v724 = vpack.c.b16 %v664, %v663
        %v725 = vpack.c.b16 %v666, %v665
        %v726 = vpack.c.b16 %v668, %v667
        %v727 = vpack.c.b16 %v670, %v669
        %v728 = vpack.c.b16 %v672, %v671
        %v729 = vpack.c.b16 %v674, %v673
        %v730 = vpack.c.b16 %v676, %v675
        %v731 = vpack.c.b16 %v678, %v677
        %v732 = vpack.c.b16 %v680, %v679
        %v733 = vpack.c.b16 %v682, %v681
        %v734 = vpack.c.b16 %v684, %v683
        %v735 = vpack.c.b16 %v686, %v685
        %v736 = vpack.c.b16 %v688, %v687
        %v737 = vpack.c.b16 %v690, %v689
        %v738 = vpack.c.b16 %v692, %v691
        %v739 = vpack.c.b16 %v694, %v693
        %v740 = vpack.c.b16 %v696, %v695
        %v741 = vpack.c.b16 %v698, %v697
        %v742 = vpack.c.b16 %v700, %v699
        %v743 = vpack.c.b16 %v702, %v701
        %v744 = vpack.c.b16 %v704, %v703
        %v745 = vpack.c.b16 %v706, %v705
        %v746 = vpack.c.b16 %v708, %v707
        %v747 = vpack.c.b16 %v710, %v709
        %v748 = vpack.c.b16 %v712, %v711
        %v749 = vpack.c.b16 %v714, %v713
        %v750 = vpack.c.b16 %v716, %v715
        %v751 = vpack.c.b16 %v718, %v717
        %v752 = vpack.c.b16 %v720, %v719
        %785 = vmatprep.subr.bf16.mxu0 0
        %786 = vmatpush1.bf16.msra.mxu0 %v721
        %787 = vmatprep.subr.bf16.mxu0 0
        %788 = vmatpush1.bf16.msra.mxu0 %v722
        %789 = vmatprep.subr.bf16.mxu0 0
        %790 = vmatpush1.bf16.msra.mxu0 %v723
        %791 = vmatprep.subr.bf16.mxu0 0
        %792 = vmatpush1.bf16.msra.mxu0 %v724
        %793 = vmatprep.subr.bf16.mxu0 0
        %794 = vmatpush1.bf16.msra.mxu0 %v725
        %795 = vmatprep.subr.bf16.mxu0 0
        %796 = vmatpush1.bf16.msra.mxu0 %v726
        %797 = vmatprep.subr.bf16.mxu0 0
        %798 = vmatpush1.bf16.msra.mxu0 %v727
        %799 = vmatprep.subr.bf16.mxu0 0
        %800 = vmatpush1.bf16.msra.mxu0 %v728
        %801 = vmatprep.subr.bf16.mxu0 0
        %802 = vmatpush1.bf16.msra.mxu0 %v729
        %803 = vmatprep.subr.bf16.mxu0 0
        %804 = vmatpush1.bf16.msra.mxu0 %v730
        %805 = vmatprep.subr.bf16.mxu0 0
        %806 = vmatpush1.bf16.msra.mxu0 %v731
        %807 = vmatprep.subr.bf16.mxu0 0
        %808 = vmatpush1.bf16.msra.mxu0 %v732
        %809 = vmatprep.subr.bf16.mxu0 0
        %810 = vmatpush1.bf16.msra.mxu0 %v733
        %811 = vmatprep.subr.bf16.mxu0 0
        %812 = vmatpush1.bf16.msra.mxu0 %v734
        %813 = vmatprep.subr.bf16.mxu0 0
        %814 = vmatpush1.bf16.msra.mxu0 %v735
        %815 = vmatprep.subr.bf16.mxu0 0
        %816 = vmatpush1.bf16.msra.mxu0 %v736
        %817 = vmatprep.mubr.bf16.mxu0 %v526
        %818 = vmatmul.mubr.bf16.gmra.mrb[0].mxu0 %v525
        %v819 = vpop.f32.mrb[0].mxu0
        %v820 = vadd.f32 0.0, %v819
        %v821 = vpop.f32.mrb[0].mxu0
        %v822 = vpop.f32.mrb[0].mxu0
        %v823 = vpop.f32.mrb[0].mxu0
        %824 = vdwg.mxu0
        %825 = vmatprep.subr.bf16.mxu0 0
        %826 = vmatpush1.bf16.msra.mxu0 %v737
        %827 = vmatprep.subr.bf16.mxu0 0
        %828 = vmatpush1.bf16.msra.mxu0 %v738
        %829 = vmatprep.subr.bf16.mxu0 0
        %830 = vmatpush1.bf16.msra.mxu0 %v739
        %831 = vmatprep.subr.bf16.mxu0 0
        %832 = vmatpush1.bf16.msra.mxu0 %v740
        %833 = vmatprep.subr.bf16.mxu0 0
        %834 = vmatpush1.bf16.msra.mxu0 %v741
        %835 = vmatprep.subr.bf16.mxu0 0
        %836 = vmatpush1.bf16.msra.mxu0 %v742
        %837 = vmatprep.subr.bf16.mxu0 0
        %838 = vmatpush1.bf16.msra.mxu0 %v743
        %839 = vmatprep.subr.bf16.mxu0 0
        %840 = vmatpush1.bf16.msra.mxu0 %v744
        %841 = vmatprep.subr.bf16.mxu0 0
        %842 = vmatpush1.bf16.msra.mxu0 %v745
        %843 = vmatprep.subr.bf16.mxu0 0
        %844 = vmatpush1.bf16.msra.mxu0 %v746
        %845 = vmatprep.subr.bf16.mxu0 0
        %846 = vmatpush1.bf16.msra.mxu0 %v747
        %847 = vmatprep.subr.bf16.mxu0 0
        %848 = vmatpush1.bf16.msra.mxu0 %v748
        %849 = vmatprep.subr.bf16.mxu0 0
        %850 = vmatpush1.bf16.msra.mxu0 %v749
        %851 = vmatprep.subr.bf16.mxu0 0
        %852 = vmatpush1.bf16.msra.mxu0 %v750
        %853 = vmatprep.subr.bf16.mxu0 0
        %854 = vmatpush1.bf16.msra.mxu0 %v751
        %855 = vmatprep.subr.bf16.mxu0 0
        %856 = vmatpush1.bf16.msra.mxu0 %v752
        %857 = vmatprep.mubr.bf16.mxu0 %v528
        %858 = vmatmul.mubr.bf16.gmra.mrb[0].mxu0 %v527
        %v859 = vpop.f32.mrb[0].mxu0
        %v860 = vadd.f32 %v820, %v859
        %v861 = vpop.f32.mrb[0].mxu0
        %v862 = vpop.f32.mrb[0].mxu0
        %v863 = vpop.f32.mrb[0].mxu0
        %864 = vdwg.mxu0
        %v865 = vmax.f32 %v860, 0.0
        %v866 = vpack.c.bf16 %v865, %v865
        %v867 = vld [vmem:[%s2] sm:$0xff]
        %v868 = vld [vmem:[%s2 + $0x8] sm:$0xff]
        %v869 = vld [vmem:[%s2 + $0x10] sm:$0xff]
        %v870 = vld [vmem:[%s2 + $0x18] sm:$0xff]
        %v871 = vld [vmem:[%s2 + $0x20] sm:$0xff]
        %v872 = vld [vmem:[%s2 + $0x28] sm:$0xff]
        %v873 = vld [vmem:[%s2 + $0x30] sm:$0xff]
        %v874 = vld [vmem:[%s2 + $0x38] sm:$0xff]
        %v875 = vld [vmem:[%s2 + $0x40] sm:$0xff]
        %v876 = vld [vmem:[%s2 + $0x48] sm:$0xff]
        %v877 = vld [vmem:[%s2 + $0x50] sm:$0xff]
        %v878 = vld [vmem:[%s2 + $0x58] sm:$0xff]
        %v879 = vld [vmem:[%s2 + $0x60] sm:$0xff]
        %v880 = vld [vmem:[%s2 + $0x68] sm:$0xff]
        %v881 = vld [vmem:[%s2 + $0x70] sm:$0xff]
        %v882 = vld [vmem:[%s2 + $0x78] sm:$0xff]
        %v883 = vld [vmem:[%s2 + $0x80] sm:$0xff]
        %v884 = vld [vmem:[%s2 + $0x88] sm:$0xff]
        %v885 = vld [vmem:[%s2 + $0x90] sm:$0xff]
        %v886 = vld [vmem:[%s2 + $0x98] sm:$0xff]
        %v887 = vld [vmem:[%s2 + $0xa0] sm:$0xff]
        %v888 = vld [vmem:[%s2 + $0xa8] sm:$0xff]
        %v889 = vld [vmem:[%s2 + $0xb0] sm:$0xff]
        %v890 = vld [vmem:[%s2 + $0xb8] sm:$0xff]
        %v891 = vld [vmem:[%s2 + $0xc0] sm:$0xff]
        %v892 = vld [vmem:[%s2 + $0xc8] sm:$0xff]
        %v893 = vld [vmem:[%s2 + $0xd0] sm:$0xff]
        %v894 = vld [vmem:[%s2 + $0xd8] sm:$0xff]
        %v895 = vld [vmem:[%s2 + $0xe0] sm:$0xff]
        %v896 = vld [vmem:[%s2 + $0xe8] sm:$0xff]
        %v897 = vld [vmem:[%s2 + $0xf0] sm:$0xff]
        %v898 = vld [vmem:[%s2 + $0xf8] sm:$0xff]
        %v931 = vunpack.c.l.b16 %v867
        %v932 = vunpack.c.h.b16 %v867
        %v933 = vunpack.c.l.b16 %v868
        %v934 = vunpack.c.h.b16 %v868
        %v935 = vunpack.c.l.b16 %v869
        %v936 = vunpack.c.h.b16 %v869
        %v937 = vunpack.c.l.b16 %v870
        %v938 = vunpack.c.h.b16 %v870
        %v939 = vunpack.c.l.b16 %v871
        %v940 = vunpack.c.h.b16 %v871
        %v941 = vunpack.c.l.b16 %v872
        %v942 = vunpack.c.h.b16 %v872
        %v943 = vunpack.c.l.b16 %v873
        %v944 = vunpack.c.h.b16 %v873
        %v945 = vunpack.c.l.b16 %v874
        %v946 = vunpack.c.h.b16 %v874
        %v947 = vunpack.c.l.b16 %v875
        %v948 = vunpack.c.h.b16 %v875
        %v949 = vunpack.c.l.b16 %v876
        %v950 = vunpack.c.h.b16 %v876
        %v951 = vunpack.c.l.b16 %v877
        %v952 = vunpack.c.h.b16 %v877
        %v953 = vunpack.c.l.b16 %v878
        %v954 = vunpack.c.h.b16 %v878
        %v955 = vunpack.c.l.b16 %v879
        %v956 = vunpack.c.h.b16 %v879
        %v957 = vunpack.c.l.b16 %v880
        %v958 = vunpack.c.h.b16 %v880
        %v959 = vunpack.c.l.b16 %v881
        %v960 = vunpack.c.h.b16 %v881
        %v961 = vunpack.c.l.b16 %v882
        %v962 = vunpack.c.h.b16 %v882
        %v963 = vunpack.c.l.b16 %v883
        %v964 = vunpack.c.h.b16 %v883
        %v965 = vunpack.c.l.b16 %v884
        %v966 = vunpack.c.h.b16 %v884
        %v967 = vunpack.c.l.b16 %v885
        %v968 = vunpack.c.h.b16 %v885
        %v969 = vunpack.c.l.b16 %v886
        %v970 = vunpack.c.h.b16 %v886
        %v971 = vunpack.c.l.b16 %v887
        %v972 = vunpack.c.h.b16 %v887
        %v973 = vunpack.c.l.b16 %v888
        %v974 = vunpack.c.h.b16 %v888
        %v975 = vunpack.c.l.b16 %v889
        %v976 = vunpack.c.h.b16 %v889
        %v977 = vunpack.c.l.b16 %v890
        %v978 = vunpack.c.h.b16 %v890
        %v979 = vunpack.c.l.b16 %v891
        %v980 = vunpack.c.h.b16 %v891
        %v981 = vunpack.c.l.b16 %v892
        %v982 = vunpack.c.h.b16 %v892
        %v983 = vunpack.c.l.b16 %v893
        %v984 = vunpack.c.h.b16 %v893
        %v985 = vunpack.c.l.b16 %v894
        %v986 = vunpack.c.h.b16 %v894
        %v987 = vunpack.c.l.b16 %v895
        %v988 = vunpack.c.h.b16 %v895
        %v989 = vunpack.c.l.b16 %v896
        %v990 = vunpack.c.h.b16 %v896
        %v991 = vunpack.c.l.b16 %v897
        %v992 = vunpack.c.h.b16 %v897
        %v993 = vunpack.c.l.b16 %v898
        %v994 = vunpack.c.h.b16 %v898
        %v995 = vpack.c.b16 %v935, %v931
        %v996 = vpack.c.b16 %v936, %v932
        %v997 = vpack.c.b16 %v937, %v933
        %v998 = vpack.c.b16 %v938, %v934
        %v999 = vpack.c.b16 %v943, %v939
        %v1000 = vpack.c.b16 %v944, %v940
        %v1001 = vpack.c.b16 %v945, %v941
        %v1002 = vpack.c.b16 %v946, %v942
        %v1003 = vpack.c.b16 %v951, %v947
        %v1004 = vpack.c.b16 %v952, %v948
        %v1005 = vpack.c.b16 %v953, %v949
        %v1006 = vpack.c.b16 %v954, %v950
        %v1007 = vpack.c.b16 %v959, %v955
        %v1008 = vpack.c.b16 %v960, %v956
        %v1009 = vpack.c.b16 %v961, %v957
        %v1010 = vpack.c.b16 %v962, %v958
        %v1011 = vpack.c.b16 %v967, %v963
        %v1012 = vpack.c.b16 %v968, %v964
        %v1013 = vpack.c.b16 %v969, %v965
        %v1014 = vpack.c.b16 %v970, %v966
        %v1015 = vpack.c.b16 %v975, %v971
        %v1016 = vpack.c.b16 %v976, %v972
        %v1017 = vpack.c.b16 %v977, %v973
        %v1018 = vpack.c.b16 %v978, %v974
        %v1019 = vpack.c.b16 %v983, %v979
        %v1020 = vpack.c.b16 %v984, %v980
        %v1021 = vpack.c.b16 %v985, %v981
        %v1022 = vpack.c.b16 %v986, %v982
        %v1023 = vpack.c.b16 %v991, %v987
        %v1024 = vpack.c.b16 %v992, %v988
        %v1025 = vpack.c.b16 %v993, %v989
        %v1026 = vpack.c.b16 %v994, %v990
        %1059 = vmatprep.subr.bf16.mxu0 %v996
        %1060 = vmatpush1.bf16.msra.mxu0 %v995
        %1061 = vmatprep.subr.bf16.mxu0 %v1000
        %1062 = vmatpush1.bf16.msra.mxu0 %v999
        %1063 = vmatprep.subr.bf16.mxu0 %v1004
        %1064 = vmatpush1.bf16.msra.mxu0 %v1003
        %1065 = vmatprep.subr.bf16.mxu0 %v1008
        %1066 = vmatpush1.bf16.msra.mxu0 %v1007
        %1067 = vmatprep.subr.bf16.mxu0 %v1012
        %1068 = vmatpush1.bf16.msra.mxu0 %v1011
        %1069 = vmatprep.subr.bf16.mxu0 %v1016
        %1070 = vmatpush1.bf16.msra.mxu0 %v1015
        %1071 = vmatprep.subr.bf16.mxu0 %v1020
        %1072 = vmatpush1.bf16.msra.mxu0 %v1019
        %1073 = vmatprep.subr.bf16.mxu0 %v1024
        %1074 = vmatpush1.bf16.msra.mxu0 %v1023
        %1075 = vmatprep.subr.bf16.mxu0 0
        %1076 = vmatpush1.bf16.msra.mxu0 0
        %1077 = vmatprep.subr.bf16.mxu0 0
        %1078 = vmatpush1.bf16.msra.mxu0 0
        %1079 = vmatprep.subr.bf16.mxu0 0
        %1080 = vmatpush1.bf16.msra.mxu0 0
        %1081 = vmatprep.subr.bf16.mxu0 0
        %1082 = vmatpush1.bf16.msra.mxu0 0
        %1083 = vmatprep.subr.bf16.mxu0 0
        %1084 = vmatpush1.bf16.msra.mxu0 0
        %1085 = vmatprep.subr.bf16.mxu0 0
        %1086 = vmatpush1.bf16.msra.mxu0 0
        %1087 = vmatprep.subr.bf16.mxu0 0
        %1088 = vmatpush1.bf16.msra.mxu0 0
        %1089 = vmatprep.subr.bf16.mxu0 0
        %1090 = vmatpush1.bf16.msra.mxu0 0
        %1091 = vmatprep.mubr.bf16.mxu0 0
        %1092 = vmatmul.mubr.bf16.gmra.mrb[0].mxu0 %v866
        %v1093 = vpop.f32.mrb[0].mxu0
        %v1094 = vadd.f32 0.0, %v1093
        %v1095 = vpop.f32.mrb[0].mxu0
        %v1096 = vadd.f32 0.0, %v1095
        %v1097 = vpop.f32.mrb[0].mxu0
        %v1098 = vpop.f32.mrb[0].mxu0
        %1099 = vdwg.mxu0
        %1100 = vmatprep.subr.bf16.mxu0 %v998
        %1101 = vmatpush1.bf16.msra.mxu0 %v997
        %1102 = vmatprep.subr.bf16.mxu0 %v1002
        %1103 = vmatpush1.bf16.msra.mxu0 %v1001
        %1104 = vmatprep.subr.bf16.mxu0 %v1006
        %1105 = vmatpush1.bf16.msra.mxu0 %v1005
        %1106 = vmatprep.subr.bf16.mxu0 %v1010
        %1107 = vmatpush1.bf16.msra.mxu0 %v1009
        %1108 = vmatprep.subr.bf16.mxu0 %v1014
        %1109 = vmatpush1.bf16.msra.mxu0 %v1013
        %1110 = vmatprep.subr.bf16.mxu0 %v1018
        %1111 = vmatpush1.bf16.msra.mxu0 %v1017
        %1112 = vmatprep.subr.bf16.mxu0 %v1022
        %1113 = vmatpush1.bf16.msra.mxu0 %v1021
        %1114 = vmatprep.subr.bf16.mxu0 %v1026
        %1115 = vmatpush1.bf16.msra.mxu0 %v1025
        %1116 = vmatprep.subr.bf16.mxu0 0
        %1117 = vmatpush1.bf16.msra.mxu0 0
        %1118 = vmatprep.subr.bf16.mxu0 0
        %1119 = vmatpush1.bf16.msra.mxu0 0
        %1120 = vmatprep.subr.bf16.mxu0 0
        %1121 = vmatpush1.bf16.msra.mxu0 0
        %1122 = vmatprep.subr.bf16.mxu0 0
        %1123 = vmatpush1.bf16.msra.mxu0 0
        %1124 = vmatprep.subr.bf16.mxu0 0
        %1125 = vmatpush1.bf16.msra.mxu0 0
        %1126 = vmatprep.subr.bf16.mxu0 0
        %1127 = vmatpush1.bf16.msra.mxu0 0
        %1128 = vmatprep.subr.bf16.mxu0 0
        %1129 = vmatpush1.bf16.msra.mxu0 0
        %1130 = vmatprep.subr.bf16.mxu0 0
        %1131 = vmatpush1.bf16.msra.mxu0 0
        %1132 = vmatprep.mubr.bf16.mxu0 0
        %1133 = vmatmul.mubr.bf16.gmra.mrb[0].mxu0 %v866
        %v1134 = vpop.f32.mrb[0].mxu0
        %v1135 = vadd.f32 0.0, %v1134
        %v1136 = vpop.f32.mrb[0].mxu0
        %v1137 = vadd.f32 0.0, %v1136
        %v1138 = vpop.f32.mrb[0].mxu0
        %v1139 = vpop.f32.mrb[0].mxu0
        %1140 = vdwg.mxu0
        %v1145 = vrot.slane %v1094, 1
        %v1146 = vrot.slane %v1096, 1
        %v1147 = vrot.slane %v1135, 1
        %v1148 = vrot.slane %v1137, 1
        %v1153 = vadd.f32 %v1094, %v1145
        %v1154 = vadd.f32 %v1096, %v1146
        %v1155 = vadd.f32 %v1135, %v1147
        %v1156 = vadd.f32 %v1137, %v1148
        %v1157 = vxor.u32 %v1153, 2147483648
        %v1158 = vxor.u32 %v1154, 2147483648
        %v1159 = vxor.u32 %v1155, 2147483648
        %v1160 = vxor.u32 %v1156, 2147483648
        %v1161 = vmul.f32 %v1157, 1.442695
        %v1162 = vpow.pop %v1161
        %v1163 = vmul.f32 %v1158, 1.442695
        %v1164 = vpow.pop %v1163
        %v1165 = vmul.f32 %v1159, 1.442695
        %v1166 = vpow.pop %v1165
        %v1167 = vmul.f32 %v1160, 1.442695
        %v1168 = vpow.pop %v1167
        %v1169 = vadd.f32 %v1162, 1.0
        %v1170 = vadd.f32 %v1164, 1.0
        %v1171 = vadd.f32 %v1166, 1.0
        %v1172 = vadd.f32 %v1168, 1.0
        %v1173 = vrcp.pop %v1169
        %v1174 = vmul.f32 1.0, %v1173
        %v1175 = vrcp.pop %v1170
        %v1176 = vmul.f32 1.0, %v1175
        %v1177 = vrcp.pop %v1171
        %v1178 = vmul.f32 1.0, %v1177
        %v1179 = vrcp.pop %v1172
        %v1180 = vmul.f32 1.0, %v1179
        %v1185 = vcombine.low %v1174, %v1176
        %v1186 = vcombine.low %v1178, %v1180
        %v1188 = vunpack.c.l.s4 1966171168
        %v1189 = vunpack.c.0.s8 %v1188
        %v1190 = vlaneseq
        %v1191 = vshrl.u32 %v1190, 7
        %v1192 = vsub.s32 %v1189, %v1191
        %v1193 = vrot.slane %v1185, %v1192
        %v1195 = vunpack.c.l.s4 1966171168
        %v1196 = vunpack.c.0.s8 %v1195
        %v1197 = vlaneseq
        %v1198 = vshrl.u32 %v1197, 7
        %v1199 = vsub.s32 %v1196, %v1198
        %v1200 = vrot.slane %v1186, %v1199
        %v1201 = vcombine.low %v1193, %v1200
        %v1203 = vunpack.c.l.s4 1966171168
        %v1204 = vunpack.c.0.s8 %v1203
        %v1205 = vlaneseq
        %v1206 = vshrl.u32 %v1205, 7
        %v1207 = vsub.s32 %v1204, %v1206
        %v1208 = vrot.slane %v1201, %v1207
        %1210 = vst.msk [vmem:[%s199] sm:$0xf] %vm398, %v1208
      $region40: #{dbcnn_forward.6} parent=31 // pred_fallthru
        _
      %p1211 = scmp.lt.s32.totalorder %s18, 1
      %s1212 = scalar_select %p1211, %s18, 1
      %s1213 = smul.addr %s1212, 4
      %s1214 = scalar_lea.vmem %s3, %s1213
      // Predicated region
      $region41: #{dbcnn_forward.6} parent=31 // pred_check
        %p1215 = pneg %p114
      $region42: #{dbcnn_forward.6} parent=31 // pred_check_branch
        %1217 = sbr.rel (%p1215) target = $region44
      $region43: #{dbcnn_forward.6} parent=31 // pred_region
        _
      $region44: #{dbcnn_forward.6} parent=31 // pred_fallthru
        _
    $region32: #{dbcnn_forward.6} parent=5 // pred_fallthru
      _
    %p1218 = scmp.le.s32.totalorder 2, %s9
    // Predicated region
    $region45: #{dbcnn_forward.6} parent=5 // pred_check
      %p1219 = pneg %p1218
    $region46: #{dbcnn_forward.6} parent=5 // pred_check_branch
      %1221 = sbr.rel (%p1219) target = $region48
    $region47: #{dbcnn_forward.6} parent=5 // pred_region
      %s1222 = ssub.s32 %s9, 2
      // Predicated region
      $region49: #{dbcnn_forward.6} parent=47 // pred_check
        %p1223 = pneg %p120
      $region50: #{dbcnn_forward.6} parent=47 // pred_check_branch
        %1225 = sbr.rel (%p1223) target = $region52
      $region51: #{dbcnn_forward.6} parent=47 // pred_region
        %p1226 = scmp.lt.s32.totalorder %s20, 1
        %s1227 = scalar_select %p1226, %s20, 1
        %s1228 = smul.addr %s1227, 4
        %s1229 = scalar_lea.vmem %s3, %s1228
      $region52: #{dbcnn_forward.6} parent=47 // pred_fallthru
        _
    $region48: #{dbcnn_forward.6} parent=5 // pred_fallthru
      _
  $region6: #{dbcnn_forward.6} parent=0 // loop_footer
    %s13 = sadd.s32 1, %s9
  $region7: #{dbcnn_forward.6} parent=0 // loop_footer_branch
    %8 = sbr.rel target = $region3
  $region8: #{dbcnn_forward.6} parent=0 // loop_exit
    _

// kernel: dbcnn_forward.5
$region0: #{dbcnn_forward.5}
  #allocation0 [shape = 'u32[]', space=smem, size = 0x4, offset = 0x4, fixed_abs, tag = 'smem constant byte address 0x4 - core index']
  #allocation1 [shape = 'u32[144,128]{1,0:T(1,128)}', space=vmem, size = 0x12000, scoped, tag = 'internal scratch']
  %s0 = inlined_call_operand.vmem [shape: f32[128,8], index: 0, kind: input, shape index: {}]
  %s1 = inlined_call_operand.vmem [shape: bf16[8,128], index: 1, kind: input, shape index: {}]
  %s2 = inlined_call_operand.vmem [shape: f32[1,128], index: 2, kind: input, shape index: {}]
  %s3 = inlined_call_operand.vmem [shape: bf16[128,512], index: 3, kind: input, shape index: {}]
  %s4 = inlined_call_operand.vmem [shape: f32[1,512], index: 4, kind: input, shape index: {}]
  %s5 = inlined_call_operand.vmem [shape: f32[1,512], index: 5, kind: input, shape index: {}]
  %s6 = inlined_call_operand.vmem [shape: bf16[128,512], index: 6, kind: output, shape index: {}]
  %s7 = sld [smem:[#allocation0]]
  $region34: #{dbcnn_forward.5} parent=0
    _
  %s9 = ssub.s32 1, %s7
  %s10 = scalar_select 0, %s9, %s7
  // Predicated region
  $region2: #{dbcnn_forward.5} parent=0 // pred_check
    _
  $region3: #{dbcnn_forward.5} parent=0 // pred_check_branch
    %12 = sbr.rel (0) target = $region5
  $region4: #{dbcnn_forward.5} parent=0 // pred_region
    _
  $region5: #{dbcnn_forward.5} parent=0 // pred_fallthru
    _
  // Predicated region
  $region6: #{dbcnn_forward.5} parent=0 // pred_check
    _
  $region7: #{dbcnn_forward.5} parent=0 // pred_check_branch
    %14 = sbr.rel (0) target = $region9
  $region8: #{dbcnn_forward.5} parent=0 // pred_region
    _
  $region9: #{dbcnn_forward.5} parent=0 // pred_fallthru
    _
  // Predicated region
  $region10: #{dbcnn_forward.5} parent=0 // pred_check
    _
  $region11: #{dbcnn_forward.5} parent=0 // pred_check_branch
    %16 = sbr.rel (0) target = $region13
  $region12: #{dbcnn_forward.5} parent=0 // pred_region
    _
  $region13: #{dbcnn_forward.5} parent=0 // pred_fallthru
    _
  // Predicated region
  $region14: #{dbcnn_forward.5} parent=0 // pred_check
    _
  $region15: #{dbcnn_forward.5} parent=0 // pred_check_branch
    %18 = sbr.rel (0) target = $region17
  $region16: #{dbcnn_forward.5} parent=0 // pred_region
    _
  $region17: #{dbcnn_forward.5} parent=0 // pred_fallthru
    _
  // Predicated region
  $region18: #{dbcnn_forward.5} parent=0 // pred_check
    _
  $region19: #{dbcnn_forward.5} parent=0 // pred_check_branch
    %20 = sbr.rel (0) target = $region21
  $region20: #{dbcnn_forward.5} parent=0 // pred_region
    _
  $region21: #{dbcnn_forward.5} parent=0 // pred_fallthru
    _
  // Predicated region
  $region22: #{dbcnn_forward.5} parent=0 // pred_check
    _
  $region23: #{dbcnn_forward.5} parent=0 // pred_check_branch
    %22 = sbr.rel (0) target = $region25
  $region24: #{dbcnn_forward.5} parent=0 // pred_region
    _
  $region25: #{dbcnn_forward.5} parent=0 // pred_fallthru
    _
  %v24 = vld [vmem:[%s0] sm:$0xff]
  %v25 = vld [vmem:[%s0 + $0x8] sm:$0xff]
  %v26 = vld [vmem:[%s0 + $0x10] sm:$0xff]
  %v27 = vld [vmem:[%s0 + $0x18] sm:$0xff]
  %v28 = vld [vmem:[%s0 + $0x20] sm:$0xff]
  %v29 = vld [vmem:[%s0 + $0x28] sm:$0xff]
  %v30 = vld [vmem:[%s0 + $0x30] sm:$0xff]
  %v31 = vld [vmem:[%s0 + $0x38] sm:$0xff]
  %v32 = vld [vmem:[%s0 + $0x40] sm:$0xff]
  %v33 = vld [vmem:[%s0 + $0x48] sm:$0xff]
  %v34 = vld [vmem:[%s0 + $0x50] sm:$0xff]
  %v35 = vld [vmem:[%s0 + $0x58] sm:$0xff]
  %v36 = vld [vmem:[%s0 + $0x60] sm:$0xff]
  %v37 = vld [vmem:[%s0 + $0x68] sm:$0xff]
  %v38 = vld [vmem:[%s0 + $0x70] sm:$0xff]
  %v39 = vld [vmem:[%s0 + $0x78] sm:$0xff]
  %v40 = vpack.c.bf16 %v25, %v24
  %v41 = vpack.c.bf16 %v27, %v26
  %v42 = vpack.c.bf16 %v29, %v28
  %v43 = vpack.c.bf16 %v31, %v30
  %v44 = vpack.c.bf16 %v33, %v32
  %v45 = vpack.c.bf16 %v35, %v34
  %v46 = vpack.c.bf16 %v37, %v36
  %v47 = vpack.c.bf16 %v39, %v38
  %v48 = vld [vmem:[%s1] sm:$0xf]
  %v49 = vld [vmem:[%s2] sm:$0x1]
  %v51 = vlaneseq
  %v52 = vshrl.u32 %v51, 7
  %v53 = vsub.s32 0, %v52
  %v54 = vrot.slane %v49, %v53
  %vm56 = vcmask 64512
  %v58 = vsel %vm56, %v40, 0
  %v61 = vsel %vm56, %v41, 0
  %v64 = vsel %vm56, %v42, 0
  %v67 = vsel %vm56, %v43, 0
  %v70 = vsel %vm56, %v44, 0
  %v73 = vsel %vm56, %v45, 0
  %v76 = vsel %vm56, %v46, 0
  %v79 = vsel %vm56, %v47, 0
  %vm81 = vcmask 1043456
  %v83 = vsel %vm81, %v48, 0
  %85 = vmatprep.subr.bf16.mxu0 0
  %86 = vmatpush1.bf16.msra.mxu0 %v83
  %87 = vmatprep.subr.bf16.mxu0 0
  %88 = vmatpush1.bf16.msra.mxu0 0
  %89 = vmatprep.subr.bf16.mxu0 0
  %90 = vmatpush1.bf16.msra.mxu0 0
  %91 = vmatprep.subr.bf16.mxu0 0
  %92 = vmatpush1.bf16.msra.mxu0 0
  %93 = vmatprep.subr.bf16.mxu0 0
  %94 = vmatpush1.bf16.msra.mxu0 0
  %95 = vmatprep.subr.bf16.mxu0 0
  %96 = vmatpush1.bf16.msra.mxu0 0
  %97 = vmatprep.subr.bf16.mxu0 0
  %98 = vmatpush1.bf16.msra.mxu0 0
  %99 = vmatprep.subr.bf16.mxu0 0
  %100 = vmatpush1.bf16.msra.mxu0 0
  %101 = vmatprep.subr.bf16.mxu0 0
  %102 = vmatpush1.bf16.msra.mxu0 0
  %103 = vmatprep.subr.bf16.mxu0 0
  %104 = vmatpush1.bf16.msra.mxu0 0
  %105 = vmatprep.subr.bf16.mxu0 0
  %106 = vmatpush1.bf16.msra.mxu0 0
  %107 = vmatprep.subr.bf16.mxu0 0
  %108 = vmatpush1.bf16.msra.mxu0 0
  %109 = vmatprep.subr.bf16.mxu0 0
  %110 = vmatpush1.bf16.msra.mxu0 0
  %111 = vmatprep.subr.bf16.mxu0 0
  %112 = vmatpush1.bf16.msra.mxu0 0
  %113 = vmatprep.subr.bf16.mxu0 0
  %114 = vmatpush1.bf16.msra.mxu0 0
  %115 = vmatprep.subr.bf16.mxu0 0
  %116 = vmatpush1.bf16.msra.mxu0 0
  %117 = vmatprep.mubr.bf16.mxu0 0
  %118 = vmatmul.mubr.bf16.gmra.mrb[0].mxu0 %v58
  %v119 = vpop.f32.mrb[0].mxu0
  %v120 = vadd.f32 %v54, %v119
  %v121 = vpop.f32.mrb[0].mxu0
  %v122 = vpop.f32.mrb[0].mxu0
  %v123 = vadd.f32 %v54, %v122
  %v124 = vpop.f32.mrb[0].mxu0
  %125 = vmatprep.mubr.bf16.mxu0 0
  %126 = vmatmul.mubr.bf16.gmra.mrb[0].mxu0 %v61
  %v127 = vpop.f32.mrb[0].mxu0
  %v128 = vadd.f32 %v54, %v127
  %v129 = vpop.f32.mrb[0].mxu0
  %v130 = vpop.f32.mrb[0].mxu0
  %v131 = vadd.f32 %v54, %v130
  %v132 = vpop.f32.mrb[0].mxu0
  %133 = vmatprep.mubr.bf16.mxu0 0
  %134 = vmatmul.mubr.bf16.gmra.mrb[0].mxu0 %v64
  %v135 = vpop.f32.mrb[0].mxu0
  %v136 = vadd.f32 %v54, %v135
  %v137 = vpop.f32.mrb[0].mxu0
  %v138 = vpop.f32.mrb[0].mxu0
  %v139 = vadd.f32 %v54, %v138
  %v140 = vpop.f32.mrb[0].mxu0
  %141 = vmatprep.mubr.bf16.mxu0 0
  %142 = vmatmul.mubr.bf16.gmra.mrb[0].mxu0 %v67
  %v143 = vpop.f32.mrb[0].mxu0
  %v144 = vadd.f32 %v54, %v143
  %v145 = vpop.f32.mrb[0].mxu0
  %v146 = vpop.f32.mrb[0].mxu0
  %v147 = vadd.f32 %v54, %v146
  %v148 = vpop.f32.mrb[0].mxu0
  %149 = vmatprep.mubr.bf16.mxu0 0
  %150 = vmatmul.mubr.bf16.gmra.mrb[0].mxu0 %v70
  %v151 = vpop.f32.mrb[0].mxu0
  %v152 = vadd.f32 %v54, %v151
  %v153 = vpop.f32.mrb[0].mxu0
  %v154 = vpop.f32.mrb[0].mxu0
  %v155 = vadd.f32 %v54, %v154
  %v156 = vpop.f32.mrb[0].mxu0
  %157 = vmatprep.mubr.bf16.mxu0 0
  %158 = vmatmul.mubr.bf16.gmra.mrb[0].mxu0 %v73
  %v159 = vpop.f32.mrb[0].mxu0
  %v160 = vadd.f32 %v54, %v159
  %v161 = vpop.f32.mrb[0].mxu0
  %v162 = vpop.f32.mrb[0].mxu0
  %v163 = vadd.f32 %v54, %v162
  %v164 = vpop.f32.mrb[0].mxu0
  %165 = vmatprep.mubr.bf16.mxu0 0
  %166 = vmatmul.mubr.bf16.gmra.mrb[0].mxu0 %v76
  %v167 = vpop.f32.mrb[0].mxu0
  %v168 = vadd.f32 %v54, %v167
  %v169 = vpop.f32.mrb[0].mxu0
  %v170 = vpop.f32.mrb[0].mxu0
  %v171 = vadd.f32 %v54, %v170
  %v172 = vpop.f32.mrb[0].mxu0
  %173 = vmatprep.mubr.bf16.mxu0 0
  %174 = vmatmul.mubr.bf16.gmra.mrb[0].mxu0 %v79
  %v175 = vpop.f32.mrb[0].mxu0
  %v176 = vadd.f32 %v54, %v175
  %v177 = vpop.f32.mrb[0].mxu0
  %v178 = vpop.f32.mrb[0].mxu0
  %v179 = vadd.f32 %v54, %v178
  %v180 = vpop.f32.mrb[0].mxu0
  %181 = vdwg.mxu0
  %v182 = vtanh.pop %v120
  %v183 = vtanh.pop %v123
  %v184 = vtanh.pop %v128
  %v185 = vtanh.pop %v131
  %v186 = vtanh.pop %v136
  %v187 = vtanh.pop %v139
  %v188 = vtanh.pop %v144
  %v189 = vtanh.pop %v147
  %v190 = vtanh.pop %v152
  %v191 = vtanh.pop %v155
  %v192 = vtanh.pop %v160
  %v193 = vtanh.pop %v163
  %v194 = vtanh.pop %v168
  %v195 = vtanh.pop %v171
  %v196 = vtanh.pop %v176
  %v197 = vtanh.pop %v179
  %v198 = vpack.c.bf16 %v183, %v182
  %v199 = vpack.c.bf16 %v185, %v184
  %v200 = vpack.c.bf16 %v187, %v186
  %v201 = vpack.c.bf16 %v189, %v188
  %v202 = vpack.c.bf16 %v191, %v190
  %v203 = vpack.c.bf16 %v193, %v192
  %v204 = vpack.c.bf16 %v195, %v194
  %v205 = vpack.c.bf16 %v197, %v196
  %v206 = vld [vmem:[%s3] sm:$0xff]
  %v207 = vld [vmem:[%s3 + $0x8] sm:$0xff]
  %v208 = vld [vmem:[%s3 + $0x10] sm:$0xff]
  %v209 = vld [vmem:[%s3 + $0x18] sm:$0xff]
  %v210 = vld [vmem:[%s3 + $0x20] sm:$0xff]
  %v211 = vld [vmem:[%s3 + $0x28] sm:$0xff]
  %v212 = vld [vmem:[%s3 + $0x30] sm:$0xff]
  %v213 = vld [vmem:[%s3 + $0x38] sm:$0xff]
  %v214 = vld [vmem:[%s3 + $0x40] sm:$0xff]
  %v215 = vld [vmem:[%s3 + $0x48] sm:$0xff]
  %v216 = vld [vmem:[%s3 + $0x50] sm:$0xff]
  %v217 = vld [vmem:[%s3 + $0x58] sm:$0xff]
  %v218 = vld [vmem:[%s3 + $0x60] sm:$0xff]
  %v219 = vld [vmem:[%s3 + $0x68] sm:$0xff]
  %v220 = vld [vmem:[%s3 + $0x70] sm:$0xff]
  %v221 = vld [vmem:[%s3 + $0x78] sm:$0xff]
  %v222 = vld [vmem:[%s3 + $0x80] sm:$0xff]
  %v223 = vld [vmem:[%s3 + $0x88] sm:$0xff]
  %v224 = vld [vmem:[%s3 + $0x90] sm:$0xff]
  %v225 = vld [vmem:[%s3 + $0x98] sm:$0xff]
  %v226 = vld [vmem:[%s3 + $0xa0] sm:$0xff]
  %v227 = vld [vmem:[%s3 + $0xa8] sm:$0xff]
  %v228 = vld [vmem:[%s3 + $0xb0] sm:$0xff]
  %v229 = vld [vmem:[%s3 + $0xb8] sm:$0xff]
  %v230 = vld [vmem:[%s3 + $0xc0] sm:$0xff]
  %v231 = vld [vmem:[%s3 + $0xc8] sm:$0xff]
  %v232 = vld [vmem:[%s3 + $0xd0] sm:$0xff]
  %v233 = vld [vmem:[%s3 + $0xd8] sm:$0xff]
  %v234 = vld [vmem:[%s3 + $0xe0] sm:$0xff]
  %v235 = vld [vmem:[%s3 + $0xe8] sm:$0xff]
  %v236 = vld [vmem:[%s3 + $0xf0] sm:$0xff]
  %v237 = vld [vmem:[%s3 + $0xf8] sm:$0xff]
  %v270 = vunpack.c.l.b16 %v206
  %v271 = vunpack.c.h.b16 %v206
  %v272 = vunpack.c.l.b16 %v207
  %v273 = vunpack.c.h.b16 %v207
  %v274 = vunpack.c.l.b16 %v208
  %v275 = vunpack.c.h.b16 %v208
  %v276 = vunpack.c.l.b16 %v209
  %v277 = vunpack.c.h.b16 %v209
  %v278 = vunpack.c.l.b16 %v210
  %v279 = vunpack.c.h.b16 %v210
  %v280 = vunpack.c.l.b16 %v211
  %v281 = vunpack.c.h.b16 %v211
  %v282 = vunpack.c.l.b16 %v212
  %v283 = vunpack.c.h.b16 %v212
  %v284 = vunpack.c.l.b16 %v213
  %v285 = vunpack.c.h.b16 %v213
  %v286 = vunpack.c.l.b16 %v214
  %v287 = vunpack.c.h.b16 %v214
  %v288 = vunpack.c.l.b16 %v215
  %v289 = vunpack.c.h.b16 %v215
  %v290 = vunpack.c.l.b16 %v216
  %v291 = vunpack.c.h.b16 %v216
  %v292 = vunpack.c.l.b16 %v217
  %v293 = vunpack.c.h.b16 %v217
  %v294 = vunpack.c.l.b16 %v218
  %v295 = vunpack.c.h.b16 %v218
  %v296 = vunpack.c.l.b16 %v219
  %v297 = vunpack.c.h.b16 %v219
  %v298 = vunpack.c.l.b16 %v220
  %v299 = vunpack.c.h.b16 %v220
  %v300 = vunpack.c.l.b16 %v221
  %v301 = vunpack.c.h.b16 %v221
  %v302 = vunpack.c.l.b16 %v222
  %v303 = vunpack.c.h.b16 %v222
  %v304 = vunpack.c.l.b16 %v223
  %v305 = vunpack.c.h.b16 %v223
  %v306 = vunpack.c.l.b16 %v224
  %v307 = vunpack.c.h.b16 %v224
  %v308 = vunpack.c.l.b16 %v225
  %v309 = vunpack.c.h.b16 %v225
  %v310 = vunpack.c.l.b16 %v226
  %v311 = vunpack.c.h.b16 %v226
  %v312 = vunpack.c.l.b16 %v227
  %v313 = vunpack.c.h.b16 %v227
  %v314 = vunpack.c.l.b16 %v228
  %v315 = vunpack.c.h.b16 %v228
  %v316 = vunpack.c.l.b16 %v229
  %v317 = vunpack.c.h.b16 %v229
  %v318 = vunpack.c.l.b16 %v230
  %v319 = vunpack.c.h.b16 %v230
  %v320 = vunpack.c.l.b16 %v231
  %v321 = vunpack.c.h.b16 %v231
  %v322 = vunpack.c.l.b16 %v232
  %v323 = vunpack.c.h.b16 %v232
  %v324 = vunpack.c.l.b16 %v233
  %v325 = vunpack.c.h.b16 %v233
  %v326 = vunpack.c.l.b16 %v234
  %v327 = vunpack.c.h.b16 %v234
  %v328 = vunpack.c.l.b16 %v235
  %v329 = vunpack.c.h.b16 %v235
  %v330 = vunpack.c.l.b16 %v236
  %v331 = vunpack.c.h.b16 %v236
  %v332 = vunpack.c.l.b16 %v237
  %v333 = vunpack.c.h.b16 %v237
  %v334 = vpack.c.b16 %v274, %v270
  %v335 = vpack.c.b16 %v275, %v271
  %v336 = vpack.c.b16 %v276, %v272
  %v337 = vpack.c.b16 %v277, %v273
  %v338 = vpack.c.b16 %v282, %v278
  %v339 = vpack.c.b16 %v283, %v279
  %v340 = vpack.c.b16 %v284, %v280
  %v341 = vpack.c.b16 %v285, %v281
  %v342 = vpack.c.b16 %v290, %v286
  %v343 = vpack.c.b16 %v291, %v287
  %v344 = vpack.c.b16 %v292, %v288
  %v345 = vpack.c.b16 %v293, %v289
  %v346 = vpack.c.b16 %v298, %v294
  %v347 = vpack.c.b16 %v299, %v295
  %v348 = vpack.c.b16 %v300, %v296
  %v349 = vpack.c.b16 %v301, %v297
  %v350 = vpack.c.b16 %v306, %v302
  %v351 = vpack.c.b16 %v307, %v303
  %v352 = vpack.c.b16 %v308, %v304
  %v353 = vpack.c.b16 %v309, %v305
  %v354 = vpack.c.b16 %v314, %v310
  %v355 = vpack.c.b16 %v315, %v311
  %v356 = vpack.c.b16 %v316, %v312
  %v357 = vpack.c.b16 %v317, %v313
  %v358 = vpack.c.b16 %v322, %v318
  %v359 = vpack.c.b16 %v323, %v319
  %v360 = vpack.c.b16 %v324, %v320
  %v361 = vpack.c.b16 %v325, %v321
  %v362 = vpack.c.b16 %v330, %v326
  %v363 = vpack.c.b16 %v331, %v327
  %v364 = vpack.c.b16 %v332, %v328
  %v365 = vpack.c.b16 %v333, %v329
  %398 = vmatprep.subr.bf16.mxu0 %v335
  %399 = vmatpush1.bf16.msra.mxu0 %v334
  %400 = vmatprep.subr.bf16.mxu0 %v339
  %401 = vmatpush1.bf16.msra.mxu0 %v338
  %402 = vmatprep.subr.bf16.mxu0 %v343
  %403 = vmatpush1.bf16.msra.mxu0 %v342
  %404 = vmatprep.subr.bf16.mxu0 %v347
  %405 = vmatpush1.bf16.msra.mxu0 %v346
  %406 = vmatprep.subr.bf16.mxu0 %v351
  %407 = vmatpush1.bf16.msra.mxu0 %v350
  %408 = vmatprep.subr.bf16.mxu0 %v355
  %409 = vmatpush1.bf16.msra.mxu0 %v354
  %410 = vmatprep.subr.bf16.mxu0 %v359
  %411 = vmatpush1.bf16.msra.mxu0 %v358
  %412 = vmatprep.subr.bf16.mxu0 %v363
  %413 = vmatpush1.bf16.msra.mxu0 %v362
  %414 = vmatprep.subr.bf16.mxu0 0
  %415 = vmatpush1.bf16.msra.mxu0 0
  %416 = vmatprep.subr.bf16.mxu0 0
  %417 = vmatpush1.bf16.msra.mxu0 0
  %418 = vmatprep.subr.bf16.mxu0 0
  %419 = vmatpush1.bf16.msra.mxu0 0
  %420 = vmatprep.subr.bf16.mxu0 0
  %421 = vmatpush1.bf16.msra.mxu0 0
  %422 = vmatprep.subr.bf16.mxu0 0
  %423 = vmatpush1.bf16.msra.mxu0 0
  %424 = vmatprep.subr.bf16.mxu0 0
  %425 = vmatpush1.bf16.msra.mxu0 0
  %426 = vmatprep.subr.bf16.mxu0 0
  %427 = vmatpush1.bf16.msra.mxu0 0
  %428 = vmatprep.subr.bf16.mxu0 0
  %429 = vmatpush1.bf16.msra.mxu0 0
  %430 = vmatprep.mubr.bf16.mxu0 0
  %431 = vmatmul.mubr.bf16.gmra.mrb[0].mxu0 %v198
  %v432 = vpop.f32.mrb[0].mxu0
  %v433 = vadd.f32 0.0, %v432
  %v434 = vpop.f32.mrb[0].mxu0
  %v435 = vadd.f32 0.0, %v434
  %v436 = vpop.f32.mrb[0].mxu0
  %v437 = vadd.f32 0.0, %v436
  %v438 = vpop.f32.mrb[0].mxu0
  %v439 = vadd.f32 0.0, %v438
  %440 = vmatprep.mubr.bf16.mxu0 0
  %441 = vmatmul.mubr.bf16.gmra.mrb[0].mxu0 %v199
  %v442 = vpop.f32.mrb[0].mxu0
  %v443 = vadd.f32 0.0, %v442
  %v444 = vpop.f32.mrb[0].mxu0
  %v445 = vadd.f32 0.0, %v444
  %v446 = vpop.f32.mrb[0].mxu0
  %v447 = vadd.f32 0.0, %v446
  %v448 = vpop.f32.mrb[0].mxu0
  %v449 = vadd.f32 0.0, %v448
  %450 = vmatprep.mubr.bf16.mxu0 0
  %451 = vmatmul.mubr.bf16.gmra.mrb[0].mxu0 %v200
  %v452 = vpop.f32.mrb[0].mxu0
  %v453 = vadd.f32 0.0, %v452
  %v454 = vpop.f32.mrb[0].mxu0
  %v455 = vadd.f32 0.0, %v454
  %v456 = vpop.f32.mrb[0].mxu0
  %v457 = vadd.f32 0.0, %v456
  %v458 = vpop.f32.mrb[0].mxu0
  %v459 = vadd.f32 0.0, %v458
  %460 = vmatprep.mubr.bf16.mxu0 0
  %461 = vmatmul.mubr.bf16.gmra.mrb[0].mxu0 %v201
  %v462 = vpop.f32.mrb[0].mxu0
  %v463 = vadd.f32 0.0, %v462
  %v464 = vpop.f32.mrb[0].mxu0
  %v465 = vadd.f32 0.0, %v464
  %v466 = vpop.f32.mrb[0].mxu0
  %v467 = vadd.f32 0.0, %v466
  %v468 = vpop.f32.mrb[0].mxu0
  %v469 = vadd.f32 0.0, %v468
  %470 = vmatprep.mubr.bf16.mxu0 0
  %471 = vmatmul.mubr.bf16.gmra.mrb[0].mxu0 %v202
  %v472 = vpop.f32.mrb[0].mxu0
  %v473 = vadd.f32 0.0, %v472
  %v474 = vpop.f32.mrb[0].mxu0
  %v475 = vadd.f32 0.0, %v474
  %v476 = vpop.f32.mrb[0].mxu0
  %v477 = vadd.f32 0.0, %v476
  %v478 = vpop.f32.mrb[0].mxu0
  %v479 = vadd.f32 0.0, %v478
  %480 = vmatprep.mubr.bf16.mxu0 0
  %481 = vmatmul.mubr.bf16.gmra.mrb[0].mxu0 %v203
  %v482 = vpop.f32.mrb[0].mxu0
  %v483 = vadd.f32 0.0, %v482
  %v484 = vpop.f32.mrb[0].mxu0
  %v485 = vadd.f32 0.0, %v484
  %v486 = vpop.f32.mrb[0].mxu0
  %v487 = vadd.f32 0.0, %v486
  %v488 = vpop.f32.mrb[0].mxu0
  %v489 = vadd.f32 0.0, %v488
  %490 = vmatprep.mubr.bf16.mxu0 0
  %491 = vmatmul.mubr.bf16.gmra.mrb[0].mxu0 %v204
  %v492 = vpop.f32.mrb[0].mxu0
  %v493 = vadd.f32 0.0, %v492
  %v494 = vpop.f32.mrb[0].mxu0
  %v495 = vadd.f32 0.0, %v494
  %v496 = vpop.f32.mrb[0].mxu0
  %v497 = vadd.f32 0.0, %v496
  %v498 = vpop.f32.mrb[0].mxu0
  %v499 = vadd.f32 0.0, %v498
  %500 = vmatprep.mubr.bf16.mxu0 0
  %501 = vmatmul.mubr.bf16.gmra.mrb[0].mxu0 %v205
  %v502 = vpop.f32.mrb[0].mxu0
  %v503 = vadd.f32 0.0, %v502
  %v504 = vpop.f32.mrb[0].mxu0
  %v505 = vadd.f32 0.0, %v504
  %v506 = vpop.f32.mrb[0].mxu0
  %v507 = vadd.f32 0.0, %v506
  %v508 = vpop.f32.mrb[0].mxu0
  %v509 = vadd.f32 0.0, %v508
  %510 = vdwg.mxu0
  %511 = vmatprep.subr.bf16.mxu0 %v337
  %512 = vmatpush1.bf16.msra.mxu0 %v336
  %513 = vmatprep.subr.bf16.mxu0 %v341
  %514 = vmatpush1.bf16.msra.mxu0 %v340
  %515 = vmatprep.subr.bf16.mxu0 %v345
  %516 = vmatpush1.bf16.msra.mxu0 %v344
  %517 = vmatprep.subr.bf16.mxu0 %v349
  %518 = vmatpush1.bf16.msra.mxu0 %v348
  %519 = vmatprep.subr.bf16.mxu0 %v353
  %520 = vmatpush1.bf16.msra.mxu0 %v352
  %521 = vmatprep.subr.bf16.mxu0 %v357
  %522 = vmatpush1.bf16.msra.mxu0 %v356
  %523 = vmatprep.subr.bf16.mxu0 %v361
  %524 = vmatpush1.bf16.msra.mxu0 %v360
  %525 = vmatprep.subr.bf16.mxu0 %v365
  %526 = vmatpush1.bf16.msra.mxu0 %v364
  %527 = vmatprep.subr.bf16.mxu0 0
  %528 = vmatpush1.bf16.msra.mxu0 0
  %529 = vmatprep.subr.bf16.mxu0 0
  %530 = vmatpush1.bf16.msra.mxu0 0
  %531 = vmatprep.subr.bf16.mxu0 0
  %532 = vmatpush1.bf16.msra.mxu0 0
  %533 = vmatprep.subr.bf16.mxu0 0
  %534 = vmatpush1.bf16.msra.mxu0 0
  %535 = vmatprep.subr.bf16.mxu0 0
  %536 = vmatpush1.bf16.msra.mxu0 0
  %537 = vmatprep.subr.bf16.mxu0 0
  %538 = vmatpush1.bf16.msra.mxu0 0
  %539 = vmatprep.subr.bf16.mxu0 0
  %540 = vmatpush1.bf16.msra.mxu0 0
  %541 = vmatprep.subr.bf16.mxu0 0
  %542 = vmatpush1.bf16.msra.mxu0 0
  %543 = vmatprep.mubr.bf16.mxu0 0
  %544 = vmatmul.mubr.bf16.gmra.mrb[0].mxu0 %v198
  %v545 = vpop.f32.mrb[0].mxu0
  %v546 = vadd.f32 0.0, %v545
  %v547 = vpop.f32.mrb[0].mxu0
  %v548 = vadd.f32 0.0, %v547
  %v549 = vpop.f32.mrb[0].mxu0
  %v550 = vadd.f32 0.0, %v549
  %v551 = vpop.f32.mrb[0].mxu0
  %v552 = vadd.f32 0.0, %v551
  %553 = vmatprep.mubr.bf16.mxu0 0
  %554 = vmatmul.mubr.bf16.gmra.mrb[0].mxu0 %v199
  %v555 = vpop.f32.mrb[0].mxu0
  %v556 = vadd.f32 0.0, %v555
  %v557 = vpop.f32.mrb[0].mxu0
  %v558 = vadd.f32 0.0, %v557
  %v559 = vpop.f32.mrb[0].mxu0
  %v560 = vadd.f32 0.0, %v559
  %v561 = vpop.f32.mrb[0].mxu0
  %v562 = vadd.f32 0.0, %v561
  %563 = vmatprep.mubr.bf16.mxu0 0
  %564 = vmatmul.mubr.bf16.gmra.mrb[0].mxu0 %v200
  %v565 = vpop.f32.mrb[0].mxu0
  %v566 = vadd.f32 0.0, %v565
  %v567 = vpop.f32.mrb[0].mxu0
  %v568 = vadd.f32 0.0, %v567
  %v569 = vpop.f32.mrb[0].mxu0
  %v570 = vadd.f32 0.0, %v569
  %v571 = vpop.f32.mrb[0].mxu0
  %v572 = vadd.f32 0.0, %v571
  %573 = vmatprep.mubr.bf16.mxu0 0
  %574 = vmatmul.mubr.bf16.gmra.mrb[0].mxu0 %v201
  %v575 = vpop.f32.mrb[0].mxu0
  %v576 = vadd.f32 0.0, %v575
  %v577 = vpop.f32.mrb[0].mxu0
  %v578 = vadd.f32 0.0, %v577
  %v579 = vpop.f32.mrb[0].mxu0
  %v580 = vadd.f32 0.0, %v579
  %v581 = vpop.f32.mrb[0].mxu0
  %v582 = vadd.f32 0.0, %v581
  %583 = vmatprep.mubr.bf16.mxu0 0
  %584 = vmatmul.mubr.bf16.gmra.mrb[0].mxu0 %v202
  %v585 = vpop.f32.mrb[0].mxu0
  %v586 = vadd.f32 0.0, %v585
  %v587 = vpop.f32.mrb[0].mxu0
  %v588 = vadd.f32 0.0, %v587
  %v589 = vpop.f32.mrb[0].mxu0
  %v590 = vadd.f32 0.0, %v589
  %v591 = vpop.f32.mrb[0].mxu0
  %v592 = vadd.f32 0.0, %v591
  %593 = vmatprep.mubr.bf16.mxu0 0
  %594 = vmatmul.mubr.bf16.gmra.mrb[0].mxu0 %v203
  %v595 = vpop.f32.mrb[0].mxu0
  %v596 = vadd.f32 0.0, %v595
  %v597 = vpop.f32.mrb[0].mxu0
  %v598 = vadd.f32 0.0, %v597
  %v599 = vpop.f32.mrb[0].mxu0
  %v600 = vadd.f32 0.0, %v599
  %v601 = vpop.f32.mrb[0].mxu0
  %v602 = vadd.f32 0.0, %v601
  %603 = vmatprep.mubr.bf16.mxu0 0
  %604 = vmatmul.mubr.bf16.gmra.mrb[0].mxu0 %v204
  %v605 = vpop.f32.mrb[0].mxu0
  %v606 = vadd.f32 0.0, %v605
  %v607 = vpop.f32.mrb[0].mxu0
  %v608 = vadd.f32 0.0, %v607
  %v609 = vpop.f32.mrb[0].mxu0
  %v610 = vadd.f32 0.0, %v609
  %v611 = vpop.f32.mrb[0].mxu0
  %v612 = vadd.f32 0.0, %v611
  %613 = vmatprep.mubr.bf16.mxu0 0
  %614 = vmatmul.mubr.bf16.gmra.mrb[0].mxu0 %v205
  %v615 = vpop.f32.mrb[0].mxu0
  %v616 = vadd.f32 0.0, %v615
  %v617 = vpop.f32.mrb[0].mxu0
  %v618 = vadd.f32 0.0, %v617
  %v619 = vpop.f32.mrb[0].mxu0
  %v620 = vadd.f32 0.0, %v619
  %v621 = vpop.f32.mrb[0].mxu0
  %v622 = vadd.f32 0.0, %v621
  %623 = vdwg.mxu0
  %v624 = vld [vmem:[%s4] sm:$0xf]
  %v626 = vlaneseq
  %v627 = vshrl.u32 %v626, 7
  %v628 = vsub.s32 0, %v627
  %v629 = vrot.slane %v624, %v628
  %v630 = vlaneseq
  %v631 = vshrl.u32 %v630, 7
  %v632 = vsub.s32 1, %v631
  %v633 = vrot.slane %v624, %v632
  %v634 = vlaneseq
  %v635 = vshrl.u32 %v634, 7
  %v636 = vsub.s32 2, %v635
  %v637 = vrot.slane %v624, %v636
  %v638 = vlaneseq
  %v639 = vshrl.u32 %v638, 7
  %v640 = vsub.s32 3, %v639
  %v641 = vrot.slane %v624, %v640
  %v646 = vmul.f32 %v433, %v629
  %v647 = vmul.f32 %v435, %v633
  %v648 = vmul.f32 %v546, %v637
  %v649 = vmul.f32 %v548, %v641
  %v650 = vmul.f32 %v437, %v629
  %v651 = vmul.f32 %v439, %v633
  %v652 = vmul.f32 %v550, %v637
  %v653 = vmul.f32 %v552, %v641
  %v654 = vmul.f32 %v443, %v629
  %v655 = vmul.f32 %v445, %v633
  %v656 = vmul.f32 %v556, %v637
  %v657 = vmul.f32 %v558, %v641
  %v658 = vmul.f32 %v447, %v629
  %v659 = vmul.f32 %v449, %v633
  %v660 = vmul.f32 %v560, %v637
  %v661 = vmul.f32 %v562, %v641
  %v662 = vmul.f32 %v453, %v629
  %v663 = vmul.f32 %v455, %v633
  %v664 = vmul.f32 %v566, %v637
  %v665 = vmul.f32 %v568, %v641
  %v666 = vmul.f32 %v457, %v629
  %v667 = vmul.f32 %v459, %v633
  %v668 = vmul.f32 %v570, %v637
  %v669 = vmul.f32 %v572, %v641
  %v670 = vmul.f32 %v463, %v629
  %v671 = vmul.f32 %v465, %v633
  %v672 = vmul.f32 %v576, %v637
  %v673 = vmul.f32 %v578, %v641
  %v674 = vmul.f32 %v467, %v629
  %v675 = vmul.f32 %v469, %v633
  %v676 = vmul.f32 %v580, %v637
  %v677 = vmul.f32 %v582, %v641
  %v678 = vmul.f32 %v473, %v629
  %v679 = vmul.f32 %v475, %v633
  %v680 = vmul.f32 %v586, %v637
  %v681 = vmul.f32 %v588, %v641
  %v682 = vmul.f32 %v477, %v629
  %v683 = vmul.f32 %v479, %v633
  %v684 = vmul.f32 %v590, %v637
  %v685 = vmul.f32 %v592, %v641
  %v686 = vmul.f32 %v483, %v629
  %v687 = vmul.f32 %v485, %v633
  %v688 = vmul.f32 %v596, %v637
  %v689 = vmul.f32 %v598, %v641
  %v690 = vmul.f32 %v487, %v629
  %v691 = vmul.f32 %v489, %v633
  %v692 = vmul.f32 %v600, %v637
  %v693 = vmul.f32 %v602, %v641
  %v694 = vmul.f32 %v493, %v629
  %v695 = vmul.f32 %v495, %v633
  %v696 = vmul.f32 %v606, %v637
  %v697 = vmul.f32 %v608, %v641
  %v698 = vmul.f32 %v497, %v629
  %v699 = vmul.f32 %v499, %v633
  %v700 = vmul.f32 %v610, %v637
  %v701 = vmul.f32 %v612, %v641
  %v702 = vmul.f32 %v503, %v629
  %v703 = vmul.f32 %v505, %v633
  %v704 = vmul.f32 %v616, %v637
  %v705 = vmul.f32 %v618, %v641
  %v706 = vmul.f32 %v507, %v629
  %v707 = vmul.f32 %v509, %v633
  %v708 = vmul.f32 %v620, %v637
  %v709 = vmul.f32 %v622, %v641
  %v710 = vld [vmem:[%s5] sm:$0xf]
  %v712 = vlaneseq
  %v713 = vshrl.u32 %v712, 7
  %v714 = vsub.s32 0, %v713
  %v715 = vrot.slane %v710, %v714
  %v716 = vlaneseq
  %v717 = vshrl.u32 %v716, 7
  %v718 = vsub.s32 1, %v717
  %v719 = vrot.slane %v710, %v718
  %v720 = vlaneseq
  %v721 = vshrl.u32 %v720, 7
  %v722 = vsub.s32 2, %v721
  %v723 = vrot.slane %v710, %v722
  %v724 = vlaneseq
  %v725 = vshrl.u32 %v724, 7
  %v726 = vsub.s32 3, %v725
  %v727 = vrot.slane %v710, %v726
  %v732 = vadd.f32 %v646, %v715
  %v733 = vadd.f32 %v647, %v719
  %v734 = vadd.f32 %v648, %v723
  %v735 = vadd.f32 %v649, %v727
  %v736 = vadd.f32 %v650, %v715
  %v737 = vadd.f32 %v651, %v719
  %v738 = vadd.f32 %v652, %v723
  %v739 = vadd.f32 %v653, %v727
  %v740 = vadd.f32 %v654, %v715
  %v741 = vadd.f32 %v655, %v719
  %v742 = vadd.f32 %v656, %v723
  %v743 = vadd.f32 %v657, %v727
  %v744 = vadd.f32 %v658, %v715
  %v745 = vadd.f32 %v659, %v719
  %v746 = vadd.f32 %v660, %v723
  %v747 = vadd.f32 %v661, %v727
  %v748 = vadd.f32 %v662, %v715
  %v749 = vadd.f32 %v663, %v719
  %v750 = vadd.f32 %v664, %v723
  %v751 = vadd.f32 %v665, %v727
  %v752 = vadd.f32 %v666, %v715
  %v753 = vadd.f32 %v667, %v719
  %v754 = vadd.f32 %v668, %v723
  %v755 = vadd.f32 %v669, %v727
  %v756 = vadd.f32 %v670, %v715
  %v757 = vadd.f32 %v671, %v719
  %v758 = vadd.f32 %v672, %v723
  %v759 = vadd.f32 %v673, %v727
  %v760 = vadd.f32 %v674, %v715
  %v761 = vadd.f32 %v675, %v719
  %v762 = vadd.f32 %v676, %v723
  %v763 = vadd.f32 %v677, %v727
  %v764 = vadd.f32 %v678, %v715
  %v765 = vadd.f32 %v679, %v719
  %v766 = vadd.f32 %v680, %v723
  %v767 = vadd.f32 %v681, %v727
  %v768 = vadd.f32 %v682, %v715
  %v769 = vadd.f32 %v683, %v719
  %v770 = vadd.f32 %v684, %v723
  %v771 = vadd.f32 %v685, %v727
  %v772 = vadd.f32 %v686, %v715
  %v773 = vadd.f32 %v687, %v719
  %v774 = vadd.f32 %v688, %v723
  %v775 = vadd.f32 %v689, %v727
  %v776 = vadd.f32 %v690, %v715
  %v777 = vadd.f32 %v691, %v719
  %v778 = vadd.f32 %v692, %v723
  %v779 = vadd.f32 %v693, %v727
  %v780 = vadd.f32 %v694, %v715
  %v781 = vadd.f32 %v695, %v719
  %v782 = vadd.f32 %v696, %v723
  %v783 = vadd.f32 %v697, %v727
  %v784 = vadd.f32 %v698, %v715
  %v785 = vadd.f32 %v699, %v719
  %v786 = vadd.f32 %v700, %v723
  %v787 = vadd.f32 %v701, %v727
  %v788 = vadd.f32 %v702, %v715
  %v789 = vadd.f32 %v703, %v719
  %v790 = vadd.f32 %v704, %v723
  %v791 = vadd.f32 %v705, %v727
  %v792 = vadd.f32 %v706, %v715
  %v793 = vadd.f32 %v707, %v719
  %v794 = vadd.f32 %v708, %v723
  %v795 = vadd.f32 %v709, %v727
  %v796 = vmax.f32 %v732, 0.0
  %v797 = vmax.f32 %v733, 0.0
  %v798 = vmax.f32 %v734, 0.0
  %v799 = vmax.f32 %v735, 0.0
  %v800 = vmax.f32 %v736, 0.0
  %v801 = vmax.f32 %v737, 0.0
  %v802 = vmax.f32 %v738, 0.0
  %v803 = vmax.f32 %v739, 0.0
  %v804 = vmax.f32 %v740, 0.0
  %v805 = vmax.f32 %v741, 0.0
  %v806 = vmax.f32 %v742, 0.0
  %v807 = vmax.f32 %v743, 0.0
  %v808 = vmax.f32 %v744, 0.0
  %v809 = vmax.f32 %v745, 0.0
  %v810 = vmax.f32 %v746, 0.0
  %v811 = vmax.f32 %v747, 0.0
  %v812 = vmax.f32 %v748, 0.0
  %v813 = vmax.f32 %v749, 0.0
  %v814 = vmax.f32 %v750, 0.0
  %v815 = vmax.f32 %v751, 0.0
  %v816 = vmax.f32 %v752, 0.0
  %v817 = vmax.f32 %v753, 0.0
  %v818 = vmax.f32 %v754, 0.0
  %v819 = vmax.f32 %v755, 0.0
  %v820 = vmax.f32 %v756, 0.0
  %v821 = vmax.f32 %v757, 0.0
  %v822 = vmax.f32 %v758, 0.0
  %v823 = vmax.f32 %v759, 0.0
  %v824 = vmax.f32 %v760, 0.0
  %v825 = vmax.f32 %v761, 0.0
  %v826 = vmax.f32 %v762, 0.0
  %v827 = vmax.f32 %v763, 0.0
  %v828 = vmax.f32 %v764, 0.0
  %v829 = vmax.f32 %v765, 0.0
  %v830 = vmax.f32 %v766, 0.0
  %v831 = vmax.f32 %v767, 0.0
  %v832 = vmax.f32 %v768, 0.0
  %v833 = vmax.f32 %v769, 0.0
  %v834 = vmax.f32 %v770, 0.0
  %v835 = vmax.f32 %v771, 0.0
  %v836 = vmax.f32 %v772, 0.0
  %v837 = vmax.f32 %v773, 0.0
  %v838 = vmax.f32 %v774, 0.0
  %v839 = vmax.f32 %v775, 0.0
  %v840 = vmax.f32 %v776, 0.0
  %v841 = vmax.f32 %v777, 0.0
  %v842 = vmax.f32 %v778, 0.0
  %v843 = vmax.f32 %v779, 0.0
  %v844 = vmax.f32 %v780, 0.0
  %v845 = vmax.f32 %v781, 0.0
  %v846 = vmax.f32 %v782, 0.0
  %v847 = vmax.f32 %v783, 0.0
  %v848 = vmax.f32 %v784, 0.0
  %v849 = vmax.f32 %v785, 0.0
  %v850 = vmax.f32 %v786, 0.0
  %v851 = vmax.f32 %v787, 0.0
  %v852 = vmax.f32 %v788, 0.0
  %v853 = vmax.f32 %v789, 0.0
  %v854 = vmax.f32 %v790, 0.0
  %v855 = vmax.f32 %v791, 0.0
  %v856 = vmax.f32 %v792, 0.0
  %v857 = vmax.f32 %v793, 0.0
  %v858 = vmax.f32 %v794, 0.0
  %v859 = vmax.f32 %v795, 0.0
  %v860 = vpack.c.bf16 %v800, %v796
  %v861 = vpack.c.bf16 %v801, %v797
  %v862 = vpack.c.bf16 %v802, %v798
  %v863 = vpack.c.bf16 %v803, %v799
  %v864 = vpack.c.bf16 %v808, %v804
  %v865 = vpack.c.bf16 %v809, %v805
  %v866 = vpack.c.bf16 %v810, %v806
  %v867 = vpack.c.bf16 %v811, %v807
  %v868 = vpack.c.bf16 %v816, %v812
  %v869 = vpack.c.bf16 %v817, %v813
  %v870 = vpack.c.bf16 %v818, %v814
  %v871 = vpack.c.bf16 %v819, %v815
  %v872 = vpack.c.bf16 %v824, %v820
  %v873 = vpack.c.bf16 %v825, %v821
  %v874 = vpack.c.bf16 %v826, %v822
  %v875 = vpack.c.bf16 %v827, %v823
  %v876 = vpack.c.bf16 %v832, %v828
  %v877 = vpack.c.bf16 %v833, %v829
  %v878 = vpack.c.bf16 %v834, %v830
  %v879 = vpack.c.bf16 %v835, %v831
  %v880 = vpack.c.bf16 %v840, %v836
  %v881 = vpack.c.bf16 %v841, %v837
  %v882 = vpack.c.bf16 %v842, %v838
  %v883 = vpack.c.bf16 %v843, %v839
  %v884 = vpack.c.bf16 %v848, %v844
  %v885 = vpack.c.bf16 %v849, %v845
  %v886 = vpack.c.bf16 %v850, %v846
  %v887 = vpack.c.bf16 %v851, %v847
  %v888 = vpack.c.bf16 %v856, %v852
  %v889 = vpack.c.bf16 %v857, %v853
  %v890 = vpack.c.bf16 %v858, %v854
  %v891 = vpack.c.bf16 %v859, %v855
  %v924 = vunpack.c.l.b16 %v860
  %v925 = vunpack.c.l.b16 %v861
  %v926 = vunpack.c.l.b16 %v862
  %v927 = vunpack.c.l.b16 %v863
  %v928 = vunpack.c.h.b16 %v860
  %v929 = vunpack.c.h.b16 %v861
  %v930 = vunpack.c.h.b16 %v862
  %v931 = vunpack.c.h.b16 %v863
  %v932 = vunpack.c.l.b16 %v864
  %v933 = vunpack.c.l.b16 %v865
  %v934 = vunpack.c.l.b16 %v866
  %v935 = vunpack.c.l.b16 %v867
  %v936 = vunpack.c.h.b16 %v864
  %v937 = vunpack.c.h.b16 %v865
  %v938 = vunpack.c.h.b16 %v866
  %v939 = vunpack.c.h.b16 %v867
  %v940 = vunpack.c.l.b16 %v868
  %v941 = vunpack.c.l.b16 %v869
  %v942 = vunpack.c.l.b16 %v870
  %v943 = vunpack.c.l.b16 %v871
  %v944 = vunpack.c.h.b16 %v868
  %v945 = vunpack.c.h.b16 %v869
  %v946 = vunpack.c.h.b16 %v870
  %v947 = vunpack.c.h.b16 %v871
  %v948 = vunpack.c.l.b16 %v872
  %v949 = vunpack.c.l.b16 %v873
  %v950 = vunpack.c.l.b16 %v874
  %v951 = vunpack.c.l.b16 %v875
  %v952 = vunpack.c.h.b16 %v872
  %v953 = vunpack.c.h.b16 %v873
  %v954 = vunpack.c.h.b16 %v874
  %v955 = vunpack.c.h.b16 %v875
  %v956 = vunpack.c.l.b16 %v876
  %v957 = vunpack.c.l.b16 %v877
  %v958 = vunpack.c.l.b16 %v878
  %v959 = vunpack.c.l.b16 %v879
  %v960 = vunpack.c.h.b16 %v876
  %v961 = vunpack.c.h.b16 %v877
  %v962 = vunpack.c.h.b16 %v878
  %v963 = vunpack.c.h.b16 %v879
  %v964 = vunpack.c.l.b16 %v880
  %v965 = vunpack.c.l.b16 %v881
  %v966 = vunpack.c.l.b16 %v882
  %v967 = vunpack.c.l.b16 %v883
  %v968 = vunpack.c.h.b16 %v880
  %v969 = vunpack.c.h.b16 %v881
  %v970 = vunpack.c.h.b16 %v882
  %v971 = vunpack.c.h.b16 %v883
  %v972 = vunpack.c.l.b16 %v884
  %v973 = vunpack.c.l.b16 %v885
  %v974 = vunpack.c.l.b16 %v886
  %v975 = vunpack.c.l.b16 %v887
  %v976 = vunpack.c.h.b16 %v884
  %v977 = vunpack.c.h.b16 %v885
  %v978 = vunpack.c.h.b16 %v886
  %v979 = vunpack.c.h.b16 %v887
  %v980 = vunpack.c.l.b16 %v888
  %v981 = vunpack.c.l.b16 %v889
  %v982 = vunpack.c.l.b16 %v890
  %v983 = vunpack.c.l.b16 %v891
  %v984 = vunpack.c.h.b16 %v888
  %v985 = vunpack.c.h.b16 %v889
  %v986 = vunpack.c.h.b16 %v890
  %v987 = vunpack.c.h.b16 %v891
  %v988 = vpack.c.b16 %v925, %v924
  %v989 = vpack.c.b16 %v927, %v926
  %v990 = vpack.c.b16 %v929, %v928
  %v991 = vpack.c.b16 %v931, %v930
  %v992 = vpack.c.b16 %v933, %v932
  %v993 = vpack.c.b16 %v935, %v934
  %v994 = vpack.c.b16 %v937, %v936
  %v995 = vpack.c.b16 %v939, %v938
  %v996 = vpack.c.b16 %v941, %v940
  %v997 = vpack.c.b16 %v943, %v942
  %v998 = vpack.c.b16 %v945, %v944
  %v999 = vpack.c.b16 %v947, %v946
  %v1000 = vpack.c.b16 %v949, %v948
  %v1001 = vpack.c.b16 %v951, %v950
  %v1002 = vpack.c.b16 %v953, %v952
  %v1003 = vpack.c.b16 %v955, %v954
  %v1004 = vpack.c.b16 %v957, %v956
  %v1005 = vpack.c.b16 %v959, %v958
  %v1006 = vpack.c.b16 %v961, %v960
  %v1007 = vpack.c.b16 %v963, %v962
  %v1008 = vpack.c.b16 %v965, %v964
  %v1009 = vpack.c.b16 %v967, %v966
  %v1010 = vpack.c.b16 %v969, %v968
  %v1011 = vpack.c.b16 %v971, %v970
  %v1012 = vpack.c.b16 %v973, %v972
  %v1013 = vpack.c.b16 %v975, %v974
  %v1014 = vpack.c.b16 %v977, %v976
  %v1015 = vpack.c.b16 %v979, %v978
  %v1016 = vpack.c.b16 %v981, %v980
  %v1017 = vpack.c.b16 %v983, %v982
  %v1018 = vpack.c.b16 %v985, %v984
  %v1019 = vpack.c.b16 %v987, %v986
  %1052 = vst [vmem:[%s6] sm:$0xff] %v988
  %1053 = vst [vmem:[%s6 + $0x8] sm:$0xff] %v989
  %1054 = vst [vmem:[%s6 + $0x10] sm:$0xff] %v990
  %1055 = vst [vmem:[%s6 + $0x18] sm:$0xff] %v991
  %1056 = vst [vmem:[%s6 + $0x20] sm:$0xff] %v992
  %1057 = vst [vmem:[%s6 + $0x28] sm:$0xff] %v993
  %1058 = vst [vmem:[%s6 + $0x30] sm:$0xff] %v994
  %1059 = vst [vmem:[%s6 + $0x38] sm:$0xff] %v995
  %1060 = vst [vmem:[%s6 + $0x40] sm:$0xff] %v996
  %1061 = vst [vmem:[%s6 + $0x48] sm:$0xff] %v997
  %1062 = vst [vmem:[%s6 + $0x50] sm:$0xff] %v998
  %1063 = vst [vmem:[%s6 + $0x58] sm:$0xff] %v999
  %1064 = vst [vmem:[%s6 + $0x60] sm:$0xff] %v1000
  %1065 = vst [vmem:[%s6 + $0x68] sm:$0xff] %v1001
  %1066 = vst [vmem:[%s6 + $0x70] sm:$0xff] %v1002
  %1067 = vst [vmem:[%s6 + $0x78] sm:$0xff] %v1003
  %1068 = vst [vmem:[%s6 + $0x80] sm:$0xff] %v1004
  %1069 = vst [vmem:[%s6 + $0x88] sm:$0xff] %v1005
  %1070 = vst [vmem:[%s6 + $0x90] sm:$0xff] %v1006
  %1071 = vst [vmem:[%s6 + $0x98] sm:$0xff] %v1007
  %1072 = vst [vmem:[%s6 + $0xa0] sm:$0xff] %v1008
  %1073 = vst [vmem:[%s6 + $0xa8] sm:$0xff] %v1009
  %1074 = vst [vmem:[%s6 + $0xb0] sm:$0xff] %v1010
  %1075 = vst [vmem:[%s6 + $0xb8] sm:$0xff] %v1011
  %1076 = vst [vmem:[%s6 + $0xc0] sm:$0xff] %v1012
  %1077 = vst [vmem:[%s6 + $0xc8] sm:$0xff] %v1013
  %1078 = vst [vmem:[%s6 + $0xd0] sm:$0xff] %v1014
  %1079 = vst [vmem:[%s6 + $0xd8] sm:$0xff] %v1015
  %1080 = vst [vmem:[%s6 + $0xe0] sm:$0xff] %v1016
  %1081 = vst [vmem:[%s6 + $0xe8] sm:$0xff] %v1017
  %1082 = vst [vmem:[%s6 + $0xf0] sm:$0xff] %v1018
  %1083 = vst [vmem:[%s6 + $0xf8] sm:$0xff] %v1019
  // Predicated region
  $region26: #{dbcnn_forward.5} parent=0 // pred_check
    _
  $region27: #{dbcnn_forward.5} parent=0 // pred_check_branch
    %1085 = sbr.rel (0) target = $region29
  $region28: #{dbcnn_forward.5} parent=0 // pred_region
    _
  $region29: #{dbcnn_forward.5} parent=0 // pred_fallthru
    _
  // Predicated region
  $region30: #{dbcnn_forward.5} parent=0 // pred_check
    _
  $region31: #{dbcnn_forward.5} parent=0 // pred_check_branch
    %1087 = sbr.rel (0) target = $region33
  $region32: #{dbcnn_forward.5} parent=0 // pred_region
    _
  $region33: #{dbcnn_forward.5} parent=0 // pred_fallthru
    _

// kernel: dbcnn_forward.7
$region0: #{dbcnn_forward.7}
  #allocation0 [shape = 'u32[]', space=smem, size = 0x4, offset = 0x4, fixed_abs, tag = 'smem constant byte address 0x4 - core index']
  #allocation1 [shape = 'u32[144,128]{1,0:T(1,128)}', space=vmem, size = 0x12000, scoped, tag = 'internal scratch']
  %s0 = inlined_call_operand.vmem [shape: f32[2,16,8], index: 0, kind: input, shape index: {}]
  %s1 = inlined_call_operand.vmem [shape: bf16[8,512], index: 1, kind: input, shape index: {}]
  %s2 = inlined_call_operand.vmem [shape: f32[1,512], index: 2, kind: input, shape index: {}]
  %s3 = inlined_call_operand.vmem [shape: f32[2,1,512], index: 3, kind: input, shape index: {}]
  %s4 = inlined_call_operand.vmem [shape: f32[2,16,512], index: 4, kind: output, shape index: {}]
  %s5 = sld [smem:[#allocation0]]
  $region49: #{dbcnn_forward.7} parent=0
    _
  %s7 = ssub.s32 1, %s5
  %s8 = scalar_select 0, %s7, %s5
  loop: start=0, step=1, limit=4
  $region2: #{dbcnn_forward.7} parent=0 // loop_pre_header
    _
  $region3: #{dbcnn_forward.7} parent=0 // loop_header
    %s10 = sphi 0, %s14
    %p11 = scmp.ge.s32.totalorder %s10, 4
    %s20 = sphi 0, %s22
    %s23 = sphi 0, %s20
    %s24 = sphi 0, %s23
    %s40 = sphi 0, %s24
    %s44 = sphi 0, %s44
    %s46 = sphi 0, %s44
    %s47 = sphi 0, %s46
    %s61 = sphi 0, %s47
    %s65 = sphi 0, %s65
    %s67 = sphi 0, %s65
    %s68 = sphi 0, %s67
    %s82 = sphi 0, %s68
    %s88 = sphi 0, %s90
    %s91 = sphi 0, %s88
    %s92 = sphi 0, %s91
    %s108 = sphi 0, %s92
    %s114 = sphi 0, %s116
    %s117 = sphi 0, %s114
    %s118 = sphi 0, %s117
    %s134 = sphi 0, %s118
  $region4: #{dbcnn_forward.7} parent=0 // loop_header_branch
    %13 = sbr.rel (%p11) target = $region8
  $region5: #{dbcnn_forward.7} parent=0 // loop_body
    %s15 = ssub.s32 %s10, 1
    %s16 = ssub.s32 %s10, 2
    %s17 = sadd.s32 %s10, 1
    %s18 = ssub.s32 %s10, %s17
    %p19 = scmp.eq.s32.totalorder %s18, 0
    %s21 = sadd.s32 %s20, 1
    %s22 = scalar_select %p19, %s20, %s21
    %p25 = pneg %p19
    %p26 = scmp.eq.s32.totalorder %s10, 1
    %p27 = por %p25, %p26
    %p28 = scmp.ne.s32.totalorder %s20, %s23
    %p29 = scmp.eq.s32.totalorder %s10, 0
    %p30 = por %p28, %p29
    %p31 = scmp.ne.s32.totalorder %s20, %s23
    %p32 = scmp.eq.s32.totalorder %s15, 1
    %p33 = por %p31, %p32
    %p34 = scmp.ne.s32.totalorder %s23, %s24
    %p35 = scmp.eq.s32.totalorder %s15, 0
    %p36 = por %p34, %p35
    %p37 = scmp.ne.s32.totalorder %s23, %s24
    %p38 = scmp.eq.s32.totalorder %s16, 1
    %p39 = por %p37, %p38
    %p41 = scmp.ne.s32.totalorder %s24, %s40
    %p42 = scmp.eq.s32.totalorder %s16, 0
    %p43 = por %p41, %p42
    %s45 = sadd.s32 %s44, 1
    %p48 = scmp.eq.s32.totalorder %s10, 1
    %p49 = scmp.ne.s32.totalorder %s44, %s46
    %p50 = scmp.eq.s32.totalorder %s10, 0
    %p51 = por %p49, %p50
    %p52 = scmp.ne.s32.totalorder %s44, %s46
    %p53 = scmp.eq.s32.totalorder %s15, 1
    %p54 = por %p52, %p53
    %p55 = scmp.ne.s32.totalorder %s46, %s47
    %p56 = scmp.eq.s32.totalorder %s15, 0
    %p57 = por %p55, %p56
    %p58 = scmp.ne.s32.totalorder %s46, %s47
    %p59 = scmp.eq.s32.totalorder %s16, 1
    %p60 = por %p58, %p59
    %p62 = scmp.ne.s32.totalorder %s47, %s61
    %p63 = scmp.eq.s32.totalorder %s16, 0
    %p64 = por %p62, %p63
    %s66 = sadd.s32 %s65, 1
    %p69 = scmp.eq.s32.totalorder %s10, 1
    %p70 = scmp.ne.s32.totalorder %s65, %s67
    %p71 = scmp.eq.s32.totalorder %s10, 0
    %p72 = por %p70, %p71
    %p73 = scmp.ne.s32.totalorder %s65, %s67
    %p74 = scmp.eq.s32.totalorder %s15, 1
    %p75 = por %p73, %p74
    %p76 = scmp.ne.s32.totalorder %s67, %s68
    %p77 = scmp.eq.s32.totalorder %s15, 0
    %p78 = por %p76, %p77
    %p79 = scmp.ne.s32.totalorder %s67, %s68
    %p80 = scmp.eq.s32.totalorder %s16, 1
    %p81 = por %p79, %p80
    %p83 = scmp.ne.s32.totalorder %s68, %s82
    %p84 = scmp.eq.s32.totalorder %s16, 0
    %p85 = por %p83, %p84
    %s86 = ssub.s32 %s10, %s17
    %p87 = scmp.eq.s32.totalorder %s86, 0
    %s89 = sadd.s32 %s88, 1
    %s90 = scalar_select %p87, %s88, %s89
    %p93 = pneg %p87
    %p94 = scmp.eq.s32.totalorder %s10, 1
    %p95 = por %p93, %p94
    %p96 = scmp.ne.s32.totalorder %s88, %s91
    %p97 = scmp.eq.s32.totalorder %s10, 0
    %p98 = por %p96, %p97
    %p99 = scmp.ne.s32.totalorder %s88, %s91
    %p100 = scmp.eq.s32.totalorder %s15, 1
    %p101 = por %p99, %p100
    %p102 = scmp.ne.s32.totalorder %s91, %s92
    %p103 = scmp.eq.s32.totalorder %s15, 0
    %p104 = por %p102, %p103
    %p105 = scmp.ne.s32.totalorder %s91, %s92
    %p106 = scmp.eq.s32.totalorder %s16, 1
    %p107 = por %p105, %p106
    %p109 = scmp.ne.s32.totalorder %s92, %s108
    %p110 = scmp.eq.s32.totalorder %s16, 0
    %p111 = por %p109, %p110
    %s112 = ssub.s32 %s10, %s17
    %p113 = scmp.eq.s32.totalorder %s112, 0
    %s115 = sadd.s32 %s114, 1
    %s116 = scalar_select %p113, %s114, %s115
    %p119 = pneg %p113
    %p120 = scmp.eq.s32.totalorder %s10, 1
    %p121 = por %p119, %p120
    %p122 = scmp.ne.s32.totalorder %s114, %s117
    %p123 = scmp.eq.s32.totalorder %s10, 0
    %p124 = por %p122, %p123
    %p125 = scmp.ne.s32.totalorder %s114, %s117
    %p126 = scmp.eq.s32.totalorder %s15, 1
    %p127 = por %p125, %p126
    %p128 = scmp.ne.s32.totalorder %s117, %s118
    %p129 = scmp.eq.s32.totalorder %s15, 0
    %p130 = por %p128, %p129
    %p131 = scmp.ne.s32.totalorder %s117, %s118
    %p132 = scmp.eq.s32.totalorder %s16, 1
    %p133 = por %p131, %p132
    %p135 = scmp.ne.s32.totalorder %s118, %s134
    %p136 = scmp.eq.s32.totalorder %s16, 0
    %p137 = por %p135, %p136
    %p138 = scmp.le.s32.totalorder 1, %s10
    %p139 = scmp.lt.s32.totalorder %s10, 3
    %p140 = pnand %p138, %p139
    %p141 = pneg %p140
    // Predicated region
    $region9: #{dbcnn_forward.7} parent=5 // pred_check
      _
    $region10: #{dbcnn_forward.7} parent=5 // pred_check_branch
      %143 = sbr.rel (%p140) target = $region12
    $region11: #{dbcnn_forward.7} parent=5 // pred_region
      %s144 = ssub.s32 %s10, 1
      // Predicated region
      $region13: #{dbcnn_forward.7} parent=11 // pred_check
        %p145 = pneg %p57
      $region14: #{dbcnn_forward.7} parent=11 // pred_check_branch
        %147 = sbr.rel (%p145) target = $region16
      $region15: #{dbcnn_forward.7} parent=11 // pred_region
        _
      $region16: #{dbcnn_forward.7} parent=11 // pred_fallthru
        _
      // Predicated region
      $region17: #{dbcnn_forward.7} parent=11 // pred_check
        %p148 = pneg %p78
      $region18: #{dbcnn_forward.7} parent=11 // pred_check_branch
        %150 = sbr.rel (%p148) target = $region20
      $region19: #{dbcnn_forward.7} parent=11 // pred_region
        _
      $region20: #{dbcnn_forward.7} parent=11 // pred_fallthru
        _
    $region12: #{dbcnn_forward.7} parent=5 // pred_fallthru
      _
    %p151 = scmp.lt.s32.totalorder %s10, 2
    // Predicated region
    $region21: #{dbcnn_forward.7} parent=5 // pred_check
      %p152 = pneg %p151
    $region22: #{dbcnn_forward.7} parent=5 // pred_check_branch
      %154 = sbr.rel (%p152) target = $region24
    $region23: #{dbcnn_forward.7} parent=5 // pred_region
      // Predicated region
      $region25: #{dbcnn_forward.7} parent=23 // pred_check
        %p155 = pneg %p30
      $region26: #{dbcnn_forward.7} parent=23 // pred_check_branch
        %157 = sbr.rel (%p155) target = $region28
      $region27: #{dbcnn_forward.7} parent=23 // pred_region
        %p158 = scmp.lt.s32.totalorder %s10, 1
        %s159 = scalar_select %p158, %s10, 1
        %s160 = smul.addr %s159, 2
        %s161 = smul.addr %s160, 8
        %s162 = scalar_lea.vmem %s0, %s161
      $region28: #{dbcnn_forward.7} parent=23 // pred_fallthru
        _
      // Predicated region
      $region29: #{dbcnn_forward.7} parent=23 // pred_check
        %p163 = pneg %p98
      $region30: #{dbcnn_forward.7} parent=23 // pred_check_branch
        %165 = sbr.rel (%p163) target = $region32
      $region31: #{dbcnn_forward.7} parent=23 // pred_region
        %p166 = scmp.lt.s32.totalorder %s10, 1
        %s167 = scalar_select %p166, %s10, 1
        %s168 = smul.addr %s167, 4
        %s169 = scalar_lea.vmem %s3, %s168
      $region32: #{dbcnn_forward.7} parent=23 // pred_fallthru
        _
    $region24: #{dbcnn_forward.7} parent=5 // pred_fallthru
      _
    %p170 = scmp.le.s32.totalorder 1, %s10
    %p171 = scmp.lt.s32.totalorder %s10, 3
    %p172 = pnand %p170, %p171
    %p173 = pneg %p172
    // Predicated region
    $region33: #{dbcnn_forward.7} parent=5 // pred_check
      _
    $region34: #{dbcnn_forward.7} parent=5 // pred_check_branch
      %175 = sbr.rel (%p172) target = $region36
    $region35: #{dbcnn_forward.7} parent=5 // pred_region
      %s176 = ssub.s32 %s10, 1
      %p177 = scmp.lt.s32.totalorder %s15, 1
      %s178 = scalar_select %p177, %s15, 1
      %s179 = smul.addr %s178, 2
      %s180 = smul.addr %s179, 8
      %s181 = scalar_lea.vmem %s0, %s180
      %p182 = pneg %p36
      %p183 = pneg %p33
      %p184 = pneg %p57
      %p185 = pneg %p54
      %p186 = pneg %p78
      %p187 = pneg %p75
      %p188 = scmp.lt.s32.totalorder %s15, 1
      %s189 = scalar_select %p188, %s15, 1
      %s190 = smul.addr %s189, 4
      %s191 = scalar_lea.vmem %s3, %s190
      %p192 = pneg %p104
      %p193 = pneg %p101
      %p194 = pneg %p130
      %p195 = pneg %p127
      %p196 = scmp.lt.s32.totalorder %s15, 1
      %s197 = scalar_select %p196, %s15, 1
      %s198 = smul.addr %s197, 8
      %s199 = smul.addr %s198, 8
      %s200 = scalar_lea.vmem %s4, %s199
      %p201 = scmp.lt.s32.totalorder %s15, 1
      %s202 = scalar_select %p201, %s15, 1
      %s203 = smul.addr %s202, 2
      %s204 = smul.addr %s203, 8
      %s205 = scalar_lea.vmem %s0, %s204
      %p206 = scmp.lt.s32.totalorder %s15, 1
      %s207 = scalar_select %p206, %s15, 1
      %s208 = smul.addr %s207, 4
      %s209 = scalar_lea.vmem %s3, %s208
      %p210 = scmp.lt.s32.totalorder %s15, 1
      %s211 = scalar_select %p210, %s15, 1
      %s212 = smul.addr %s211, 8
      %s213 = smul.addr %s212, 8
      %s214 = scalar_lea.vmem %s4, %s213
      %v216 = vld [vmem:[%s205] sm:$0xff]
      %v217 = vld [vmem:[%s205 + $0x8] sm:$0xff]
      %v218 = vpack.c.bf16 %v217, %v216
      %v219 = vld [vmem:[%s1] sm:$0xff]
      %v220 = vld [vmem:[%s1 + $0x8] sm:$0xff]
      %v221 = vld [vmem:[%s2] sm:$0xf]
      %v223 = vlaneseq
      %v224 = vshrl.u32 %v223, 7
      %v225 = vsub.s32 0, %v224
      %v226 = vrot.slane %v221, %v225
      %v227 = vlaneseq
      %v228 = vshrl.u32 %v227, 7
      %v229 = vsub.s32 1, %v228
      %v230 = vrot.slane %v221, %v229
      %v231 = vlaneseq
      %v232 = vshrl.u32 %v231, 7
      %v233 = vsub.s32 2, %v232
      %v234 = vrot.slane %v221, %v233
      %v235 = vlaneseq
      %v236 = vshrl.u32 %v235, 7
      %v237 = vsub.s32 3, %v236
      %v238 = vrot.slane %v221, %v237
      %v245 = vunpack.c.l.b16 %v219
      %v246 = vunpack.c.h.b16 %v219
      %v247 = vunpack.c.l.b16 %v220
      %v248 = vunpack.c.h.b16 %v220
      %v249 = vpack.c.b16 %v245, %v245
      %v250 = vpack.c.b16 %v246, %v246
      %v251 = vpack.c.b16 %v247, %v247
      %v252 = vpack.c.b16 %v248, %v248
      %vm253 = vcmask 64512
      %v255 = vsel %vm253, %v218, 0
      %vm257 = vcmask 1043456
      %v259 = vsel %vm257, %v249, 0
      %v262 = vsel %vm257, %v250, 0
      %v265 = vsel %vm257, %v251, 0
      %v268 = vsel %vm257, %v252, 0
      %270 = vmatprep.subr.bf16.mxu0 %v262
      %271 = vmatpush1.bf16.msra.mxu0 %v259
      %272 = vmatprep.subr.bf16.mxu0 0
      %273 = vmatpush1.bf16.msra.mxu0 0
      %274 = vmatprep.subr.bf16.mxu0 0
      %275 = vmatpush1.bf16.msra.mxu0 0
      %276 = vmatprep.subr.bf16.mxu0 0
      %277 = vmatpush1.bf16.msra.mxu0 0
      %278 = vmatprep.subr.bf16.mxu0 0
      %279 = vmatpush1.bf16.msra.mxu0 0
      %280 = vmatprep.subr.bf16.mxu0 0
      %281 = vmatpush1.bf16.msra.mxu0 0
      %282 = vmatprep.subr.bf16.mxu0 0
      %283 = vmatpush1.bf16.msra.mxu0 0
      %284 = vmatprep.subr.bf16.mxu0 0
      %285 = vmatpush1.bf16.msra.mxu0 0
      %286 = vmatprep.subr.bf16.mxu0 0
      %287 = vmatpush1.bf16.msra.mxu0 0
      %288 = vmatprep.subr.bf16.mxu0 0
      %289 = vmatpush1.bf16.msra.mxu0 0
      %290 = vmatprep.subr.bf16.mxu0 0
      %291 = vmatpush1.bf16.msra.mxu0 0
      %292 = vmatprep.subr.bf16.mxu0 0
      %293 = vmatpush1.bf16.msra.mxu0 0
      %294 = vmatprep.subr.bf16.mxu0 0
      %295 = vmatpush1.bf16.msra.mxu0 0
      %296 = vmatprep.subr.bf16.mxu0 0
      %297 = vmatpush1.bf16.msra.mxu0 0
      %298 = vmatprep.subr.bf16.mxu0 0
      %299 = vmatpush1.bf16.msra.mxu0 0
      %300 = vmatprep.subr.bf16.mxu0 0
      %301 = vmatpush1.bf16.msra.mxu0 0
      %302 = vmatprep.mubr.bf16.mxu0 0
      %303 = vmatmul.mubr.bf16.gmra.mrb[0].mxu0 %v255
      %v304 = vpop.f32.mrb[0].mxu0
      %v305 = vadd.f32 %v226, %v304
      %v306 = vpop.f32.mrb[0].mxu0
      %v307 = vadd.f32 %v230, %v306
      %v308 = vpop.f32.mrb[0].mxu0
      %v309 = vadd.f32 %v226, %v308
      %v310 = vpop.f32.mrb[0].mxu0
      %v311 = vadd.f32 %v230, %v310
      %312 = vdwg.mxu0
      %313 = vmatprep.subr.bf16.mxu0 %v268
      %314 = vmatpush1.bf16.msra.mxu0 %v265
      %315 = vmatprep.subr.bf16.mxu0 0
      %316 = vmatpush1.bf16.msra.mxu0 0
      %317 = vmatprep.subr.bf16.mxu0 0
      %318 = vmatpush1.bf16.msra.mxu0 0
      %319 = vmatprep.subr.bf16.mxu0 0
      %320 = vmatpush1.bf16.msra.mxu0 0
      %321 = vmatprep.subr.bf16.mxu0 0
      %322 = vmatpush1.bf16.msra.mxu0 0
      %323 = vmatprep.subr.bf16.mxu0 0
      %324 = vmatpush1.bf16.msra.mxu0 0
      %325 = vmatprep.subr.bf16.mxu0 0
      %326 = vmatpush1.bf16.msra.mxu0 0
      %327 = vmatprep.subr.bf16.mxu0 0
      %328 = vmatpush1.bf16.msra.mxu0 0
      %329 = vmatprep.subr.bf16.mxu0 0
      %330 = vmatpush1.bf16.msra.mxu0 0
      %331 = vmatprep.subr.bf16.mxu0 0
      %332 = vmatpush1.bf16.msra.mxu0 0
      %333 = vmatprep.subr.bf16.mxu0 0
      %334 = vmatpush1.bf16.msra.mxu0 0
      %335 = vmatprep.subr.bf16.mxu0 0
      %336 = vmatpush1.bf16.msra.mxu0 0
      %337 = vmatprep.subr.bf16.mxu0 0
      %338 = vmatpush1.bf16.msra.mxu0 0
      %339 = vmatprep.subr.bf16.mxu0 0
      %340 = vmatpush1.bf16.msra.mxu0 0
      %341 = vmatprep.subr.bf16.mxu0 0
      %342 = vmatpush1.bf16.msra.mxu0 0
      %343 = vmatprep.subr.bf16.mxu0 0
      %344 = vmatpush1.bf16.msra.mxu0 0
      %345 = vmatprep.mubr.bf16.mxu0 0
      %346 = vmatmul.mubr.bf16.gmra.mrb[0].mxu0 %v255
      %v347 = vpop.f32.mrb[0].mxu0
      %v348 = vadd.f32 %v234, %v347
      %v349 = vpop.f32.mrb[0].mxu0
      %v350 = vadd.f32 %v238, %v349
      %v351 = vpop.f32.mrb[0].mxu0
      %v352 = vadd.f32 %v234, %v351
      %v353 = vpop.f32.mrb[0].mxu0
      %v354 = vadd.f32 %v238, %v353
      %355 = vdwg.mxu0
      %v356 = vtanh.pop %v305
      %v357 = vtanh.pop %v307
      %v358 = vtanh.pop %v348
      %v359 = vtanh.pop %v350
      %v360 = vtanh.pop %v309
      %v361 = vtanh.pop %v311
      %v362 = vtanh.pop %v352
      %v363 = vtanh.pop %v354
      %v364 = vld [vmem:[%s209] sm:$0xf]
      %v366 = vlaneseq
      %v367 = vshrl.u32 %v366, 7
      %v368 = vsub.s32 0, %v367
      %v369 = vrot.slane %v364, %v368
      %v370 = vlaneseq
      %v371 = vshrl.u32 %v370, 7
      %v372 = vsub.s32 1, %v371
      %v373 = vrot.slane %v364, %v372
      %v374 = vlaneseq
      %v375 = vshrl.u32 %v374, 7
      %v376 = vsub.s32 2, %v375
      %v377 = vrot.slane %v364, %v376
      %v378 = vlaneseq
      %v379 = vshrl.u32 %v378, 7
      %v380 = vsub.s32 3, %v379
      %v381 = vrot.slane %v364, %v380
      %v386 = vmul.f32 %v356, %v369
      %v387 = vmul.f32 %v357, %v373
      %v388 = vmul.f32 %v358, %v377
      %v389 = vmul.f32 %v359, %v381
      %v390 = vmul.f32 %v360, %v369
      %v391 = vmul.f32 %v361, %v373
      %v392 = vmul.f32 %v362, %v377
      %v393 = vmul.f32 %v363, %v381
      %v394 = vmul.f32 %v386, %v386
      %v395 = vmul.f32 %v387, %v387
      %v396 = vmul.f32 %v388, %v388
      %v397 = vmul.f32 %v389, %v389
      %v398 = vmul.f32 %v390, %v390
      %v399 = vmul.f32 %v391, %v391
      %v400 = vmul.f32 %v392, %v392
      %v401 = vmul.f32 %v393, %v393
      %v402 = vadd.f32 %v394, %v395
      %v403 = vadd.f32 %v402, %v396
      %v404 = vadd.f32 %v403, %v397
      %405 = vadd.xlane.f32.xlu0 %v404
      %v406 = vpop.xlane.xlu0 %405
      %v407 = vadd.f32 %v398, %v399
      %v408 = vadd.f32 %v407, %v400
      %v409 = vadd.f32 %v408, %v401
      %410 = vadd.xlane.f32.xlu0 %v409
      %v411 = vpop.xlane.xlu0 %410
      %v412 = vmax.f32 %v406, 1e-24
      %v413 = vmax.f32 %v411, 1e-24
      %v414 = vrsqrt.pop %v412
      %v415 = vrsqrt.pop %v413
      %v416 = vmul.f32 %v386, %v414
      %v417 = vmul.f32 %v387, %v414
      %v418 = vmul.f32 %v388, %v414
      %v419 = vmul.f32 %v389, %v414
      %v420 = vmul.f32 %v390, %v415
      %v421 = vmul.f32 %v391, %v415
      %v422 = vmul.f32 %v392, %v415
      %v423 = vmul.f32 %v393, %v415
      %v424 = vmul.f32 %v406, %v414
      %v425 = vmul.f32 %v411, %v415
      %v426 = vmul.f32 %v424, %v414
      %v427 = vmul.f32 %v425, %v415
      %v428 = vadd.f32 %v426, %v427
      %v429 = vrot.slane %v428, 4
      %v430 = vadd.f32 %v428, %v429
      %v431 = vrot.slane %v430, 2
      %v432 = vadd.f32 %v430, %v431
      %v433 = vrot.slane %v432, 1
      %v434 = vadd.f32 %v432, %v433
      %v435 = vmax.f32 %v434, 1e-24
      %v436 = vrsqrt.pop %v435
      %v437 = vmul.f32 %v416, %v436
      %v438 = vmul.f32 %v417, %v436
      %v439 = vmul.f32 %v418, %v436
      %v440 = vmul.f32 %v419, %v436
      %v441 = vmul.f32 %v420, %v436
      %v442 = vmul.f32 %v421, %v436
      %v443 = vmul.f32 %v422, %v436
      %v444 = vmul.f32 %v423, %v436
      %445 = vst [vmem:[%s214] sm:$0xff] %v437
      %446 = vst [vmem:[%s214 + $0x8] sm:$0xff] %v438
      %447 = vst [vmem:[%s214 + $0x10] sm:$0xff] %v439
      %448 = vst [vmem:[%s214 + $0x18] sm:$0xff] %v440
      %449 = vst [vmem:[%s214 + $0x20] sm:$0xff] %v441
      %450 = vst [vmem:[%s214 + $0x28] sm:$0xff] %v442
      %451 = vst [vmem:[%s214 + $0x30] sm:$0xff] %v443
      %452 = vst [vmem:[%s214 + $0x38] sm:$0xff] %v444
      %p453 = scmp.lt.s32.totalorder %s15, 1
      %s454 = scalar_select %p453, %s15, 1
      %s455 = smul.addr %s454, 8
      %s456 = smul.addr %s455, 8
      %s457 = scalar_lea.vmem %s4, %s456
      // Predicated region
      $region37: #{dbcnn_forward.7} parent=35 // pred_check
        %p458 = pneg %p127
      $region38: #{dbcnn_forward.7} parent=35 // pred_check_branch
        %460 = sbr.rel (%p458) target = $region40
      $region39: #{dbcnn_forward.7} parent=35 // pred_region
        _
      $region40: #{dbcnn_forward.7} parent=35 // pred_fallthru
        _
    $region36: #{dbcnn_forward.7} parent=5 // pred_fallthru
      _
    %p461 = scmp.le.s32.totalorder 2, %s10
    // Predicated region
    $region41: #{dbcnn_forward.7} parent=5 // pred_check
      %p462 = pneg %p461
    $region42: #{dbcnn_forward.7} parent=5 // pred_check_branch
      %464 = sbr.rel (%p462) target = $region44
    $region43: #{dbcnn_forward.7} parent=5 // pred_region
      %s465 = ssub.s32 %s10, 2
      // Predicated region
      $region45: #{dbcnn_forward.7} parent=43 // pred_check
        %p466 = pneg %p133
      $region46: #{dbcnn_forward.7} parent=43 // pred_check_branch
        %468 = sbr.rel (%p466) target = $region48
      $region47: #{dbcnn_forward.7} parent=43 // pred_region
        %p469 = scmp.lt.s32.totalorder %s16, 1
        %s470 = scalar_select %p469, %s16, 1
        %s471 = smul.addr %s470, 8
        %s472 = smul.addr %s471, 8
        %s473 = scalar_lea.vmem %s4, %s472
      $region48: #{dbcnn_forward.7} parent=43 // pred_fallthru
        _
    $region44: #{dbcnn_forward.7} parent=5 // pred_fallthru
      _
  $region6: #{dbcnn_forward.7} parent=0 // loop_footer
    %s14 = sadd.s32 1, %s10
  $region7: #{dbcnn_forward.7} parent=0 // loop_footer_branch
    %9 = sbr.rel target = $region3
  $region8: #{dbcnn_forward.7} parent=0 // loop_exit
    _

// kernel: dbcnn_forward.9
$region0: #{dbcnn_forward.9}
  #allocation0 [shape = 'u32[]', space=smem, size = 0x4, offset = 0x4, fixed_abs, tag = 'smem constant byte address 0x4 - core index']
  #allocation1 [shape = 'u32[144,128]{1,0:T(1,128)}', space=vmem, size = 0x12000, scoped, tag = 'internal scratch']
  %s0 = inlined_call_operand.vmem [shape: f32[2,2,16], index: 0, kind: input, shape index: {}]
  %s1 = inlined_call_operand.vmem [shape: f32[1,16], index: 1, kind: input, shape index: {}]
  %s2 = inlined_call_operand.hbm [shape: f32[2,16], index: 2, kind: output, shape index: {}]
  %s3 = sld [smem:[#allocation0]]
  $region18: #{dbcnn_forward.9} parent=0
    _
  %s5 = ssub.s32 1, %s3
  %s6 = scalar_select 0, %s5, %s3
  $region1: #{dbcnn_forward.9} parent=0
    #allocation2 [shape = 'u8[1024]{0}', space=vmem, size = 0x400, scoped, tag = 'output window, operand 0, single buffered']
    #allocation3 [shape = 's32[1]{0}', space=sflag, size = 0x4, scoped, tag = 'scoped memory for dbcnn_forward.9']
    %7 = vsyncpa [#allocation3], 0
    // Predicated region
    $region2: #{dbcnn_forward.9} parent=1 // pred_check
      _
    $region3: #{dbcnn_forward.9} parent=1 // pred_check_branch
      %9 = sbr.rel (0) target = $region5
    $region4: #{dbcnn_forward.9} parent=1 // pred_region
      _
    $region5: #{dbcnn_forward.9} parent=1 // pred_fallthru
      _
    // Predicated region
    $region6: #{dbcnn_forward.9} parent=1 // pred_check
      _
    $region7: #{dbcnn_forward.9} parent=1 // pred_check_branch
      %11 = sbr.rel (0) target = $region9
    $region8: #{dbcnn_forward.9} parent=1 // pred_region
      _
    $region9: #{dbcnn_forward.9} parent=1 // pred_fallthru
      _
    %v12 = vld [vmem:[%s0] sm:$0x3]
    %v13 = vld [vmem:[%s0 + $0x2] sm:$0x3]
    %vm14 = vcmask 123904
    %v15 = vsel %vm14, %v12, 0.0
    %v16 = vsel %vm14, %v13, 0.0
    %v17 = vadd.f32 %v15, %v16
    %v18 = vld [vmem:[%s1] sm:$0x1]
    %v20 = vlaneseq
    %v21 = vshrl.u32 %v20, 7
    %v22 = vsub.s32 0, %v21
    %v23 = vrot.slane %v18, %v22
    %v25 = vadd.f32 %v17, %v23
    %v26 = vlaneseq
    %v27 = vand.u32 %v26, 127
    %vm28 = vcmp.lt.s32.totalorder %v27, 10
    %v29 = vsel %vm28, %v25, -inf
    %v30 = vsel %vm14, %v29, -inf
    %31 = vmax.xlane.f32.xlu0 %v30
    %v32 = vpop.xlane.xlu0 %31
    %v33 = vsub.f32 %v29, %v32
    %v34 = vmul.f32 %v33, 1.442695
    %v35 = vpow.pop %v34
    %v36 = vsel %vm14, %v35, 0.0
    %37 = vadd.xlane.f32.xlu0 %v36
    %v38 = vpop.xlane.xlu0 %37
    %v39 = vrcp.pop %v38
    %v40 = vmul.f32 %v35, %v39
    %41 = vst.msk [vmem:[#allocation2] sm:$0x3] %vm14, %v40
    // Predicated region
    $region10: #{dbcnn_forward.9} parent=1 // pred_check
      _
    $region11: #{dbcnn_forward.9} parent=1 // pred_check_branch
      %43 = sbr.rel (0) target = $region13
    $region12: #{dbcnn_forward.9} parent=1 // pred_region
      %s45 = ssub.s32 32, 32
      %46 = vsyncadd [#allocation3], %s45
      %s48 = sshll.u32 [#allocation2], 4
      %s49 = int_to_ptr.vmem [resolvable:$true] %s48
      %51 = dma.vmem_to_hbm [thread:$0]  %s49, 32, %s2, [#allocation3]
    $region13: #{dbcnn_forward.9} parent=1 // pred_fallthru
      _
    // Predicated region
    $region14: #{dbcnn_forward.9} parent=1 // pred_check
      _
    $region15: #{dbcnn_forward.9} parent=1 // pred_check_branch
      %53 = sbr.rel (0) target = $region17
    $region16: #{dbcnn_forward.9} parent=1 // pred_region
      %54 = dma.done [#allocation3], 32
    $region17: #{dbcnn_forward.9} parent=1 // pred_fallthru
      _
    %55 = vsyncpa [#allocation3], 1

// kernel: dbcnn_forward.8
$region0: #{dbcnn_forward.8}
  #allocation0 [shape = 'u32[]', space=smem, size = 0x4, offset = 0x4, fixed_abs, tag = 'smem constant byte address 0x4 - core index']
  #allocation1 [shape = 'u32[144,128]{1,0:T(1,128)}', space=vmem, size = 0x12000, scoped, tag = 'internal scratch']
  #allocation2 [shape = 'f32[2,16]{1,0:T(2,128)}', space=vmem, size = 0x400, scoped, tag = 'scratch operand']
  %s0 = inlined_call_operand.vmem [shape: f32[2,8192], index: 0, kind: input, shape index: {}]
  %s1 = inlined_call_operand.vmem [shape: bf16[5,16,8192], index: 1, kind: input, shape index: {}]
  %s2 = inlined_call_operand.vmem [shape: f32[2,2,16], index: 2, kind: output, shape index: {}]
  %s3 = sld [smem:[#allocation0]]
  $region72: #{dbcnn_forward.8} parent=0
    _
  %s5 = ssub.s32 1, %s3
  %s6 = scalar_select 0, %s5, %s3
  $region1: #{dbcnn_forward.8} parent=0
    #allocation3 [shape = 'u8[655360]{0}', space=vmem, size = 0xa0000, scoped, tag = 'input window, operand 1']
    loop: start=0, step=1, limit=6
    $region2: #{dbcnn_forward.8} parent=1 // loop_pre_header
      _
    $region3: #{dbcnn_forward.8} parent=1 // loop_header
      %s8 = sphi 0, %s12
      %p9 = scmp.ge.s32.totalorder %s8, 6
      %s15 = sphi 0, %s27
      %s16 = sphi 0, %s23
      %s17 = sphi 0, %s15
      %s18 = sphi 0, %s16
      %s19 = sphi 0, %s17
      %s20 = sphi 0, %s18
      %s34 = sphi 0, %s36
      %s37 = sphi 0, %s34
      %s38 = sphi 0, %s37
      %s54 = sphi 0, %s38
      %s64 = sphi 0, %s66
      %s67 = sphi 0, %s64
      %s68 = sphi 0, %s67
      %s84 = sphi 0, %s68
      %s90 = sphi 0, %s92
      %s93 = sphi 0, %s90
      %s94 = sphi 0, %s93
      %s110 = sphi 0, %s94
    $region4: #{dbcnn_forward.8} parent=1 // loop_header_branch
      %11 = sbr.rel (%p9) target = $region8
    $region5: #{dbcnn_forward.8} parent=1 // loop_body
      %s13 = ssub.s32 %s8, 1
      %s14 = ssub.s32 %s8, 2
      %s21 = sadd.s32 1, %s16
      %p22 = scmp.ge.s32.totalorder %s21, 2
      %s23 = scalar_select %p22, 0, %s21
      %s24 = sadd.s32 1, %s15
      %s25 = scalar_select %p22, %s24, %s15
      %p26 = scmp.ge.s32.totalorder %s25, 2
      %s27 = scalar_select %p26, 0, %s25
      %s28 = smul.u32 %s15, 2
      %s29 = sadd.s32 %s28, %s16
      %s30 = smul.u32 %s27, 2
      %s31 = sadd.s32 %s30, %s23
      %s32 = ssub.s32 %s29, %s31
      %p33 = scmp.eq.s32.totalorder %s32, 0
      %s35 = sadd.s32 %s34, 1
      %s36 = scalar_select %p33, %s34, %s35
      %p39 = pneg %p33
      %p40 = scmp.eq.s32.totalorder %s8, 3
      %p41 = por %p39, %p40
      %p42 = scmp.ne.s32.totalorder %s34, %s37
      %p43 = scmp.eq.s32.totalorder %s8, 0
      %p44 = por %p42, %p43
      %p45 = scmp.ne.s32.totalorder %s34, %s37
      %p46 = scmp.eq.s32.totalorder %s13, 3
      %p47 = por %p45, %p46
      %p48 = scmp.ne.s32.totalorder %s37, %s38
      %p49 = scmp.eq.s32.totalorder %s13, 0
      %p50 = por %p48, %p49
      %p51 = scmp.ne.s32.totalorder %s37, %s38
      %p52 = scmp.eq.s32.totalorder %s14, 3
      %p53 = por %p51, %p52
      %p55 = scmp.ne.s32.totalorder %s38, %s54
      %p56 = scmp.eq.s32.totalorder %s14, 0
      %p57 = por %p55, %p56
      %s58 = smul.u32 %s15, 2
      %s59 = sadd.s32 %s58, %s16
      %s60 = smul.u32 %s27, 2
      %s61 = sadd.s32 %s60, %s23
      %s62 = ssub.s32 %s59, %s61
      %p63 = scmp.eq.s32.totalorder %s62, 0
      %s65 = sadd.s32 %s64, 1
      %s66 = scalar_select %p63, %s64, %s65
      %p69 = pneg %p63
      %p70 = scmp.eq.s32.totalorder %s8, 3
      %p71 = por %p69, %p70
      %p72 = scmp.ne.s32.totalorder %s64, %s67
      %p73 = scmp.eq.s32.totalorder %s8, 0
      %p74 = por %p72, %p73
      %p75 = scmp.ne.s32.totalorder %s64, %s67
      %p76 = scmp.eq.s32.totalorder %s13, 3
      %p77 = por %p75, %p76
      %p78 = scmp.ne.s32.totalorder %s67, %s68
      %p79 = scmp.eq.s32.totalorder %s13, 0
      %p80 = por %p78, %p79
      %p81 = scmp.ne.s32.totalorder %s67, %s68
      %p82 = scmp.eq.s32.totalorder %s14, 3
      %p83 = por %p81, %p82
      %p85 = scmp.ne.s32.totalorder %s68, %s84
      %p86 = scmp.eq.s32.totalorder %s14, 0
      %p87 = por %p85, %p86
      %s88 = ssub.s32 %s15, %s27
      %p89 = scmp.eq.s32.totalorder %s88, 0
      %s91 = sadd.s32 %s90, 1
      %s92 = scalar_select %p89, %s90, %s91
      %p95 = pneg %p89
      %p96 = scmp.eq.s32.totalorder %s8, 3
      %p97 = por %p95, %p96
      %p98 = scmp.ne.s32.totalorder %s90, %s93
      %p99 = scmp.eq.s32.totalorder %s8, 0
      %p100 = por %p98, %p99
      %p101 = scmp.ne.s32.totalorder %s90, %s93
      %p102 = scmp.eq.s32.totalorder %s13, 3
      %p103 = por %p101, %p102
      %p104 = scmp.ne.s32.totalorder %s93, %s94
      %p105 = scmp.eq.s32.totalorder %s13, 0
      %p106 = por %p104, %p105
      %p107 = scmp.ne.s32.totalorder %s93, %s94
      %p108 = scmp.eq.s32.totalorder %s14, 3
      %p109 = por %p107, %p108
      %p111 = scmp.ne.s32.totalorder %s94, %s110
      %p112 = scmp.eq.s32.totalorder %s14, 0
      %p113 = por %p111, %p112
      %p114 = scmp.le.s32.totalorder 1, %s8
      %p115 = scmp.lt.s32.totalorder %s8, 5
      %p116 = pnand %p114, %p115
      %p117 = pneg %p116
      // Predicated region
      $region9: #{dbcnn_forward.8} parent=5 // pred_check
        _
      $region10: #{dbcnn_forward.8} parent=5 // pred_check_branch
        %119 = sbr.rel (%p116) target = $region12
      $region11: #{dbcnn_forward.8} parent=5 // pred_region
        %s120 = ssub.s32 %s8, 1
      $region12: #{dbcnn_forward.8} parent=5 // pred_fallthru
        _
      %p121 = scmp.lt.s32.totalorder %s8, 4
      // Predicated region
      $region13: #{dbcnn_forward.8} parent=5 // pred_check
        %p122 = pneg %p121
      $region14: #{dbcnn_forward.8} parent=5 // pred_check_branch
        %124 = sbr.rel (%p122) target = $region16
      $region15: #{dbcnn_forward.8} parent=5 // pred_region
        // Predicated region
        $region17: #{dbcnn_forward.8} parent=15 // pred_check
          %p125 = pneg %p44
        $region18: #{dbcnn_forward.8} parent=15 // pred_check_branch
          %127 = sbr.rel (%p125) target = $region20
        $region19: #{dbcnn_forward.8} parent=15 // pred_region
          %s128 = smul.u32 %s15, 2
          %s129 = sadd.s32 %s128, %s16
          %s130 = smul.u32 16, %s129
          %p131 = scmp.lt.s32.totalorder %s130, 63
          %s132 = scalar_select %p131, %s130, 63
          %s133 = smul.addr %s132, 2
          %s134 = scalar_lea.vmem %s0, %s133
          %s135 = smul.u32 %s15, 2
          %s136 = sadd.s32 %s135, %s16
          %s137 = smul.u32 16, %s136
        $region20: #{dbcnn_forward.8} parent=15 // pred_fallthru
          _
        // Predicated region
        $region21: #{dbcnn_forward.8} parent=15 // pred_check
          %p138 = pneg %p74
        $region22: #{dbcnn_forward.8} parent=15 // pred_check_branch
          %140 = sbr.rel (%p138) target = $region24
        $region23: #{dbcnn_forward.8} parent=15 // pred_region
          %s141 = sand.u32 %s64, 1
          %s142 = sand.u32 %s64, 1
          %s143 = smul.addr %s142, 640
          %s144 = scalar_lea.vmem [#allocation3], %s143
          %s145 = smul.u32 %s15, 2
          %s146 = sadd.s32 %s145, %s16
          %s147 = smul.u32 16, %s146
          %s148 = smul.addr %s147, 4
          %s149 = scalar_lea.vmem %s1, %s148
          // Predicated region
          $region25: #{dbcnn_forward.8} parent=23 // pred_check
            _
          $region26: #{dbcnn_forward.8} parent=23 // pred_check_branch
            %151 = sbr.rel (0) target = $region28
          $region27: #{dbcnn_forward.8} parent=23 // pred_region
            // Predicated region
            $region29: #{dbcnn_forward.8} parent=27 // pred_check
              _
            $region30: #{dbcnn_forward.8} parent=27 // pred_check_branch
              %153 = sbr.rel (0) target = $region32
            $region31: #{dbcnn_forward.8} parent=27 // pred_region
              loop: start=0, step=1, limit=1
              $region33: #{dbcnn_forward.8} parent=31 // loop_pre_header
                _
              $region34: #{dbcnn_forward.8} parent=31 // loop_header
                %s155 = sphi 0, %s159
                %p156 = scmp.ge.s32.totalorder %s155, 1
                %s160 = sphi %s149, %s149
                %s161 = sphi %s144, %s144
              $region35: #{dbcnn_forward.8} parent=31 // loop_header_branch
                %158 = sbr.rel (%p156) target = $region39
              $region36: #{dbcnn_forward.8} parent=31 // loop_body
                %v162 = vld [vmem:[%s160] sm:$0xff]
                %163 = vst [vmem:[%s161] sm:$0xff] %v162
                %v164 = vld [vmem:[%s160 + $0x8] sm:$0xff]
                %165 = vst [vmem:[%s161 + $0x8] sm:$0xff] %v164
                %v166 = vld [vmem:[%s160 + $0x10] sm:$0xff]
                %167 = vst [vmem:[%s161 + $0x10] sm:$0xff] %v166
                %v168 = vld [vmem:[%s160 + $0x18] sm:$0xff]
                %169 = vst [vmem:[%s161 + $0x18] sm:$0xff] %v168
                %v170 = vld [vmem:[%s160 + $0x20] sm:$0xff]
                %171 = vst [vmem:[%s161 + $0x20] sm:$0xff] %v170
                %v172 = vld [vmem:[%s160 + $0x28] sm:$0xff]
                %173 = vst [vmem:[%s161 + $0x28] sm:$0xff] %v172
                %v174 = vld [vmem:[%s160 + $0x30] sm:$0xff]
                %175 = vst [vmem:[%s161 + $0x30] sm:$0xff] %v174
                %v176 = vld [vmem:[%s160 + $0x38] sm:$0xff]
                %177 = vst [vmem:[%s161 + $0x38] sm:$0xff] %v176
                %v178 = vld [vmem:[%s160 + $0x100] sm:$0xff]
                %179 = vst [vmem:[%s161 + $0x40] sm:$0xff] %v178
                %v180 = vld [vmem:[%s160 + $0x108] sm:$0xff]
                %181 = vst [vmem:[%s161 + $0x48] sm:$0xff] %v180
                %v182 = vld [vmem:[%s160 + $0x110] sm:$0xff]
                %183 = vst [vmem:[%s161 + $0x50] sm:$0xff] %v182
                %v184 = vld [vmem:[%s160 + $0x118] sm:$0xff]
                %185 = vst [vmem:[%s161 + $0x58] sm:$0xff] %v184
                %v186 = vld [vmem:[%s160 + $0x120] sm:$0xff]
                %187 = vst [vmem:[%s161 + $0x60] sm:$0xff] %v186
                %v188 = vld [vmem:[%s160 + $0x128] sm:$0xff]
                %189 = vst [vmem:[%s161 + $0x68] sm:$0xff] %v188
                %v190 = vld [vmem:[%s160 + $0x130] sm:$0xff]
                %191 = vst [vmem:[%s161 + $0x70] sm:$0xff] %v190
                %v192 = vld [vmem:[%s160 + $0x138] sm:$0xff]
                %193 = vst [vmem:[%s161 + $0x78] sm:$0xff] %v192
                %v194 = vld [vmem:[%s160 + $0x200] sm:$0xff]
                %195 = vst [vmem:[%s161 + $0x80] sm:$0xff] %v194
                %v196 = vld [vmem:[%s160 + $0x208] sm:$0xff]
                %197 = vst [vmem:[%s161 + $0x88] sm:$0xff] %v196
                %v198 = vld [vmem:[%s160 + $0x210] sm:$0xff]
                %199 = vst [vmem:[%s161 + $0x90] sm:$0xff] %v198
                %v200 = vld [vmem:[%s160 + $0x218] sm:$0xff]
                %201 = vst [vmem:[%s161 + $0x98] sm:$0xff] %v200
                %v202 = vld [vmem:[%s160 + $0x220] sm:$0xff]
                %203 = vst [vmem:[%s161 + $0xa0] sm:$0xff] %v202
                %v204 = vld [vmem:[%s160 + $0x228] sm:$0xff]
                %205 = vst [vmem:[%s161 + $0xa8] sm:$0xff] %v204
                %v206 = vld [vmem:[%s160 + $0x230] sm:$0xff]
                %207 = vst [vmem:[%s161 + $0xb0] sm:$0xff] %v206
                %v208 = vld [vmem:[%s160 + $0x238] sm:$0xff]
                %209 = vst [vmem:[%s161 + $0xb8] sm:$0xff] %v208
                %v210 = vld [vmem:[%s160 + $0x300] sm:$0xff]
                %211 = vst [vmem:[%s161 + $0xc0] sm:$0xff] %v210
                %v212 = vld [vmem:[%s160 + $0x308] sm:$0xff]
                %213 = vst [vmem:[%s161 + $0xc8] sm:$0xff] %v212
                %v214 = vld [vmem:[%s160 + $0x310] sm:$0xff]
                %215 = vst [vmem:[%s161 + $0xd0] sm:$0xff] %v214
                %v216 = vld [vmem:[%s160 + $0x318] sm:$0xff]
                %217 = vst [vmem:[%s161 + $0xd8] sm:$0xff] %v216
                %v218 = vld [vmem:[%s160 + $0x320] sm:$0xff]
                %219 = vst [vmem:[%s161 + $0xe0] sm:$0xff] %v218
                %v220 = vld [vmem:[%s160 + $0x328] sm:$0xff]
                %221 = vst [vmem:[%s161 + $0xe8] sm:$0xff] %v220
                %v222 = vld [vmem:[%s160 + $0x330] sm:$0xff]
                %223 = vst [vmem:[%s161 + $0xf0] sm:$0xff] %v222
                %v224 = vld [vmem:[%s160 + $0x338] sm:$0xff]
                %225 = vst [vmem:[%s161 + $0xf8] sm:$0xff] %v224
                %v226 = vld [vmem:[%s160 + $0x400] sm:$0xff]
                %227 = vst [vmem:[%s161 + $0x100] sm:$0xff] %v226
                %v228 = vld [vmem:[%s160 + $0x408] sm:$0xff]
                %229 = vst [vmem:[%s161 + $0x108] sm:$0xff] %v228
                %v230 = vld [vmem:[%s160 + $0x410] sm:$0xff]
                %231 = vst [vmem:[%s161 + $0x110] sm:$0xff] %v230
                %v232 = vld [vmem:[%s160 + $0x418] sm:$0xff]
                %233 = vst [vmem:[%s161 + $0x118] sm:$0xff] %v232
                %v234 = vld [vmem:[%s160 + $0x420] sm:$0xff]
                %235 = vst [vmem:[%s161 + $0x120] sm:$0xff] %v234
                %v236 = vld [vmem:[%s160 + $0x428] sm:$0xff]
                %237 = vst [vmem:[%s161 + $0x128] sm:$0xff] %v236
                %v238 = vld [vmem:[%s160 + $0x430] sm:$0xff]
                %239 = vst [vmem:[%s161 + $0x130] sm:$0xff] %v238
                %v240 = vld [vmem:[%s160 + $0x438] sm:$0xff]
                %241 = vst [vmem:[%s161 + $0x138] sm:$0xff] %v240
                %v242 = vld [vmem:[%s160 + $0x500] sm:$0xff]
                %243 = vst [vmem:[%s161 + $0x140] sm:$0xff] %v242
                %v244 = vld [vmem:[%s160 + $0x508] sm:$0xff]
                %245 = vst [vmem:[%s161 + $0x148] sm:$0xff] %v244
                %v246 = vld [vmem:[%s160 + $0x510] sm:$0xff]
                %247 = vst [vmem:[%s161 + $0x150] sm:$0xff] %v246
                %v248 = vld [vmem:[%s160 + $0x518] sm:$0xff]
                %249 = vst [vmem:[%s161 + $0x158] sm:$0xff] %v248
                %v250 = vld [vmem:[%s160 + $0x520] sm:$0xff]
                %251 = vst [vmem:[%s161 + $0x160] sm:$0xff] %v250
                %v252 = vld [vmem:[%s160 + $0x528] sm:$0xff]
                %253 = vst [vmem:[%s161 + $0x168] sm:$0xff] %v252
                %v254 = vld [vmem:[%s160 + $0x530] sm:$0xff]
                %255 = vst [vmem:[%s161 + $0x170] sm:$0xff] %v254
                %v256 = vld [vmem:[%s160 + $0x538] sm:$0xff]
                %257 = vst [vmem:[%s161 + $0x178] sm:$0xff] %v256
                %v258 = vld [vmem:[%s160 + $0x600] sm:$0xff]
                %259 = vst [vmem:[%s161 + $0x180] sm:$0xff] %v258
                %v260 = vld [vmem:[%s160 + $0x608] sm:$0xff]
                %261 = vst [vmem:[%s161 + $0x188] sm:$0xff] %v260
                %v262 = vld [vmem:[%s160 + $0x610] sm:$0xff]
                %263 = vst [vmem:[%s161 + $0x190] sm:$0xff] %v262
                %v264 = vld [vmem:[%s160 + $0x618] sm:$0xff]
                %265 = vst [vmem:[%s161 + $0x198] sm:$0xff] %v264
                %v266 = vld [vmem:[%s160 + $0x620] sm:$0xff]
                %267 = vst [vmem:[%s161 + $0x1a0] sm:$0xff] %v266
                %v268 = vld [vmem:[%s160 + $0x628] sm:$0xff]
                %269 = vst [vmem:[%s161 + $0x1a8] sm:$0xff] %v268
                %v270 = vld [vmem:[%s160 + $0x630] sm:$0xff]
                %271 = vst [vmem:[%s161 + $0x1b0] sm:$0xff] %v270
                %v272 = vld [vmem:[%s160 + $0x638] sm:$0xff]
                %273 = vst [vmem:[%s161 + $0x1b8] sm:$0xff] %v272
                %v274 = vld [vmem:[%s160 + $0x700] sm:$0xff]
                %275 = vst [vmem:[%s161 + $0x1c0] sm:$0xff] %v274
                %v276 = vld [vmem:[%s160 + $0x708] sm:$0xff]
                %277 = vst [vmem:[%s161 + $0x1c8] sm:$0xff] %v276
                %v278 = vld [vmem:[%s160 + $0x710] sm:$0xff]
                %279 = vst [vmem:[%s161 + $0x1d0] sm:$0xff] %v278
                %v280 = vld [vmem:[%s160 + $0x718] sm:$0xff]
                %281 = vst [vmem:[%s161 + $0x1d8] sm:$0xff] %v280
                %v282 = vld [vmem:[%s160 + $0x720] sm:$0xff]
                %283 = vst [vmem:[%s161 + $0x1e0] sm:$0xff] %v282
                %v284 = vld [vmem:[%s160 + $0x728] sm:$0xff]
                %285 = vst [vmem:[%s161 + $0x1e8] sm:$0xff] %v284
                %v286 = vld [vmem:[%s160 + $0x730] sm:$0xff]
                %287 = vst [vmem:[%s161 + $0x1f0] sm:$0xff] %v286
                %v288 = vld [vmem:[%s160 + $0x738] sm:$0xff]
                %289 = vst [vmem:[%s161 + $0x1f8] sm:$0xff] %v288
                %v290 = vld [vmem:[%s160 + $0x800] sm:$0xff]
                %291 = vst [vmem:[%s161 + $0x200] sm:$0xff] %v290
                %v292 = vld [vmem:[%s160 + $0x808] sm:$0xff]
                %293 = vst [vmem:[%s161 + $0x208] sm:$0xff] %v292
                %v294 = vld [vmem:[%s160 + $0x810] sm:$0xff]
                %295 = vst [vmem:[%s161 + $0x210] sm:$0xff] %v294
                %v296 = vld [vmem:[%s160 + $0x818] sm:$0xff]
                %297 = vst [vmem:[%s161 + $0x218] sm:$0xff] %v296
                %v298 = vld [vmem:[%s160 + $0x820] sm:$0xff]
                %299 = vst [vmem:[%s161 + $0x220] sm:$0xff] %v298
                %v300 = vld [vmem:[%s160 + $0x828] sm:$0xff]
                %301 = vst [vmem:[%s161 + $0x228] sm:$0xff] %v300
                %v302 = vld [vmem:[%s160 + $0x830] sm:$0xff]
                %303 = vst [vmem:[%s161 + $0x230] sm:$0xff] %v302
                %v304 = vld [vmem:[%s160 + $0x838] sm:$0xff]
                %305 = vst [vmem:[%s161 + $0x238] sm:$0xff] %v304
                %v306 = vld [vmem:[%s160 + $0x900] sm:$0xff]
                %307 = vst [vmem:[%s161 + $0x240] sm:$0xff] %v306
                %v308 = vld [vmem:[%s160 + $0x908] sm:$0xff]
                %309 = vst [vmem:[%s161 + $0x248] sm:$0xff] %v308
                %v310 = vld [vmem:[%s160 + $0x910] sm:$0xff]
                %311 = vst [vmem:[%s161 + $0x250] sm:$0xff] %v310
                %v312 = vld [vmem:[%s160 + $0x918] sm:$0xff]
                %313 = vst [vmem:[%s161 + $0x258] sm:$0xff] %v312
                %v314 = vld [vmem:[%s160 + $0x920] sm:$0xff]
                %315 = vst [vmem:[%s161 + $0x260] sm:$0xff] %v314
                %v316 = vld [vmem:[%s160 + $0x928] sm:$0xff]
                %317 = vst [vmem:[%s161 + $0x268] sm:$0xff] %v316
                %v318 = vld [vmem:[%s160 + $0x930] sm:$0xff]
                %319 = vst [vmem:[%s161 + $0x270] sm:$0xff] %v318
                %v320 = vld [vmem:[%s160 + $0x938] sm:$0xff]
                %321 = vst [vmem:[%s161 + $0x278] sm:$0xff] %v320
              $region37: #{dbcnn_forward.8} parent=31 // loop_footer
                %s159 = sadd.s32 1, %s155
              $region38: #{dbcnn_forward.8} parent=31 // loop_footer_branch
                %154 = sbr.rel target = $region34
              $region39: #{dbcnn_forward.8} parent=31 // loop_exit
                _
            $region32: #{dbcnn_forward.8} parent=27 // pred_fallthru
              _
            // Predicated region
            $region40: #{dbcnn_forward.8} parent=27 // pred_check
              _
            $region41: #{dbcnn_forward.8} parent=27 // pred_check_branch
              %323 = sbr.rel target = $region43
            $region42: #{dbcnn_forward.8} parent=27 // pred_region
              _
            $region43: #{dbcnn_forward.8} parent=27 // pred_fallthru
              _
          $region28: #{dbcnn_forward.8} parent=23 // pred_fallthru
            _
          %324 = vnop
        $region24: #{dbcnn_forward.8} parent=15 // pred_fallthru
          _
      $region16: #{dbcnn_forward.8} parent=5 // pred_fallthru
        _
      %p325 = scmp.le.s32.totalorder 1, %s8
      %p326 = scmp.lt.s32.totalorder %s8, 5
      %p327 = pnand %p325, %p326
      %p328 = pneg %p327
      // Predicated region
      $region44: #{dbcnn_forward.8} parent=5 // pred_check
        _
      $region45: #{dbcnn_forward.8} parent=5 // pred_check_branch
        %330 = sbr.rel (%p327) target = $region47
      $region46: #{dbcnn_forward.8} parent=5 // pred_region
        %s331 = ssub.s32 %s8, 1
        %s332 = sand.u32 %s67, 1
        %s333 = sand.u32 %s67, 1
        %s334 = smul.addr %s333, 640
        %s335 = scalar_lea.vmem [#allocation3], %s334
        // Predicated region
        $region48: #{dbcnn_forward.8} parent=46 // pred_check
          %p336 = pneg %p80
        $region49: #{dbcnn_forward.8} parent=46 // pred_check_branch
          %338 = sbr.rel (%p336) target = $region51
        $region50: #{dbcnn_forward.8} parent=46 // pred_region
          _
        $region51: #{dbcnn_forward.8} parent=46 // pred_fallthru
          _
        %s339 = smul.u32 %s17, 2
        %s340 = sadd.s32 %s339, %s18
        %s341 = smul.u32 16, %s340
        %p342 = scmp.lt.s32.totalorder %s341, 63
        %s343 = scalar_select %p342, %s341, 63
        %s344 = smul.addr %s343, 2
        %s345 = scalar_lea.vmem %s0, %s344
        %p346 = pneg %p50
        %p347 = pneg %p47
        %s348 = sand.u32 %s67, 1
        %s349 = sand.u32 %s67, 1
        %s350 = smul.addr %s349, 640
        %s351 = scalar_lea.vmem [#allocation3], %s350
        %p352 = pneg %p80
        %p353 = pneg %p77
        %p354 = pneg %p106
        %p355 = pneg %p103
        %p356 = scmp.lt.s32.totalorder %s17, 1
        %s357 = scalar_select %p356, %s17, 1
        %s358 = smul.addr %s357, 2
        %s359 = scalar_lea.vmem %s2, %s358
        %s360 = smul.u32 %s17, 2
        %s361 = sadd.s32 %s360, %s18
        %s362 = smul.u32 16, %s361
        %p363 = scmp.lt.s32.totalorder %s362, 63
        %s364 = scalar_select %p363, %s362, 63
        %s365 = smul.addr %s364, 2
        %s366 = scalar_lea.vmem %s0, %s365
        %s367 = smul.u32 %s17, 2
        %s368 = sadd.s32 %s367, %s18
        %s369 = smul.u32 16, %s368
        %s370 = smul.u32 %s17, 2
        %s371 = sadd.s32 %s370, %s18
        %s372 = smul.u32 16, %s371
        %p373 = scmp.lt.s32.totalorder %s17, 1
        %s374 = scalar_select %p373, %s17, 1
        %s375 = smul.addr %s374, 2
        %s376 = scalar_lea.vmem %s2, %s375
        %p378 = scmp.eq.s32.totalorder %s18, 0
        // Predicated region
        $region52: #{dbcnn_forward.8} parent=46 // pred_check
          %p379 = pneg %p378
        $region53: #{dbcnn_forward.8} parent=46 // pred_check_branch
          %381 = sbr.rel (%p379) target = $region55
        $region54: #{dbcnn_forward.8} parent=46 // pred_region
          %vm382 = vcmask 123904
          %383 = vst.msk [vmem:[#allocation2] sm:$0x3] %vm382, 0.0
        $region55: #{dbcnn_forward.8} parent=46 // pred_fallthru
          _
        %v384 = vld [vmem:[%s366] sm:$0xff]
        %v385 = vld [vmem:[%s366 + $0x8] sm:$0xff]
        %v386 = vld [vmem:[%s366 + $0x10] sm:$0xff]
        %v387 = vld [vmem:[%s366 + $0x18] sm:$0xff]
        %v388 = vld [vmem:[#allocation2] sm:$0x3]
        %v389 = vsub.f32 %v384, -0.05
        %v390 = vsub.f32 %v385, -0.05
        %v391 = vsub.f32 %v386, -0.05
        %v392 = vsub.f32 %v387, -0.05
        %v393 = vmul.f32 %v389, %v389
        %v394 = vmul.f32 %v390, %v390
        %v395 = vmul.f32 %v391, %v391
        %v396 = vmul.f32 %v392, %v392
        %v397 = vmul.f32 %v393, -800.0
        %v398 = vmul.f32 %v394, -800.0
        %v399 = vmul.f32 %v395, -800.0
        %v400 = vmul.f32 %v396, -800.0
        %v401 = vmul.f32 %v397, 1.442695
        %v402 = vpow.pop %v401
        %v403 = vmul.f32 %v398, 1.442695
        %v404 = vpow.pop %v403
        %v405 = vmul.f32 %v399, 1.442695
        %v406 = vpow.pop %v405
        %v407 = vmul.f32 %v400, 1.442695
        %v408 = vpow.pop %v407
        %v413 = vcombine.high %v402, %v402
        %v415 = vunpack.c.l.s4 1983009808
        %v416 = vunpack.c.0.s8 %v415
        %v417 = vlaneseq
        %v418 = vshrl.u32 %v417, 7
        %v419 = vsub.s32 %v416, %v418
        %v420 = vrot.slane %v402, %v419
        %v422 = vunpack.c.l.s4 1983009808
        %v423 = vunpack.c.0.s8 %v422
        %v424 = vlaneseq
        %v425 = vshrl.u32 %v424, 7
        %v426 = vsub.s32 %v423, %v425
        %v427 = vrot.slane %v413, %v426
        %v428 = vcombine.high %v420, %v420
        %v429 = vcombine.high %v427, %v427
        %v430 = vcombine.high %v404, %v404
        %v432 = vunpack.c.l.s4 1983009808
        %v433 = vunpack.c.0.s8 %v432
        %v434 = vlaneseq
        %v435 = vshrl.u32 %v434, 7
        %v436 = vsub.s32 %v433, %v435
        %v437 = vrot.slane %v404, %v436
        %v439 = vunpack.c.l.s4 1983009808
        %v440 = vunpack.c.0.s8 %v439
        %v441 = vlaneseq
        %v442 = vshrl.u32 %v441, 7
        %v443 = vsub.s32 %v440, %v442
        %v444 = vrot.slane %v430, %v443
        %v445 = vcombine.high %v437, %v437
        %v446 = vcombine.high %v444, %v444
        %v447 = vcombine.high %v406, %v406
        %v449 = vunpack.c.l.s4 1983009808
        %v450 = vunpack.c.0.s8 %v449
        %v451 = vlaneseq
        %v452 = vshrl.u32 %v451, 7
        %v453 = vsub.s32 %v450, %v452
        %v454 = vrot.slane %v406, %v453
        %v456 = vunpack.c.l.s4 1983009808
        %v457 = vunpack.c.0.s8 %v456
        %v458 = vlaneseq
        %v459 = vshrl.u32 %v458, 7
        %v460 = vsub.s32 %v457, %v459
        %v461 = vrot.slane %v447, %v460
        %v462 = vcombine.high %v454, %v454
        %v463 = vcombine.high %v461, %v461
        %v464 = vcombine.high %v408, %v408
        %v466 = vunpack.c.l.s4 1983009808
        %v467 = vunpack.c.0.s8 %v466
        %v468 = vlaneseq
        %v469 = vshrl.u32 %v468, 7
        %v470 = vsub.s32 %v467, %v469
        %v471 = vrot.slane %v408, %v470
        %v473 = vunpack.c.l.s4 1983009808
        %v474 = vunpack.c.0.s8 %v473
        %v475 = vlaneseq
        %v476 = vshrl.u32 %v475, 7
        %v477 = vsub.s32 %v474, %v476
        %v478 = vrot.slane %v464, %v477
        %v479 = vcombine.high %v471, %v471
        %v480 = vcombine.high %v478, %v478
        %v497 = vpack.c.bf16 %v420, %v420
        %v498 = vpack.c.bf16 %v428, %v428
        %v499 = vpack.c.bf16 %v427, %v427
        %v500 = vpack.c.bf16 %v429, %v429
        %v501 = vpack.c.bf16 %v437, %v437
        %v502 = vpack.c.bf16 %v445, %v445
        %v503 = vpack.c.bf16 %v444, %v444
        %v504 = vpack.c.bf16 %v446, %v446
        %v505 = vpack.c.bf16 %v454, %v454
        %v506 = vpack.c.bf16 %v462, %v462
        %v507 = vpack.c.bf16 %v461, %v461
        %v508 = vpack.c.bf16 %v463, %v463
        %v509 = vpack.c.bf16 %v471, %v471
        %v510 = vpack.c.bf16 %v479, %v479
        %v511 = vpack.c.bf16 %v478, %v478
        %v512 = vpack.c.bf16 %v480, %v480
        %v513 = vld [vmem:[%s335] sm:$0xff]
        %v514 = vld [vmem:[%s335 + $0x8] sm:$0xff]
        %v515 = vld [vmem:[%s335 + $0x10] sm:$0xff]
        %v516 = vld [vmem:[%s335 + $0x18] sm:$0xff]
        %v517 = vld [vmem:[%s335 + $0x20] sm:$0xff]
        %v518 = vld [vmem:[%s335 + $0x28] sm:$0xff]
        %v519 = vld [vmem:[%s335 + $0x30] sm:$0xff]
        %v520 = vld [vmem:[%s335 + $0x38] sm:$0xff]
        %v521 = vld [vmem:[%s335 + $0x40] sm:$0xff]
        %v522 = vld [vmem:[%s335 + $0x48] sm:$0xff]
        %v523 = vld [vmem:[%s335 + $0x50] sm:$0xff]
        %v524 = vld [vmem:[%s335 + $0x58] sm:$0xff]
        %v525 = vld [vmem:[%s335 + $0x60] sm:$0xff]
        %v526 = vld [vmem:[%s335 + $0x68] sm:$0xff]
        %v527 = vld [vmem:[%s335 + $0x70] sm:$0xff]
        %v528 = vld [vmem:[%s335 + $0x78] sm:$0xff]
        %v545 = vunpack.c.l.b16 %v513
        %v546 = vunpack.c.h.b16 %v513
        %v547 = vunpack.c.l.b16 %v514
        %v548 = vunpack.c.h.b16 %v514
        %v549 = vunpack.c.l.b16 %v515
        %v550 = vunpack.c.h.b16 %v515
        %v551 = vunpack.c.l.b16 %v516
        %v552 = vunpack.c.h.b16 %v516
        %v553 = vunpack.c.l.b16 %v517
        %v554 = vunpack.c.h.b16 %v517
        %v555 = vunpack.c.l.b16 %v518
        %v556 = vunpack.c.h.b16 %v518
        %v557 = vunpack.c.l.b16 %v519
        %v558 = vunpack.c.h.b16 %v519
        %v559 = vunpack.c.l.b16 %v520
        %v560 = vunpack.c.h.b16 %v520
        %v561 = vunpack.c.l.b16 %v521
        %v562 = vunpack.c.h.b16 %v521
        %v563 = vunpack.c.l.b16 %v522
        %v564 = vunpack.c.h.b16 %v522
        %v565 = vunpack.c.l.b16 %v523
        %v566 = vunpack.c.h.b16 %v523
        %v567 = vunpack.c.l.b16 %v524
        %v568 = vunpack.c.h.b16 %v524
        %v569 = vunpack.c.l.b16 %v525
        %v570 = vunpack.c.h.b16 %v525
        %v571 = vunpack.c.l.b16 %v526
        %v572 = vunpack.c.h.b16 %v526
        %v573 = vunpack.c.l.b16 %v527
        %v574 = vunpack.c.h.b16 %v527
        %v575 = vunpack.c.l.b16 %v528
        %v576 = vunpack.c.h.b16 %v528
        %v577 = vpack.c.b16 %v561, %v545
        %v578 = vpack.c.b16 %v562, %v546
        %v579 = vpack.c.b16 %v563, %v547
        %v580 = vpack.c.b16 %v564, %v548
        %v581 = vpack.c.b16 %v565, %v549
        %v582 = vpack.c.b16 %v566, %v550
        %v583 = vpack.c.b16 %v567, %v551
        %v584 = vpack.c.b16 %v568, %v552
        %v585 = vpack.c.b16 %v569, %v553
        %v586 = vpack.c.b16 %v570, %v554
        %v587 = vpack.c.b16 %v571, %v555
        %v588 = vpack.c.b16 %v572, %v556
        %v589 = vpack.c.b16 %v573, %v557
        %v590 = vpack.c.b16 %v574, %v558
        %v591 = vpack.c.b16 %v575, %v559
        %v592 = vpack.c.b16 %v576, %v560
        %609 = vmatprep.subr.bf16.mxu0 %v578
        %610 = vmatpush1.bf16.xpose.msra.mxu0 %v577
        %611 = vmatprep.subr.bf16.mxu0 0
        %612 = vmatpush1.bf16.xpose.msra.mxu0 0
        %613 = vmatprep.subr.bf16.mxu0 0
        %614 = vmatpush1.bf16.xpose.msra.mxu0 0
        %615 = vmatprep.subr.bf16.mxu0 0
        %616 = vmatpush1.bf16.xpose.msra.mxu0 0
        %617 = vmatprep.subr.bf16.mxu0 0
        %618 = vmatpush1.bf16.xpose.msra.mxu0 0
        %619 = vmatprep.subr.bf16.mxu0 0
        %620 = vmatpush1.bf16.xpose.msra.mxu0 0
        %621 = vmatprep.subr.bf16.mxu0 0
        %622 = vmatpush1.bf16.xpose.msra.mxu0 0
        %623 = vmatprep.subr.bf16.mxu0 0
        %624 = vmatpush1.bf16.xpose.msra.mxu0 0
        %625 = vmatprep.subr.bf16.mxu0 0
        %626 = vmatpush1.bf16.xpose.msra.mxu0 0
        %627 = vmatprep.subr.bf16.mxu0 0
        %628 = vmatpush1.bf16.xpose.msra.mxu0 0
        %629 = vmatprep.subr.bf16.mxu0 0
        %630 = vmatpush1.bf16.xpose.msra.mxu0 0
        %631 = vmatprep.subr.bf16.mxu0 0
        %632 = vmatpush1.bf16.xpose.msra.mxu0 0
        %633 = vmatprep.subr.bf16.mxu0 0
        %634 = vmatpush1.bf16.xpose.msra.mxu0 0
        %635 = vmatprep.subr.bf16.mxu0 0
        %636 = vmatpush1.bf16.xpose.msra.mxu0 0
        %637 = vmatprep.subr.bf16.mxu0 0
        %638 = vmatpush1.bf16.xpose.msra.mxu0 0
        %639 = vmatprep.subr.bf16.mxu0 0
        %640 = vmatpush1.bf16.xpose.msra.mxu0 0
        %641 = vmatprep.mubr.bf16.mxu0 %v498
        %642 = vmatmul.mubr.bf16.gmra.mrb[0].mxu0 %v497
        %v643 = vpop.f32.mrb[0].mxu0
        %v644 = vadd.f32 0.0, %v643
        %v645 = vpop.f32.mrb[0].mxu0
        %v646 = vpop.f32.mrb[0].mxu0
        %v647 = vpop.f32.mrb[0].mxu0
        %648 = vdwg.mxu0
        %649 = vmatprep.subr.bf16.mxu0 %v580
        %650 = vmatpush1.bf16.xpose.msra.mxu0 %v579
        %651 = vmatprep.subr.bf16.mxu0 0
        %652 = vmatpush1.bf16.xpose.msra.mxu0 0
        %653 = vmatprep.subr.bf16.mxu0 0
        %654 = vmatpush1.bf16.xpose.msra.mxu0 0
        %655 = vmatprep.subr.bf16.mxu0 0
        %656 = vmatpush1.bf16.xpose.msra.mxu0 0
        %657 = vmatprep.subr.bf16.mxu0 0
        %658 = vmatpush1.bf16.xpose.msra.mxu0 0
        %659 = vmatprep.subr.bf16.mxu0 0
        %660 = vmatpush1.bf16.xpose.msra.mxu0 0
        %661 = vmatprep.subr.bf16.mxu0 0
        %662 = vmatpush1.bf16.xpose.msra.mxu0 0
        %663 = vmatprep.subr.bf16.mxu0 0
        %664 = vmatpush1.bf16.xpose.msra.mxu0 0
        %665 = vmatprep.subr.bf16.mxu0 0
        %666 = vmatpush1.bf16.xpose.msra.mxu0 0
        %667 = vmatprep.subr.bf16.mxu0 0
        %668 = vmatpush1.bf16.xpose.msra.mxu0 0
        %669 = vmatprep.subr.bf16.mxu0 0
        %670 = vmatpush1.bf16.xpose.msra.mxu0 0
        %671 = vmatprep.subr.bf16.mxu0 0
        %672 = vmatpush1.bf16.xpose.msra.mxu0 0
        %673 = vmatprep.subr.bf16.mxu0 0
        %674 = vmatpush1.bf16.xpose.msra.mxu0 0
        %675 = vmatprep.subr.bf16.mxu0 0
        %676 = vmatpush1.bf16.xpose.msra.mxu0 0
        %677 = vmatprep.subr.bf16.mxu0 0
        %678 = vmatpush1.bf16.xpose.msra.mxu0 0
        %679 = vmatprep.subr.bf16.mxu0 0
        %680 = vmatpush1.bf16.xpose.msra.mxu0 0
        %681 = vmatprep.mubr.bf16.mxu0 %v500
        %682 = vmatmul.mubr.bf16.gmra.mrb[0].mxu0 %v499
        %v683 = vpop.f32.mrb[0].mxu0
        %v684 = vadd.f32 %v644, %v683
        %v685 = vpop.f32.mrb[0].mxu0
        %v686 = vpop.f32.mrb[0].mxu0
        %v687 = vpop.f32.mrb[0].mxu0
        %688 = vdwg.mxu0
        %689 = vmatprep.subr.bf16.mxu0 %v582
        %690 = vmatpush1.bf16.xpose.msra.mxu0 %v581
        %691 = vmatprep.subr.bf16.mxu0 0
        %692 = vmatpush1.bf16.xpose.msra.mxu0 0
        %693 = vmatprep.subr.bf16.mxu0 0
        %694 = vmatpush1.bf16.xpose.msra.mxu0 0
        %695 = vmatprep.subr.bf16.mxu0 0
        %696 = vmatpush1.bf16.xpose.msra.mxu0 0
        %697 = vmatprep.subr.bf16.mxu0 0
        %698 = vmatpush1.bf16.xpose.msra.mxu0 0
        %699 = vmatprep.subr.bf16.mxu0 0
        %700 = vmatpush1.bf16.xpose.msra.mxu0 0
        %701 = vmatprep.subr.bf16.mxu0 0
        %702 = vmatpush1.bf16.xpose.msra.mxu0 0
        %703 = vmatprep.subr.bf16.mxu0 0
        %704 = vmatpush1.bf16.xpose.msra.mxu0 0
        %705 = vmatprep.subr.bf16.mxu0 0
        %706 = vmatpush1.bf16.xpose.msra.mxu0 0
        %707 = vmatprep.subr.bf16.mxu0 0
        %708 = vmatpush1.bf16.xpose.msra.mxu0 0
        %709 = vmatprep.subr.bf16.mxu0 0
        %710 = vmatpush1.bf16.xpose.msra.mxu0 0
        %711 = vmatprep.subr.bf16.mxu0 0
        %712 = vmatpush1.bf16.xpose.msra.mxu0 0
        %713 = vmatprep.subr.bf16.mxu0 0
        %714 = vmatpush1.bf16.xpose.msra.mxu0 0
        %715 = vmatprep.subr.bf16.mxu0 0
        %716 = vmatpush1.bf16.xpose.msra.mxu0 0
        %717 = vmatprep.subr.bf16.mxu0 0
        %718 = vmatpush1.bf16.xpose.msra.mxu0 0
        %719 = vmatprep.subr.bf16.mxu0 0
        %720 = vmatpush1.bf16.xpose.msra.mxu0 0
        %721 = vmatprep.mubr.bf16.mxu0 %v502
        %722 = vmatmul.mubr.bf16.gmra.mrb[0].mxu0 %v501
        %v723 = vpop.f32.mrb[0].mxu0
        %v724 = vadd.f32 %v684, %v723
        %v725 = vpop.f32.mrb[0].mxu0
        %v726 = vpop.f32.mrb[0].mxu0
        %v727 = vpop.f32.mrb[0].mxu0
        %728 = vdwg.mxu0
        %729 = vmatprep.subr.bf16.mxu0 %v584
        %730 = vmatpush1.bf16.xpose.msra.mxu0 %v583
        %731 = vmatprep.subr.bf16.mxu0 0
        %732 = vmatpush1.bf16.xpose.msra.mxu0 0
        %733 = vmatprep.subr.bf16.mxu0 0
        %734 = vmatpush1.bf16.xpose.msra.mxu0 0
        %735 = vmatprep.subr.bf16.mxu0 0
        %736 = vmatpush1.bf16.xpose.msra.mxu0 0
        %737 = vmatprep.subr.bf16.mxu0 0
        %738 = vmatpush1.bf16.xpose.msra.mxu0 0
        %739 = vmatprep.subr.bf16.mxu0 0
        %740 = vmatpush1.bf16.xpose.msra.mxu0 0
        %741 = vmatprep.subr.bf16.mxu0 0
        %742 = vmatpush1.bf16.xpose.msra.mxu0 0
        %743 = vmatprep.subr.bf16.mxu0 0
        %744 = vmatpush1.bf16.xpose.msra.mxu0 0
        %745 = vmatprep.subr.bf16.mxu0 0
        %746 = vmatpush1.bf16.xpose.msra.mxu0 0
        %747 = vmatprep.subr.bf16.mxu0 0
        %748 = vmatpush1.bf16.xpose.msra.mxu0 0
        %749 = vmatprep.subr.bf16.mxu0 0
        %750 = vmatpush1.bf16.xpose.msra.mxu0 0
        %751 = vmatprep.subr.bf16.mxu0 0
        %752 = vmatpush1.bf16.xpose.msra.mxu0 0
        %753 = vmatprep.subr.bf16.mxu0 0
        %754 = vmatpush1.bf16.xpose.msra.mxu0 0
        %755 = vmatprep.subr.bf16.mxu0 0
        %756 = vmatpush1.bf16.xpose.msra.mxu0 0
        %757 = vmatprep.subr.bf16.mxu0 0
        %758 = vmatpush1.bf16.xpose.msra.mxu0 0
        %759 = vmatprep.subr.bf16.mxu0 0
        %760 = vmatpush1.bf16.xpose.msra.mxu0 0
        %761 = vmatprep.mubr.bf16.mxu0 %v504
        %762 = vmatmul.mubr.bf16.gmra.mrb[0].mxu0 %v503
        %v763 = vpop.f32.mrb[0].mxu0
        %v764 = vadd.f32 %v724, %v763
        %v765 = vpop.f32.mrb[0].mxu0
        %v766 = vpop.f32.mrb[0].mxu0
        %v767 = vpop.f32.mrb[0].mxu0
        %768 = vdwg.mxu0
        %769 = vmatprep.subr.bf16.mxu0 %v586
        %770 = vmatpush1.bf16.xpose.msra.mxu0 %v585
        %771 = vmatprep.subr.bf16.mxu0 0
        %772 = vmatpush1.bf16.xpose.msra.mxu0 0
        %773 = vmatprep.subr.bf16.mxu0 0
        %774 = vmatpush1.bf16.xpose.msra.mxu0 0
        %775 = vmatprep.subr.bf16.mxu0 0
        %776 = vmatpush1.bf16.xpose.msra.mxu0 0
        %777 = vmatprep.subr.bf16.mxu0 0
        %778 = vmatpush1.bf16.xpose.msra.mxu0 0
        %779 = vmatprep.subr.bf16.mxu0 0
        %780 = vmatpush1.bf16.xpose.msra.mxu0 0
        %781 = vmatprep.subr.bf16.mxu0 0
        %782 = vmatpush1.bf16.xpose.msra.mxu0 0
        %783 = vmatprep.subr.bf16.mxu0 0
        %784 = vmatpush1.bf16.xpose.msra.mxu0 0
        %785 = vmatprep.subr.bf16.mxu0 0
        %786 = vmatpush1.bf16.xpose.msra.mxu0 0
        %787 = vmatprep.subr.bf16.mxu0 0
        %788 = vmatpush1.bf16.xpose.msra.mxu0 0
        %789 = vmatprep.subr.bf16.mxu0 0
        %790 = vmatpush1.bf16.xpose.msra.mxu0 0
        %791 = vmatprep.subr.bf16.mxu0 0
        %792 = vmatpush1.bf16.xpose.msra.mxu0 0
        %793 = vmatprep.subr.bf16.mxu0 0
        %794 = vmatpush1.bf16.xpose.msra.mxu0 0
        %795 = vmatprep.subr.bf16.mxu0 0
        %796 = vmatpush1.bf16.xpose.msra.mxu0 0
        %797 = vmatprep.subr.bf16.mxu0 0
        %798 = vmatpush1.bf16.xpose.msra.mxu0 0
        %799 = vmatprep.subr.bf16.mxu0 0
        %800 = vmatpush1.bf16.xpose.msra.mxu0 0
        %801 = vmatprep.mubr.bf16.mxu0 %v506
        %802 = vmatmul.mubr.bf16.gmra.mrb[0].mxu0 %v505
        %v803 = vpop.f32.mrb[0].mxu0
        %v804 = vadd.f32 %v764, %v803
        %v805 = vpop.f32.mrb[0].mxu0
        %v806 = vpop.f32.mrb[0].mxu0
        %v807 = vpop.f32.mrb[0].mxu0
        %808 = vdwg.mxu0
        %809 = vmatprep.subr.bf16.mxu0 %v588
        %810 = vmatpush1.bf16.xpose.msra.mxu0 %v587
        %811 = vmatprep.subr.bf16.mxu0 0
        %812 = vmatpush1.bf16.xpose.msra.mxu0 0
        %813 = vmatprep.subr.bf16.mxu0 0
        %814 = vmatpush1.bf16.xpose.msra.mxu0 0
        %815 = vmatprep.subr.bf16.mxu0 0
        %816 = vmatpush1.bf16.xpose.msra.mxu0 0
        %817 = vmatprep.subr.bf16.mxu0 0
        %818 = vmatpush1.bf16.xpose.msra.mxu0 0
        %819 = vmatprep.subr.bf16.mxu0 0
        %820 = vmatpush1.bf16.xpose.msra.mxu0 0
        %821 = vmatprep.subr.bf16.mxu0 0
        %822 = vmatpush1.bf16.xpose.msra.mxu0 0
        %823 = vmatprep.subr.bf16.mxu0 0
        %824 = vmatpush1.bf16.xpose.msra.mxu0 0
        %825 = vmatprep.subr.bf16.mxu0 0
        %826 = vmatpush1.bf16.xpose.msra.mxu0 0
        %827 = vmatprep.subr.bf16.mxu0 0
        %828 = vmatpush1.bf16.xpose.msra.mxu0 0
        %829 = vmatprep.subr.bf16.mxu0 0
        %830 = vmatpush1.bf16.xpose.msra.mxu0 0
        %831 = vmatprep.subr.bf16.mxu0 0
        %832 = vmatpush1.bf16.xpose.msra.mxu0 0
        %833 = vmatprep.subr.bf16.mxu0 0
        %834 = vmatpush1.bf16.xpose.msra.mxu0 0
        %835 = vmatprep.subr.bf16.mxu0 0
        %836 = vmatpush1.bf16.xpose.msra.mxu0 0
        %837 = vmatprep.subr.bf16.mxu0 0
        %838 = vmatpush1.bf16.xpose.msra.mxu0 0
        %839 = vmatprep.subr.bf16.mxu0 0
        %840 = vmatpush1.bf16.xpose.msra.mxu0 0
        %841 = vmatprep.mubr.bf16.mxu0 %v508
        %842 = vmatmul.mubr.bf16.gmra.mrb[0].mxu0 %v507
        %v843 = vpop.f32.mrb[0].mxu0
        %v844 = vadd.f32 %v804, %v843
        %v845 = vpop.f32.mrb[0].mxu0
        %v846 = vpop.f32.mrb[0].mxu0
        %v847 = vpop.f32.mrb[0].mxu0
        %848 = vdwg.mxu0
        %849 = vmatprep.subr.bf16.mxu0 %v590
        %850 = vmatpush1.bf16.xpose.msra.mxu0 %v589
        %851 = vmatprep.subr.bf16.mxu0 0
        %852 = vmatpush1.bf16.xpose.msra.mxu0 0
        %853 = vmatprep.subr.bf16.mxu0 0
        %854 = vmatpush1.bf16.xpose.msra.mxu0 0
        %855 = vmatprep.subr.bf16.mxu0 0
        %856 = vmatpush1.bf16.xpose.msra.mxu0 0
        %857 = vmatprep.subr.bf16.mxu0 0
        %858 = vmatpush1.bf16.xpose.msra.mxu0 0
        %859 = vmatprep.subr.bf16.mxu0 0
        %860 = vmatpush1.bf16.xpose.msra.mxu0 0
        %861 = vmatprep.subr.bf16.mxu0 0
        %862 = vmatpush1.bf16.xpose.msra.mxu0 0
        %863 = vmatprep.subr.bf16.mxu0 0
        %864 = vmatpush1.bf16.xpose.msra.mxu0 0
        %865 = vmatprep.subr.bf16.mxu0 0
        %866 = vmatpush1.bf16.xpose.msra.mxu0 0
        %867 = vmatprep.subr.bf16.mxu0 0
        %868 = vmatpush1.bf16.xpose.msra.mxu0 0
        %869 = vmatprep.subr.bf16.mxu0 0
        %870 = vmatpush1.bf16.xpose.msra.mxu0 0
        %871 = vmatprep.subr.bf16.mxu0 0
        %872 = vmatpush1.bf16.xpose.msra.mxu0 0
        %873 = vmatprep.subr.bf16.mxu0 0
        %874 = vmatpush1.bf16.xpose.msra.mxu0 0
        %875 = vmatprep.subr.bf16.mxu0 0
        %876 = vmatpush1.bf16.xpose.msra.mxu0 0
        %877 = vmatprep.subr.bf16.mxu0 0
        %878 = vmatpush1.bf16.xpose.msra.mxu0 0
        %879 = vmatprep.subr.bf16.mxu0 0
        %880 = vmatpush1.bf16.xpose.msra.mxu0 0
        %881 = vmatprep.mubr.bf16.mxu0 %v510
        %882 = vmatmul.mubr.bf16.gmra.mrb[0].mxu0 %v509
        %v883 = vpop.f32.mrb[0].mxu0
        %v884 = vadd.f32 %v844, %v883
        %v885 = vpop.f32.mrb[0].mxu0
        %v886 = vpop.f32.mrb[0].mxu0
        %v887 = vpop.f32.mrb[0].mxu0
        %888 = vdwg.mxu0
        %889 = vmatprep.subr.bf16.mxu0 %v592
        %890 = vmatpush1.bf16.xpose.msra.mxu0 %v591
        %891 = vmatprep.subr.bf16.mxu0 0
        %892 = vmatpush1.bf16.xpose.msra.mxu0 0
        %893 = vmatprep.subr.bf16.mxu0 0
        %894 = vmatpush1.bf16.xpose.msra.mxu0 0
        %895 = vmatprep.subr.bf16.mxu0 0
        %896 = vmatpush1.bf16.xpose.msra.mxu0 0
        %897 = vmatprep.subr.bf16.mxu0 0
        %898 = vmatpush1.bf16.xpose.msra.mxu0 0
        %899 = vmatprep.subr.bf16.mxu0 0
        %900 = vmatpush1.bf16.xpose.msra.mxu0 0
        %901 = vmatprep.subr.bf16.mxu0 0
        %902 = vmatpush1.bf16.xpose.msra.mxu0 0
        %903 = vmatprep.subr.bf16.mxu0 0
        %904 = vmatpush1.bf16.xpose.msra.mxu0 0
        %905 = vmatprep.subr.bf16.mxu0 0
        %906 = vmatpush1.bf16.xpose.msra.mxu0 0
        %907 = vmatprep.subr.bf16.mxu0 0
        %908 = vmatpush1.bf16.xpose.msra.mxu0 0
        %909 = vmatprep.subr.bf16.mxu0 0
        %910 = vmatpush1.bf16.xpose.msra.mxu0 0
        %911 = vmatprep.subr.bf16.mxu0 0
        %912 = vmatpush1.bf16.xpose.msra.mxu0 0
        %913 = vmatprep.subr.bf16.mxu0 0
        %914 = vmatpush1.bf16.xpose.msra.mxu0 0
        %915 = vmatprep.subr.bf16.mxu0 0
        %916 = vmatpush1.bf16.xpose.msra.mxu0 0
        %917 = vmatprep.subr.bf16.mxu0 0
        %918 = vmatpush1.bf16.xpose.msra.mxu0 0
        %919 = vmatprep.subr.bf16.mxu0 0
        %920 = vmatpush1.bf16.xpose.msra.mxu0 0
        %921 = vmatprep.mubr.bf16.mxu0 %v512
        %922 = vmatmul.mubr.bf16.gmra.mrb[0].mxu0 %v511
        %v923 = vpop.f32.mrb[0].mxu0
        %v924 = vadd.f32 %v884, %v923
        %v925 = vpop.f32.mrb[0].mxu0
        %v926 = vpop.f32.mrb[0].mxu0
        %v927 = vpop.f32.mrb[0].mxu0
        %928 = vdwg.mxu0
        %v929 = vadd.f32 %v388, %v924
        %v930 = vsub.f32 %v384, -0.025
        %v931 = vsub.f32 %v385, -0.025
        %v932 = vsub.f32 %v386, -0.025
        %v933 = vsub.f32 %v387, -0.025
        %v934 = vmul.f32 %v930, %v930
        %v935 = vmul.f32 %v931, %v931
        %v936 = vmul.f32 %v932, %v932
        %v937 = vmul.f32 %v933, %v933
        %v938 = vmul.f32 %v934, -800.0
        %v939 = vmul.f32 %v935, -800.0
        %v940 = vmul.f32 %v936, -800.0
        %v941 = vmul.f32 %v937, -800.0
        %v942 = vmul.f32 %v938, 1.442695
        %v943 = vpow.pop %v942
        %v944 = vmul.f32 %v939, 1.442695
        %v945 = vpow.pop %v944
        %v946 = vmul.f32 %v940, 1.442695
        %v947 = vpow.pop %v946
        %v948 = vmul.f32 %v941, 1.442695
        %v949 = vpow.pop %v948
        %v954 = vcombine.high %v943, %v943
        %v956 = vunpack.c.l.s4 1983009808
        %v957 = vunpack.c.0.s8 %v956
        %v958 = vlaneseq
        %v959 = vshrl.u32 %v958, 7
        %v960 = vsub.s32 %v957, %v959
        %v961 = vrot.slane %v943, %v960
        %v963 = vunpack.c.l.s4 1983009808
        %v964 = vunpack.c.0.s8 %v963
        %v965 = vlaneseq
        %v966 = vshrl.u32 %v965, 7
        %v967 = vsub.s32 %v964, %v966
        %v968 = vrot.slane %v954, %v967
        %v969 = vcombine.high %v961, %v961
        %v970 = vcombine.high %v968, %v968
        %v971 = vcombine.high %v945, %v945
        %v973 = vunpack.c.l.s4 1983009808
        %v974 = vunpack.c.0.s8 %v973
        %v975 = vlaneseq
        %v976 = vshrl.u32 %v975, 7
        %v977 = vsub.s32 %v974, %v976
        %v978 = vrot.slane %v945, %v977
        %v980 = vunpack.c.l.s4 1983009808
        %v981 = vunpack.c.0.s8 %v980
        %v982 = vlaneseq
        %v983 = vshrl.u32 %v982, 7
        %v984 = vsub.s32 %v981, %v983
        %v985 = vrot.slane %v971, %v984
        %v986 = vcombine.high %v978, %v978
        %v987 = vcombine.high %v985, %v985
        %v988 = vcombine.high %v947, %v947
        %v990 = vunpack.c.l.s4 1983009808
        %v991 = vunpack.c.0.s8 %v990
        %v992 = vlaneseq
        %v993 = vshrl.u32 %v992, 7
        %v994 = vsub.s32 %v991, %v993
        %v995 = vrot.slane %v947, %v994
        %v997 = vunpack.c.l.s4 1983009808
        %v998 = vunpack.c.0.s8 %v997
        %v999 = vlaneseq
        %v1000 = vshrl.u32 %v999, 7
        %v1001 = vsub.s32 %v998, %v1000
        %v1002 = vrot.slane %v988, %v1001
        %v1003 = vcombine.high %v995, %v995
        %v1004 = vcombine.high %v1002, %v1002
        %v1005 = vcombine.high %v949, %v949
        %v1007 = vunpack.c.l.s4 1983009808
        %v1008 = vunpack.c.0.s8 %v1007
        %v1009 = vlaneseq
        %v1010 = vshrl.u32 %v1009, 7
        %v1011 = vsub.s32 %v1008, %v1010
        %v1012 = vrot.slane %v949, %v1011
        %v1014 = vunpack.c.l.s4 1983009808
        %v1015 = vunpack.c.0.s8 %v1014
        %v1016 = vlaneseq
        %v1017 = vshrl.u32 %v1016, 7
        %v1018 = vsub.s32 %v1015, %v1017
        %v1019 = vrot.slane %v1005, %v1018
        %v1020 = vcombine.high %v1012, %v1012
        %v1021 = vcombine.high %v1019, %v1019
        %v1038 = vpack.c.bf16 %v961, %v961
        %v1039 = vpack.c.bf16 %v969, %v969
        %v1040 = vpack.c.bf16 %v968, %v968
        %v1041 = vpack.c.bf16 %v970, %v970
        %v1042 = vpack.c.bf16 %v978, %v978
        %v1043 = vpack.c.bf16 %v986, %v986
        %v1044 = vpack.c.bf16 %v985, %v985
        %v1045 = vpack.c.bf16 %v987, %v987
        %v1046 = vpack.c.bf16 %v995, %v995
        %v1047 = vpack.c.bf16 %v1003, %v1003
        %v1048 = vpack.c.bf16 %v1002, %v1002
        %v1049 = vpack.c.bf16 %v1004, %v1004
        %v1050 = vpack.c.bf16 %v1012, %v1012
        %v1051 = vpack.c.bf16 %v1020, %v1020
        %v1052 = vpack.c.bf16 %v1019, %v1019
        %v1053 = vpack.c.bf16 %v1021, %v1021
        %s1054 = scalar_lea.vmem %s335, 128 [#allocation3]
        %v1055 = vld [vmem:[%s1054] sm:$0xff]
        %v1056 = vld [vmem:[%s1054 + $0x8] sm:$0xff]
        %v1057 = vld [vmem:[%s1054 + $0x10] sm:$0xff]
        %v1058 = vld [vmem:[%s1054 + $0x18] sm:$0xff]
        %v1059 = vld [vmem:[%s1054 + $0x20] sm:$0xff]
        %v1060 = vld [vmem:[%s1054 + $0x28] sm:$0xff]
        %v1061 = vld [vmem:[%s1054 + $0x30] sm:$0xff]
        %v1062 = vld [vmem:[%s1054 + $0x38] sm:$0xff]
        %v1063 = vld [vmem:[%s1054 + $0x40] sm:$0xff]
        %v1064 = vld [vmem:[%s1054 + $0x48] sm:$0xff]
        %v1065 = vld [vmem:[%s1054 + $0x50] sm:$0xff]
        %v1066 = vld [vmem:[%s1054 + $0x58] sm:$0xff]
        %v1067 = vld [vmem:[%s1054 + $0x60] sm:$0xff]
        %v1068 = vld [vmem:[%s1054 + $0x68] sm:$0xff]
        %v1069 = vld [vmem:[%s1054 + $0x70] sm:$0xff]
        %v1070 = vld [vmem:[%s1054 + $0x78] sm:$0xff]
        %v1087 = vunpack.c.l.b16 %v1055
        %v1088 = vunpack.c.h.b16 %v1055
        %v1089 = vunpack.c.l.b16 %v1056
        %v1090 = vunpack.c.h.b16 %v1056
        %v1091 = vunpack.c.l.b16 %v1057
        %v1092 = vunpack.c.h.b16 %v1057
        %v1093 = vunpack.c.l.b16 %v1058
        %v1094 = vunpack.c.h.b16 %v1058
        %v1095 = vunpack.c.l.b16 %v1059
        %v1096 = vunpack.c.h.b16 %v1059
        %v1097 = vunpack.c.l.b16 %v1060
        %v1098 = vunpack.c.h.b16 %v1060
        %v1099 = vunpack.c.l.b16 %v1061
        %v1100 = vunpack.c.h.b16 %v1061
        %v1101 = vunpack.c.l.b16 %v1062
        %v1102 = vunpack.c.h.b16 %v1062
        %v1103 = vunpack.c.l.b16 %v1063
        %v1104 = vunpack.c.h.b16 %v1063
        %v1105 = vunpack.c.l.b16 %v1064
        %v1106 = vunpack.c.h.b16 %v1064
        %v1107 = vunpack.c.l.b16 %v1065
        %v1108 = vunpack.c.h.b16 %v1065
        %v1109 = vunpack.c.l.b16 %v1066
        %v1110 = vunpack.c.h.b16 %v1066
        %v1111 = vunpack.c.l.b16 %v1067
        %v1112 = vunpack.c.h.b16 %v1067
        %v1113 = vunpack.c.l.b16 %v1068
        %v1114 = vunpack.c.h.b16 %v1068
        %v1115 = vunpack.c.l.b16 %v1069
        %v1116 = vunpack.c.h.b16 %v1069
        %v1117 = vunpack.c.l.b16 %v1070
        %v1118 = vunpack.c.h.b16 %v1070
        %v1119 = vpack.c.b16 %v1103, %v1087
        %v1120 = vpack.c.b16 %v1104, %v1088
        %v1121 = vpack.c.b16 %v1105, %v1089
        %v1122 = vpack.c.b16 %v1106, %v1090
        %v1123 = vpack.c.b16 %v1107, %v1091
        %v1124 = vpack.c.b16 %v1108, %v1092
        %v1125 = vpack.c.b16 %v1109, %v1093
        %v1126 = vpack.c.b16 %v1110, %v1094
        %v1127 = vpack.c.b16 %v1111, %v1095
        %v1128 = vpack.c.b16 %v1112, %v1096
        %v1129 = vpack.c.b16 %v1113, %v1097
        %v1130 = vpack.c.b16 %v1114, %v1098
        %v1131 = vpack.c.b16 %v1115, %v1099
        %v1132 = vpack.c.b16 %v1116, %v1100
        %v1133 = vpack.c.b16 %v1117, %v1101
        %v1134 = vpack.c.b16 %v1118, %v1102
        %1151 = vmatprep.subr.bf16.mxu0 %v1120
        %1152 = vmatpush1.bf16.xpose.msra.mxu0 %v1119
        %1153 = vmatprep.subr.bf16.mxu0 0
        %1154 = vmatpush1.bf16.xpose.msra.mxu0 0
        %1155 = vmatprep.subr.bf16.mxu0 0
        %1156 = vmatpush1.bf16.xpose.msra.mxu0 0
        %1157 = vmatprep.subr.bf16.mxu0 0
        %1158 = vmatpush1.bf16.xpose.msra.mxu0 0
        %1159 = vmatprep.subr.bf16.mxu0 0
        %1160 = vmatpush1.bf16.xpose.msra.mxu0 0
        %1161 = vmatprep.subr.bf16.mxu0 0
        %1162 = vmatpush1.bf16.xpose.msra.mxu0 0
        %1163 = vmatprep.subr.bf16.mxu0 0
        %1164 = vmatpush1.bf16.xpose.msra.mxu0 0
        %1165 = vmatprep.subr.bf16.mxu0 0
        %1166 = vmatpush1.bf16.xpose.msra.mxu0 0
        %1167 = vmatprep.subr.bf16.mxu0 0
        %1168 = vmatpush1.bf16.xpose.msra.mxu0 0
        %1169 = vmatprep.subr.bf16.mxu0 0
        %1170 = vmatpush1.bf16.xpose.msra.mxu0 0
        %1171 = vmatprep.subr.bf16.mxu0 0
        %1172 = vmatpush1.bf16.xpose.msra.mxu0 0
        %1173 = vmatprep.subr.bf16.mxu0 0
        %1174 = vmatpush1.bf16.xpose.msra.mxu0 0
        %1175 = vmatprep.subr.bf16.mxu0 0
        %1176 = vmatpush1.bf16.xpose.msra.mxu0 0
        %1177 = vmatprep.subr.bf16.mxu0 0
        %1178 = vmatpush1.bf16.xpose.msra.mxu0 0
        %1179 = vmatprep.subr.bf16.mxu0 0
        %1180 = vmatpush1.bf16.xpose.msra.mxu0 0
        %1181 = vmatprep.subr.bf16.mxu0 0
        %1182 = vmatpush1.bf16.xpose.msra.mxu0 0
        %1183 = vmatprep.mubr.bf16.mxu0 %v1039
        %1184 = vmatmul.mubr.bf16.gmra.mrb[0].mxu0 %v1038
        %v1185 = vpop.f32.mrb[0].mxu0
        %v1186 = vadd.f32 0.0, %v1185
        %v1187 = vpop.f32.mrb[0].mxu0
        %v1188 = vpop.f32.mrb[0].mxu0
        %v1189 = vpop.f32.mrb[0].mxu0
        %1190 = vdwg.mxu0
        %1191 = vmatprep.subr.bf16.mxu0 %v1122
        %1192 = vmatpush1.bf16.xpose.msra.mxu0 %v1121
        %1193 = vmatprep.subr.bf16.mxu0 0
        %1194 = vmatpush1.bf16.xpose.msra.mxu0 0
        %1195 = vmatprep.subr.bf16.mxu0 0
        %1196 = vmatpush1.bf16.xpose.msra.mxu0 0
        %1197 = vmatprep.subr.bf16.mxu0 0
        %1198 = vmatpush1.bf16.xpose.msra.mxu0 0
        %1199 = vmatprep.subr.bf16.mxu0 0
        %1200 = vmatpush1.bf16.xpose.msra.mxu0 0
        %1201 = vmatprep.subr.bf16.mxu0 0
        %1202 = vmatpush1.bf16.xpose.msra.mxu0 0
        %1203 = vmatprep.subr.bf16.mxu0 0
        %1204 = vmatpush1.bf16.xpose.msra.mxu0 0
        %1205 = vmatprep.subr.bf16.mxu0 0
        %1206 = vmatpush1.bf16.xpose.msra.mxu0 0
        %1207 = vmatprep.subr.bf16.mxu0 0
        %1208 = vmatpush1.bf16.xpose.msra.mxu0 0
        %1209 = vmatprep.subr.bf16.mxu0 0
        %1210 = vmatpush1.bf16.xpose.msra.mxu0 0
        %1211 = vmatprep.subr.bf16.mxu0 0
        %1212 = vmatpush1.bf16.xpose.msra.mxu0 0
        %1213 = vmatprep.subr.bf16.mxu0 0
        %1214 = vmatpush1.bf16.xpose.msra.mxu0 0
        %1215 = vmatprep.subr.bf16.mxu0 0
        %1216 = vmatpush1.bf16.xpose.msra.mxu0 0
        %1217 = vmatprep.subr.bf16.mxu0 0
        %1218 = vmatpush1.bf16.xpose.msra.mxu0 0
        %1219 = vmatprep.subr.bf16.mxu0 0
        %1220 = vmatpush1.bf16.xpose.msra.mxu0 0
        %1221 = vmatprep.subr.bf16.mxu0 0
        %1222 = vmatpush1.bf16.xpose.msra.mxu0 0
        %1223 = vmatprep.mubr.bf16.mxu0 %v1041
        %1224 = vmatmul.mubr.bf16.gmra.mrb[0].mxu0 %v1040
        %v1225 = vpop.f32.mrb[0].mxu0
        %v1226 = vadd.f32 %v1186, %v1225
        %v1227 = vpop.f32.mrb[0].mxu0
        %v1228 = vpop.f32.mrb[0].mxu0
        %v1229 = vpop.f32.mrb[0].mxu0
        %1230 = vdwg.mxu0
        %1231 = vmatprep.subr.bf16.mxu0 %v1124
        %1232 = vmatpush1.bf16.xpose.msra.mxu0 %v1123
        %1233 = vmatprep.subr.bf16.mxu0 0
        %1234 = vmatpush1.bf16.xpose.msra.mxu0 0
        %1235 = vmatprep.subr.bf16.mxu0 0
        %1236 = vmatpush1.bf16.xpose.msra.mxu0 0
        %1237 = vmatprep.subr.bf16.mxu0 0
        %1238 = vmatpush1.bf16.xpose.msra.mxu0 0
        %1239 = vmatprep.subr.bf16.mxu0 0
        %1240 = vmatpush1.bf16.xpose.msra.mxu0 0
        %1241 = vmatprep.subr.bf16.mxu0 0
        %1242 = vmatpush1.bf16.xpose.msra.mxu0 0
        %1243 = vmatprep.subr.bf16.mxu0 0
        %1244 = vmatpush1.bf16.xpose.msra.mxu0 0
        %1245 = vmatprep.subr.bf16.mxu0 0
        %1246 = vmatpush1.bf16.xpose.msra.mxu0 0
        %1247 = vmatprep.subr.bf16.mxu0 0
        %1248 = vmatpush1.bf16.xpose.msra.mxu0 0
        %1249 = vmatprep.subr.bf16.mxu0 0
        %1250 = vmatpush1.bf16.xpose.msra.mxu0 0
        %1251 = vmatprep.subr.bf16.mxu0 0
        %1252 = vmatpush1.bf16.xpose.msra.mxu0 0
        %1253 = vmatprep.subr.bf16.mxu0 0
        %1254 = vmatpush1.bf16.xpose.msra.mxu0 0
        %1255 = vmatprep.subr.bf16.mxu0 0
        %1256 = vmatpush1.bf16.xpose.msra.mxu0 0
        %1257 = vmatprep.subr.bf16.mxu0 0
        %1258 = vmatpush1.bf16.xpose.msra.mxu0 0
        %1259 = vmatprep.subr.bf16.mxu0 0
        %1260 = vmatpush1.bf16.xpose.msra.mxu0 0
        %1261 = vmatprep.subr.bf16.mxu0 0
        %1262 = vmatpush1.bf16.xpose.msra.mxu0 0
        %1263 = vmatprep.mubr.bf16.mxu0 %v1043
        %1264 = vmatmul.mubr.bf16.gmra.mrb[0].mxu0 %v1042
        %v1265 = vpop.f32.mrb[0].mxu0
        %v1266 = vadd.f32 %v1226, %v1265
        %v1267 = vpop.f32.mrb[0].mxu0
        %v1268 = vpop.f32.mrb[0].mxu0
        %v1269 = vpop.f32.mrb[0].mxu0
        %1270 = vdwg.mxu0
        %1271 = vmatprep.subr.bf16.mxu0 %v1126
        %1272 = vmatpush1.bf16.xpose.msra.mxu0 %v1125
        %1273 = vmatprep.subr.bf16.mxu0 0
        %1274 = vmatpush1.bf16.xpose.msra.mxu0 0
        %1275 = vmatprep.subr.bf16.mxu0 0
        %1276 = vmatpush1.bf16.xpose.msra.mxu0 0
        %1277 = vmatprep.subr.bf16.mxu0 0
        %1278 = vmatpush1.bf16.xpose.msra.mxu0 0
        %1279 = vmatprep.subr.bf16.mxu0 0
        %1280 = vmatpush1.bf16.xpose.msra.mxu0 0
        %1281 = vmatprep.subr.bf16.mxu0 0
        %1282 = vmatpush1.bf16.xpose.msra.mxu0 0
        %1283 = vmatprep.subr.bf16.mxu0 0
        %1284 = vmatpush1.bf16.xpose.msra.mxu0 0
        %1285 = vmatprep.subr.bf16.mxu0 0
        %1286 = vmatpush1.bf16.xpose.msra.mxu0 0
        %1287 = vmatprep.subr.bf16.mxu0 0
        %1288 = vmatpush1.bf16.xpose.msra.mxu0 0
        %1289 = vmatprep.subr.bf16.mxu0 0
        %1290 = vmatpush1.bf16.xpose.msra.mxu0 0
        %1291 = vmatprep.subr.bf16.mxu0 0
        %1292 = vmatpush1.bf16.xpose.msra.mxu0 0
        %1293 = vmatprep.subr.bf16.mxu0 0
        %1294 = vmatpush1.bf16.xpose.msra.mxu0 0
        %1295 = vmatprep.subr.bf16.mxu0 0
        %1296 = vmatpush1.bf16.xpose.msra.mxu0 0
        %1297 = vmatprep.subr.bf16.mxu0 0
        %1298 = vmatpush1.bf16.xpose.msra.mxu0 0
        %1299 = vmatprep.subr.bf16.mxu0 0
        %1300 = vmatpush1.bf16.xpose.msra.mxu0 0
        %1301 = vmatprep.subr.bf16.mxu0 0
        %1302 = vmatpush1.bf16.xpose.msra.mxu0 0
        %1303 = vmatprep.mubr.bf16.mxu0 %v1045
        %1304 = vmatmul.mubr.bf16.gmra.mrb[0].mxu0 %v1044
        %v1305 = vpop.f32.mrb[0].mxu0
        %v1306 = vadd.f32 %v1266, %v1305
        %v1307 = vpop.f32.mrb[0].mxu0
        %v1308 = vpop.f32.mrb[0].mxu0
        %v1309 = vpop.f32.mrb[0].mxu0
        %1310 = vdwg.mxu0
        %1311 = vmatprep.subr.bf16.mxu0 %v1128
        %1312 = vmatpush1.bf16.xpose.msra.mxu0 %v1127
        %1313 = vmatprep.subr.bf16.mxu0 0
        %1314 = vmatpush1.bf16.xpose.msra.mxu0 0
        %1315 = vmatprep.subr.bf16.mxu0 0
        %1316 = vmatpush1.bf16.xpose.msra.mxu0 0
        %1317 = vmatprep.subr.bf16.mxu0 0
        %1318 = vmatpush1.bf16.xpose.msra.mxu0 0
        %1319 = vmatprep.subr.bf16.mxu0 0
        %1320 = vmatpush1.bf16.xpose.msra.mxu0 0
        %1321 = vmatprep.subr.bf16.mxu0 0
        %1322 = vmatpush1.bf16.xpose.msra.mxu0 0
        %1323 = vmatprep.subr.bf16.mxu0 0
        %1324 = vmatpush1.bf16.xpose.msra.mxu0 0
        %1325 = vmatprep.subr.bf16.mxu0 0
        %1326 = vmatpush1.bf16.xpose.msra.mxu0 0
        %1327 = vmatprep.subr.bf16.mxu0 0
        %1328 = vmatpush1.bf16.xpose.msra.mxu0 0
        %1329 = vmatprep.subr.bf16.mxu0 0
        %1330 = vmatpush1.bf16.xpose.msra.mxu0 0
        %1331 = vmatprep.subr.bf16.mxu0 0
        %1332 = vmatpush1.bf16.xpose.msra.mxu0 0
        %1333 = vmatprep.subr.bf16.mxu0 0
        %1334 = vmatpush1.bf16.xpose.msra.mxu0 0
        %1335 = vmatprep.subr.bf16.mxu0 0
        %1336 = vmatpush1.bf16.xpose.msra.mxu0 0
        %1337 = vmatprep.subr.bf16.mxu0 0
        %1338 = vmatpush1.bf16.xpose.msra.mxu0 0
        %1339 = vmatprep.subr.bf16.mxu0 0
        %1340 = vmatpush1.bf16.xpose.msra.mxu0 0
        %1341 = vmatprep.subr.bf16.mxu0 0
        %1342 = vmatpush1.bf16.xpose.msra.mxu0 0
        %1343 = vmatprep.mubr.bf16.mxu0 %v1047
        %1344 = vmatmul.mubr.bf16.gmra.mrb[0].mxu0 %v1046
        %v1345 = vpop.f32.mrb[0].mxu0
        %v1346 = vadd.f32 %v1306, %v1345
        %v1347 = vpop.f32.mrb[0].mxu0
        %v1348 = vpop.f32.mrb[0].mxu0
        %v1349 = vpop.f32.mrb[0].mxu0
        %1350 = vdwg.mxu0
        %1351 = vmatprep.subr.bf16.mxu0 %v1130
        %1352 = vmatpush1.bf16.xpose.msra.mxu0 %v1129
        %1353 = vmatprep.subr.bf16.mxu0 0
        %1354 = vmatpush1.bf16.xpose.msra.mxu0 0
        %1355 = vmatprep.subr.bf16.mxu0 0
        %1356 = vmatpush1.bf16.xpose.msra.mxu0 0
        %1357 = vmatprep.subr.bf16.mxu0 0
        %1358 = vmatpush1.bf16.xpose.msra.mxu0 0
        %1359 = vmatprep.subr.bf16.mxu0 0
        %1360 = vmatpush1.bf16.xpose.msra.mxu0 0
        %1361 = vmatprep.subr.bf16.mxu0 0
        %1362 = vmatpush1.bf16.xpose.msra.mxu0 0
        %1363 = vmatprep.subr.bf16.mxu0 0
        %1364 = vmatpush1.bf16.xpose.msra.mxu0 0
        %1365 = vmatprep.subr.bf16.mxu0 0
        %1366 = vmatpush1.bf16.xpose.msra.mxu0 0
        %1367 = vmatprep.subr.bf16.mxu0 0
        %1368 = vmatpush1.bf16.xpose.msra.mxu0 0
        %1369 = vmatprep.subr.bf16.mxu0 0
        %1370 = vmatpush1.bf16.xpose.msra.mxu0 0
        %1371 = vmatprep.subr.bf16.mxu0 0
        %1372 = vmatpush1.bf16.xpose.msra.mxu0 0
        %1373 = vmatprep.subr.bf16.mxu0 0
        %1374 = vmatpush1.bf16.xpose.msra.mxu0 0
        %1375 = vmatprep.subr.bf16.mxu0 0
        %1376 = vmatpush1.bf16.xpose.msra.mxu0 0
        %1377 = vmatprep.subr.bf16.mxu0 0
        %1378 = vmatpush1.bf16.xpose.msra.mxu0 0
        %1379 = vmatprep.subr.bf16.mxu0 0
        %1380 = vmatpush1.bf16.xpose.msra.mxu0 0
        %1381 = vmatprep.subr.bf16.mxu0 0
        %1382 = vmatpush1.bf16.xpose.msra.mxu0 0
        %1383 = vmatprep.mubr.bf16.mxu0 %v1049
        %1384 = vmatmul.mubr.bf16.gmra.mrb[0].mxu0 %v1048
        %v1385 = vpop.f32.mrb[0].mxu0
        %v1386 = vadd.f32 %v1346, %v1385
        %v1387 = vpop.f32.mrb[0].mxu0
        %v1388 = vpop.f32.mrb[0].mxu0
        %v1389 = vpop.f32.mrb[0].mxu0
        %1390 = vdwg.mxu0
        %1391 = vmatprep.subr.bf16.mxu0 %v1132
        %1392 = vmatpush1.bf16.xpose.msra.mxu0 %v1131
        %1393 = vmatprep.subr.bf16.mxu0 0
        %1394 = vmatpush1.bf16.xpose.msra.mxu0 0
        %1395 = vmatprep.subr.bf16.mxu0 0
        %1396 = vmatpush1.bf16.xpose.msra.mxu0 0
        %1397 = vmatprep.subr.bf16.mxu0 0
        %1398 = vmatpush1.bf16.xpose.msra.mxu0 0
        %1399 = vmatprep.subr.bf16.mxu0 0
        %1400 = vmatpush1.bf16.xpose.msra.mxu0 0
        %1401 = vmatprep.subr.bf16.mxu0 0
        %1402 = vmatpush1.bf16.xpose.msra.mxu0 0
        %1403 = vmatprep.subr.bf16.mxu0 0
        %1404 = vmatpush1.bf16.xpose.msra.mxu0 0
        %1405 = vmatprep.subr.bf16.mxu0 0
        %1406 = vmatpush1.bf16.xpose.msra.mxu0 0
        %1407 = vmatprep.subr.bf16.mxu0 0
        %1408 = vmatpush1.bf16.xpose.msra.mxu0 0
        %1409 = vmatprep.subr.bf16.mxu0 0
        %1410 = vmatpush1.bf16.xpose.msra.mxu0 0
        %1411 = vmatprep.subr.bf16.mxu0 0
        %1412 = vmatpush1.bf16.xpose.msra.mxu0 0
        %1413 = vmatprep.subr.bf16.mxu0 0
        %1414 = vmatpush1.bf16.xpose.msra.mxu0 0
        %1415 = vmatprep.subr.bf16.mxu0 0
        %1416 = vmatpush1.bf16.xpose.msra.mxu0 0
        %1417 = vmatprep.subr.bf16.mxu0 0
        %1418 = vmatpush1.bf16.xpose.msra.mxu0 0
        %1419 = vmatprep.subr.bf16.mxu0 0
        %1420 = vmatpush1.bf16.xpose.msra.mxu0 0
        %1421 = vmatprep.subr.bf16.mxu0 0
        %1422 = vmatpush1.bf16.xpose.msra.mxu0 0
        %1423 = vmatprep.mubr.bf16.mxu0 %v1051
        %1424 = vmatmul.mubr.bf16.gmra.mrb[0].mxu0 %v1050
        %v1425 = vpop.f32.mrb[0].mxu0
        %v1426 = vadd.f32 %v1386, %v1425
        %v1427 = vpop.f32.mrb[0].mxu0
        %v1428 = vpop.f32.mrb[0].mxu0
        %v1429 = vpop.f32.mrb[0].mxu0
        %1430 = vdwg.mxu0
        %1431 = vmatprep.subr.bf16.mxu0 %v1134
        %1432 = vmatpush1.bf16.xpose.msra.mxu0 %v1133
        %1433 = vmatprep.subr.bf16.mxu0 0
        %1434 = vmatpush1.bf16.xpose.msra.mxu0 0
        %1435 = vmatprep.subr.bf16.mxu0 0
        %1436 = vmatpush1.bf16.xpose.msra.mxu0 0
        %1437 = vmatprep.subr.bf16.mxu0 0
        %1438 = vmatpush1.bf16.xpose.msra.mxu0 0
        %1439 = vmatprep.subr.bf16.mxu0 0
        %1440 = vmatpush1.bf16.xpose.msra.mxu0 0
        %1441 = vmatprep.subr.bf16.mxu0 0
        %1442 = vmatpush1.bf16.xpose.msra.mxu0 0
        %1443 = vmatprep.subr.bf16.mxu0 0
        %1444 = vmatpush1.bf16.xpose.msra.mxu0 0
        %1445 = vmatprep.subr.bf16.mxu0 0
        %1446 = vmatpush1.bf16.xpose.msra.mxu0 0
        %1447 = vmatprep.subr.bf16.mxu0 0
        %1448 = vmatpush1.bf16.xpose.msra.mxu0 0
        %1449 = vmatprep.subr.bf16.mxu0 0
        %1450 = vmatpush1.bf16.xpose.msra.mxu0 0
        %1451 = vmatprep.subr.bf16.mxu0 0
        %1452 = vmatpush1.bf16.xpose.msra.mxu0 0
        %1453 = vmatprep.subr.bf16.mxu0 0
        %1454 = vmatpush1.bf16.xpose.msra.mxu0 0
        %1455 = vmatprep.subr.bf16.mxu0 0
        %1456 = vmatpush1.bf16.xpose.msra.mxu0 0
        %1457 = vmatprep.subr.bf16.mxu0 0
        %1458 = vmatpush1.bf16.xpose.msra.mxu0 0
        %1459 = vmatprep.subr.bf16.mxu0 0
        %1460 = vmatpush1.bf16.xpose.msra.mxu0 0
        %1461 = vmatprep.subr.bf16.mxu0 0
        %1462 = vmatpush1.bf16.xpose.msra.mxu0 0
        %1463 = vmatprep.mubr.bf16.mxu0 %v1053
        %1464 = vmatmul.mubr.bf16.gmra.mrb[0].mxu0 %v1052
        %v1465 = vpop.f32.mrb[0].mxu0
        %v1466 = vadd.f32 %v1426, %v1465
        %v1467 = vpop.f32.mrb[0].mxu0
        %v1468 = vpop.f32.mrb[0].mxu0
        %v1469 = vpop.f32.mrb[0].mxu0
        %1470 = vdwg.mxu0
        %v1471 = vadd.f32 %v929, %v1466
        %v1472 = vmul.f32 %v384, %v384
        %v1473 = vmul.f32 %v385, %v385
        %v1474 = vmul.f32 %v386, %v386
        %v1475 = vmul.f32 %v387, %v387
        %v1476 = vmul.f32 %v1472, -800.0
        %v1477 = vmul.f32 %v1473, -800.0
        %v1478 = vmul.f32 %v1474, -800.0
        %v1479 = vmul.f32 %v1475, -800.0
        %v1480 = vmul.f32 %v1476, 1.442695
        %v1481 = vpow.pop %v1480
        %v1482 = vmul.f32 %v1477, 1.442695
        %v1483 = vpow.pop %v1482
        %v1484 = vmul.f32 %v1478, 1.442695
        %v1485 = vpow.pop %v1484
        %v1486 = vmul.f32 %v1479, 1.442695
        %v1487 = vpow.pop %v1486
        %v1492 = vcombine.high %v1481, %v1481
        %v1494 = vunpack.c.l.s4 1983009808
        %v1495 = vunpack.c.0.s8 %v1494
        %v1496 = vlaneseq
        %v1497 = vshrl.u32 %v1496, 7
        %v1498 = vsub.s32 %v1495, %v1497
        %v1499 = vrot.slane %v1481, %v1498
        %v1501 = vunpack.c.l.s4 1983009808
        %v1502 = vunpack.c.0.s8 %v1501
        %v1503 = vlaneseq
        %v1504 = vshrl.u32 %v1503, 7
        %v1505 = vsub.s32 %v1502, %v1504
        %v1506 = vrot.slane %v1492, %v1505
        %v1507 = vcombine.high %v1499, %v1499
        %v1508 = vcombine.high %v1506, %v1506
        %v1509 = vcombine.high %v1483, %v1483
        %v1511 = vunpack.c.l.s4 1983009808
        %v1512 = vunpack.c.0.s8 %v1511
        %v1513 = vlaneseq
        %v1514 = vshrl.u32 %v1513, 7
        %v1515 = vsub.s32 %v1512, %v1514
        %v1516 = vrot.slane %v1483, %v1515
        %v1518 = vunpack.c.l.s4 1983009808
        %v1519 = vunpack.c.0.s8 %v1518
        %v1520 = vlaneseq
        %v1521 = vshrl.u32 %v1520, 7
        %v1522 = vsub.s32 %v1519, %v1521
        %v1523 = vrot.slane %v1509, %v1522
        %v1524 = vcombine.high %v1516, %v1516
        %v1525 = vcombine.high %v1523, %v1523
        %v1526 = vcombine.high %v1485, %v1485
        %v1528 = vunpack.c.l.s4 1983009808
        %v1529 = vunpack.c.0.s8 %v1528
        %v1530 = vlaneseq
        %v1531 = vshrl.u32 %v1530, 7
        %v1532 = vsub.s32 %v1529, %v1531
        %v1533 = vrot.slane %v1485, %v1532
        %v1535 = vunpack.c.l.s4 1983009808
        %v1536 = vunpack.c.0.s8 %v1535
        %v1537 = vlaneseq
        %v1538 = vshrl.u32 %v1537, 7
        %v1539 = vsub.s32 %v1536, %v1538
        %v1540 = vrot.slane %v1526, %v1539
        %v1541 = vcombine.high %v1533, %v1533
        %v1542 = vcombine.high %v1540, %v1540
        %v1543 = vcombine.high %v1487, %v1487
        %v1545 = vunpack.c.l.s4 1983009808
        %v1546 = vunpack.c.0.s8 %v1545
        %v1547 = vlaneseq
        %v1548 = vshrl.u32 %v1547, 7
        %v1549 = vsub.s32 %v1546, %v1548
        %v1550 = vrot.slane %v1487, %v1549
        %v1552 = vunpack.c.l.s4 1983009808
        %v1553 = vunpack.c.0.s8 %v1552
        %v1554 = vlaneseq
        %v1555 = vshrl.u32 %v1554, 7
        %v1556 = vsub.s32 %v1553, %v1555
        %v1557 = vrot.slane %v1543, %v1556
        %v1558 = vcombine.high %v1550, %v1550
        %v1559 = vcombine.high %v1557, %v1557
        %v1576 = vpack.c.bf16 %v1499, %v1499
        %v1577 = vpack.c.bf16 %v1507, %v1507
        %v1578 = vpack.c.bf16 %v1506, %v1506
        %v1579 = vpack.c.bf16 %v1508, %v1508
        %v1580 = vpack.c.bf16 %v1516, %v1516
        %v1581 = vpack.c.bf16 %v1524, %v1524
        %v1582 = vpack.c.bf16 %v1523, %v1523
        %v1583 = vpack.c.bf16 %v1525, %v1525
        %v1584 = vpack.c.bf16 %v1533, %v1533
        %v1585 = vpack.c.bf16 %v1541, %v1541
        %v1586 = vpack.c.bf16 %v1540, %v1540
        %v1587 = vpack.c.bf16 %v1542, %v1542
        %v1588 = vpack.c.bf16 %v1550, %v1550
        %v1589 = vpack.c.bf16 %v1558, %v1558
        %v1590 = vpack.c.bf16 %v1557, %v1557
        %v1591 = vpack.c.bf16 %v1559, %v1559
        %s1592 = scalar_lea.vmem %s335, 256 [#allocation3]
        %v1593 = vld [vmem:[%s1592] sm:$0xff]
        %v1594 = vld [vmem:[%s1592 + $0x8] sm:$0xff]
        %v1595 = vld [vmem:[%s1592 + $0x10] sm:$0xff]
        %v1596 = vld [vmem:[%s1592 + $0x18] sm:$0xff]
        %v1597 = vld [vmem:[%s1592 + $0x20] sm:$0xff]
        %v1598 = vld [vmem:[%s1592 + $0x28] sm:$0xff]
        %v1599 = vld [vmem:[%s1592 + $0x30] sm:$0xff]
        %v1600 = vld [vmem:[%s1592 + $0x38] sm:$0xff]
        %v1601 = vld [vmem:[%s1592 + $0x40] sm:$0xff]
        %v1602 = vld [vmem:[%s1592 + $0x48] sm:$0xff]
        %v1603 = vld [vmem:[%s1592 + $0x50] sm:$0xff]
        %v1604 = vld [vmem:[%s1592 + $0x58] sm:$0xff]
        %v1605 = vld [vmem:[%s1592 + $0x60] sm:$0xff]
        %v1606 = vld [vmem:[%s1592 + $0x68] sm:$0xff]
        %v1607 = vld [vmem:[%s1592 + $0x70] sm:$0xff]
        %v1608 = vld [vmem:[%s1592 + $0x78] sm:$0xff]
        %v1625 = vunpack.c.l.b16 %v1593
        %v1626 = vunpack.c.h.b16 %v1593
        %v1627 = vunpack.c.l.b16 %v1594
        %v1628 = vunpack.c.h.b16 %v1594
        %v1629 = vunpack.c.l.b16 %v1595
        %v1630 = vunpack.c.h.b16 %v1595
        %v1631 = vunpack.c.l.b16 %v1596
        %v1632 = vunpack.c.h.b16 %v1596
        %v1633 = vunpack.c.l.b16 %v1597
        %v1634 = vunpack.c.h.b16 %v1597
        %v1635 = vunpack.c.l.b16 %v1598
        %v1636 = vunpack.c.h.b16 %v1598
        %v1637 = vunpack.c.l.b16 %v1599
        %v1638 = vunpack.c.h.b16 %v1599
        %v1639 = vunpack.c.l.b16 %v1600
        %v1640 = vunpack.c.h.b16 %v1600
        %v1641 = vunpack.c.l.b16 %v1601
        %v1642 = vunpack.c.h.b16 %v1601
        %v1643 = vunpack.c.l.b16 %v1602
        %v1644 = vunpack.c.h.b16 %v1602
        %v1645 = vunpack.c.l.b16 %v1603
        %v1646 = vunpack.c.h.b16 %v1603
        %v1647 = vunpack.c.l.b16 %v1604
        %v1648 = vunpack.c.h.b16 %v1604
        %v1649 = vunpack.c.l.b16 %v1605
        %v1650 = vunpack.c.h.b16 %v1605
        %v1651 = vunpack.c.l.b16 %v1606
        %v1652 = vunpack.c.h.b16 %v1606
        %v1653 = vunpack.c.l.b16 %v1607
        %v1654 = vunpack.c.h.b16 %v1607
        %v1655 = vunpack.c.l.b16 %v1608
        %v1656 = vunpack.c.h.b16 %v1608
        %v1657 = vpack.c.b16 %v1641, %v1625
        %v1658 = vpack.c.b16 %v1642, %v1626
        %v1659 = vpack.c.b16 %v1643, %v1627
        %v1660 = vpack.c.b16 %v1644, %v1628
        %v1661 = vpack.c.b16 %v1645, %v1629
        %v1662 = vpack.c.b16 %v1646, %v1630
        %v1663 = vpack.c.b16 %v1647, %v1631
        %v1664 = vpack.c.b16 %v1648, %v1632
        %v1665 = vpack.c.b16 %v1649, %v1633
        %v1666 = vpack.c.b16 %v1650, %v1634
        %v1667 = vpack.c.b16 %v1651, %v1635
        %v1668 = vpack.c.b16 %v1652, %v1636
        %v1669 = vpack.c.b16 %v1653, %v1637
        %v1670 = vpack.c.b16 %v1654, %v1638
        %v1671 = vpack.c.b16 %v1655, %v1639
        %v1672 = vpack.c.b16 %v1656, %v1640
        %1689 = vmatprep.subr.bf16.mxu0 %v1658
        %1690 = vmatpush1.bf16.xpose.msra.mxu0 %v1657
        %1691 = vmatprep.subr.bf16.mxu0 0
        %1692 = vmatpush1.bf16.xpose.msra.mxu0 0
        %1693 = vmatprep.subr.bf16.mxu0 0
        %1694 = vmatpush1.bf16.xpose.msra.mxu0 0
        %1695 = vmatprep.subr.bf16.mxu0 0
        %1696 = vmatpush1.bf16.xpose.msra.mxu0 0
        %1697 = vmatprep.subr.bf16.mxu0 0
        %1698 = vmatpush1.bf16.xpose.msra.mxu0 0
        %1699 = vmatprep.subr.bf16.mxu0 0
        %1700 = vmatpush1.bf16.xpose.msra.mxu0 0
        %1701 = vmatprep.subr.bf16.mxu0 0
        %1702 = vmatpush1.bf16.xpose.msra.mxu0 0
        %1703 = vmatprep.subr.bf16.mxu0 0
        %1704 = vmatpush1.bf16.xpose.msra.mxu0 0
        %1705 = vmatprep.subr.bf16.mxu0 0
        %1706 = vmatpush1.bf16.xpose.msra.mxu0 0
        %1707 = vmatprep.subr.bf16.mxu0 0
        %1708 = vmatpush1.bf16.xpose.msra.mxu0 0
        %1709 = vmatprep.subr.bf16.mxu0 0
        %1710 = vmatpush1.bf16.xpose.msra.mxu0 0
        %1711 = vmatprep.subr.bf16.mxu0 0
        %1712 = vmatpush1.bf16.xpose.msra.mxu0 0
        %1713 = vmatprep.subr.bf16.mxu0 0
        %1714 = vmatpush1.bf16.xpose.msra.mxu0 0
        %1715 = vmatprep.subr.bf16.mxu0 0
        %1716 = vmatpush1.bf16.xpose.msra.mxu0 0
        %1717 = vmatprep.subr.bf16.mxu0 0
        %1718 = vmatpush1.bf16.xpose.msra.mxu0 0
        %1719 = vmatprep.subr.bf16.mxu0 0
        %1720 = vmatpush1.bf16.xpose.msra.mxu0 0
        %1721 = vmatprep.mubr.bf16.mxu0 %v1577
        %1722 = vmatmul.mubr.bf16.gmra.mrb[0].mxu0 %v1576
        %v1723 = vpop.f32.mrb[0].mxu0
        %v1724 = vadd.f32 0.0, %v1723
        %v1725 = vpop.f32.mrb[0].mxu0
        %v1726 = vpop.f32.mrb[0].mxu0
        %v1727 = vpop.f32.mrb[0].mxu0
        %1728 = vdwg.mxu0
        %1729 = vmatprep.subr.bf16.mxu0 %v1660
        %1730 = vmatpush1.bf16.xpose.msra.mxu0 %v1659
        %1731 = vmatprep.subr.bf16.mxu0 0
        %1732 = vmatpush1.bf16.xpose.msra.mxu0 0
        %1733 = vmatprep.subr.bf16.mxu0 0
        %1734 = vmatpush1.bf16.xpose.msra.mxu0 0
        %1735 = vmatprep.subr.bf16.mxu0 0
        %1736 = vmatpush1.bf16.xpose.msra.mxu0 0
        %1737 = vmatprep.subr.bf16.mxu0 0
        %1738 = vmatpush1.bf16.xpose.msra.mxu0 0
        %1739 = vmatprep.subr.bf16.mxu0 0
        %1740 = vmatpush1.bf16.xpose.msra.mxu0 0
        %1741 = vmatprep.subr.bf16.mxu0 0
        %1742 = vmatpush1.bf16.xpose.msra.mxu0 0
        %1743 = vmatprep.subr.bf16.mxu0 0
        %1744 = vmatpush1.bf16.xpose.msra.mxu0 0
        %1745 = vmatprep.subr.bf16.mxu0 0
        %1746 = vmatpush1.bf16.xpose.msra.mxu0 0
        %1747 = vmatprep.subr.bf16.mxu0 0
        %1748 = vmatpush1.bf16.xpose.msra.mxu0 0
        %1749 = vmatprep.subr.bf16.mxu0 0
        %1750 = vmatpush1.bf16.xpose.msra.mxu0 0
        %1751 = vmatprep.subr.bf16.mxu0 0
        %1752 = vmatpush1.bf16.xpose.msra.mxu0 0
        %1753 = vmatprep.subr.bf16.mxu0 0
        %1754 = vmatpush1.bf16.xpose.msra.mxu0 0
        %1755 = vmatprep.subr.bf16.mxu0 0
        %1756 = vmatpush1.bf16.xpose.msra.mxu0 0
        %1757 = vmatprep.subr.bf16.mxu0 0
        %1758 = vmatpush1.bf16.xpose.msra.mxu0 0
        %1759 = vmatprep.subr.bf16.mxu0 0
        %1760 = vmatpush1.bf16.xpose.msra.mxu0 0
        %1761 = vmatprep.mubr.bf16.mxu0 %v1579
        %1762 = vmatmul.mubr.bf16.gmra.mrb[0].mxu0 %v1578
        %v1763 = vpop.f32.mrb[0].mxu0
        %v1764 = vadd.f32 %v1724, %v1763
        %v1765 = vpop.f32.mrb[0].mxu0
        %v1766 = vpop.f32.mrb[0].mxu0
        %v1767 = vpop.f32.mrb[0].mxu0
        %1768 = vdwg.mxu0
        %1769 = vmatprep.subr.bf16.mxu0 %v1662
        %1770 = vmatpush1.bf16.xpose.msra.mxu0 %v1661
        %1771 = vmatprep.subr.bf16.mxu0 0
        %1772 = vmatpush1.bf16.xpose.msra.mxu0 0
        %1773 = vmatprep.subr.bf16.mxu0 0
        %1774 = vmatpush1.bf16.xpose.msra.mxu0 0
        %1775 = vmatprep.subr.bf16.mxu0 0
        %1776 = vmatpush1.bf16.xpose.msra.mxu0 0
        %1777 = vmatprep.subr.bf16.mxu0 0
        %1778 = vmatpush1.bf16.xpose.msra.mxu0 0
        %1779 = vmatprep.subr.bf16.mxu0 0
        %1780 = vmatpush1.bf16.xpose.msra.mxu0 0
        %1781 = vmatprep.subr.bf16.mxu0 0
        %1782 = vmatpush1.bf16.xpose.msra.mxu0 0
        %1783 = vmatprep.subr.bf16.mxu0 0
        %1784 = vmatpush1.bf16.xpose.msra.mxu0 0
        %1785 = vmatprep.subr.bf16.mxu0 0
        %1786 = vmatpush1.bf16.xpose.msra.mxu0 0
        %1787 = vmatprep.subr.bf16.mxu0 0
        %1788 = vmatpush1.bf16.xpose.msra.mxu0 0
        %1789 = vmatprep.subr.bf16.mxu0 0
        %1790 = vmatpush1.bf16.xpose.msra.mxu0 0
        %1791 = vmatprep.subr.bf16.mxu0 0
        %1792 = vmatpush1.bf16.xpose.msra.mxu0 0
        %1793 = vmatprep.subr.bf16.mxu0 0
        %1794 = vmatpush1.bf16.xpose.msra.mxu0 0
        %1795 = vmatprep.subr.bf16.mxu0 0
        %1796 = vmatpush1.bf16.xpose.msra.mxu0 0
        %1797 = vmatprep.subr.bf16.mxu0 0
        %1798 = vmatpush1.bf16.xpose.msra.mxu0 0
        %1799 = vmatprep.subr.bf16.mxu0 0
        %1800 = vmatpush1.bf16.xpose.msra.mxu0 0
        %1801 = vmatprep.mubr.bf16.mxu0 %v1581
        %1802 = vmatmul.mubr.bf16.gmra.mrb[0].mxu0 %v1580
        %v1803 = vpop.f32.mrb[0].mxu0
        %v1804 = vadd.f32 %v1764, %v1803
        %v1805 = vpop.f32.mrb[0].mxu0
        %v1806 = vpop.f32.mrb[0].mxu0
        %v1807 = vpop.f32.mrb[0].mxu0
        %1808 = vdwg.mxu0
        %1809 = vmatprep.subr.bf16.mxu0 %v1664
        %1810 = vmatpush1.bf16.xpose.msra.mxu0 %v1663
        %1811 = vmatprep.subr.bf16.mxu0 0
        %1812 = vmatpush1.bf16.xpose.msra.mxu0 0
        %1813 = vmatprep.subr.bf16.mxu0 0
        %1814 = vmatpush1.bf16.xpose.msra.mxu0 0
        %1815 = vmatprep.subr.bf16.mxu0 0
        %1816 = vmatpush1.bf16.xpose.msra.mxu0 0
        %1817 = vmatprep.subr.bf16.mxu0 0
        %1818 = vmatpush1.bf16.xpose.msra.mxu0 0
        %1819 = vmatprep.subr.bf16.mxu0 0
        %1820 = vmatpush1.bf16.xpose.msra.mxu0 0
        %1821 = vmatprep.subr.bf16.mxu0 0
        %1822 = vmatpush1.bf16.xpose.msra.mxu0 0
        %1823 = vmatprep.subr.bf16.mxu0 0
        %1824 = vmatpush1.bf16.xpose.msra.mxu0 0
        %1825 = vmatprep.subr.bf16.mxu0 0
        %1826 = vmatpush1.bf16.xpose.msra.mxu0 0
        %1827 = vmatprep.subr.bf16.mxu0 0
        %1828 = vmatpush1.bf16.xpose.msra.mxu0 0
        %1829 = vmatprep.subr.bf16.mxu0 0
        %1830 = vmatpush1.bf16.xpose.msra.mxu0 0
        %1831 = vmatprep.subr.bf16.mxu0 0
        %1832 = vmatpush1.bf16.xpose.msra.mxu0 0
        %1833 = vmatprep.subr.bf16.mxu0 0
        %1834 = vmatpush1.bf16.xpose.msra.mxu0 0
        %1835 = vmatprep.subr.bf16.mxu0 0
        %1836 = vmatpush1.bf16.xpose.msra.mxu0 0
        %1837 = vmatprep.subr.bf16.mxu0 0
        %1838 = vmatpush1.bf16.xpose.msra.mxu0 0
        %1839 = vmatprep.subr.bf16.mxu0 0
        %1840 = vmatpush1.bf16.xpose.msra.mxu0 0
        %1841 = vmatprep.mubr.bf16.mxu0 %v1583
        %1842 = vmatmul.mubr.bf16.gmra.mrb[0].mxu0 %v1582
        %v1843 = vpop.f32.mrb[0].mxu0
        %v1844 = vadd.f32 %v1804, %v1843
        %v1845 = vpop.f32.mrb[0].mxu0
        %v1846 = vpop.f32.mrb[0].mxu0
        %v1847 = vpop.f32.mrb[0].mxu0
        %1848 = vdwg.mxu0
        %1849 = vmatprep.subr.bf16.mxu0 %v1666
        %1850 = vmatpush1.bf16.xpose.msra.mxu0 %v1665
        %1851 = vmatprep.subr.bf16.mxu0 0
        %1852 = vmatpush1.bf16.xpose.msra.mxu0 0
        %1853 = vmatprep.subr.bf16.mxu0 0
        %1854 = vmatpush1.bf16.xpose.msra.mxu0 0
        %1855 = vmatprep.subr.bf16.mxu0 0
        %1856 = vmatpush1.bf16.xpose.msra.mxu0 0
        %1857 = vmatprep.subr.bf16.mxu0 0
        %1858 = vmatpush1.bf16.xpose.msra.mxu0 0
        %1859 = vmatprep.subr.bf16.mxu0 0
        %1860 = vmatpush1.bf16.xpose.msra.mxu0 0
        %1861 = vmatprep.subr.bf16.mxu0 0
        %1862 = vmatpush1.bf16.xpose.msra.mxu0 0
        %1863 = vmatprep.subr.bf16.mxu0 0
        %1864 = vmatpush1.bf16.xpose.msra.mxu0 0
        %1865 = vmatprep.subr.bf16.mxu0 0
        %1866 = vmatpush1.bf16.xpose.msra.mxu0 0
        %1867 = vmatprep.subr.bf16.mxu0 0
        %1868 = vmatpush1.bf16.xpose.msra.mxu0 0
        %1869 = vmatprep.subr.bf16.mxu0 0
        %1870 = vmatpush1.bf16.xpose.msra.mxu0 0
        %1871 = vmatprep.subr.bf16.mxu0 0
        %1872 = vmatpush1.bf16.xpose.msra.mxu0 0
        %1873 = vmatprep.subr.bf16.mxu0 0
        %1874 = vmatpush1.bf16.xpose.msra.mxu0 0
        %1875 = vmatprep.subr.bf16.mxu0 0
        %1876 = vmatpush1.bf16.xpose.msra.mxu0 0
        %1877 = vmatprep.subr.bf16.mxu0 0
        %1878 = vmatpush1.bf16.xpose.msra.mxu0 0
        %1879 = vmatprep.subr.bf16.mxu0 0
        %1880 = vmatpush1.bf16.xpose.msra.mxu0 0
        %1881 = vmatprep.mubr.bf16.mxu0 %v1585
        %1882 = vmatmul.mubr.bf16.gmra.mrb[0].mxu0 %v1584
        %v1883 = vpop.f32.mrb[0].mxu0
        %v1884 = vadd.f32 %v1844, %v1883
        %v1885 = vpop.f32.mrb[0].mxu0
        %v1886 = vpop.f32.mrb[0].mxu0
        %v1887 = vpop.f32.mrb[0].mxu0
        %1888 = vdwg.mxu0
        %1889 = vmatprep.subr.bf16.mxu0 %v1668
        %1890 = vmatpush1.bf16.xpose.msra.mxu0 %v1667
        %1891 = vmatprep.subr.bf16.mxu0 0
        %1892 = vmatpush1.bf16.xpose.msra.mxu0 0
        %1893 = vmatprep.subr.bf16.mxu0 0
        %1894 = vmatpush1.bf16.xpose.msra.mxu0 0
        %1895 = vmatprep.subr.bf16.mxu0 0
        %1896 = vmatpush1.bf16.xpose.msra.mxu0 0
        %1897 = vmatprep.subr.bf16.mxu0 0
        %1898 = vmatpush1.bf16.xpose.msra.mxu0 0
        %1899 = vmatprep.subr.bf16.mxu0 0
        %1900 = vmatpush1.bf16.xpose.msra.mxu0 0
        %1901 = vmatprep.subr.bf16.mxu0 0
        %1902 = vmatpush1.bf16.xpose.msra.mxu0 0
        %1903 = vmatprep.subr.bf16.mxu0 0
        %1904 = vmatpush1.bf16.xpose.msra.mxu0 0
        %1905 = vmatprep.subr.bf16.mxu0 0
        %1906 = vmatpush1.bf16.xpose.msra.mxu0 0
        %1907 = vmatprep.subr.bf16.mxu0 0
        %1908 = vmatpush1.bf16.xpose.msra.mxu0 0
        %1909 = vmatprep.subr.bf16.mxu0 0
        %1910 = vmatpush1.bf16.xpose.msra.mxu0 0
        %1911 = vmatprep.subr.bf16.mxu0 0
        %1912 = vmatpush1.bf16.xpose.msra.mxu0 0
        %1913 = vmatprep.subr.bf16.mxu0 0
        %1914 = vmatpush1.bf16.xpose.msra.mxu0 0
        %1915 = vmatprep.subr.bf16.mxu0 0
        %1916 = vmatpush1.bf16.xpose.msra.mxu0 0
        %1917 = vmatprep.subr.bf16.mxu0 0
        %1918 = vmatpush1.bf16.xpose.msra.mxu0 0
        %1919 = vmatprep.subr.bf16.mxu0 0
        %1920 = vmatpush1.bf16.xpose.msra.mxu0 0
        %1921 = vmatprep.mubr.bf16.mxu0 %v1587
        %1922 = vmatmul.mubr.bf16.gmra.mrb[0].mxu0 %v1586
        %v1923 = vpop.f32.mrb[0].mxu0
        %v1924 = vadd.f32 %v1884, %v1923
        %v1925 = vpop.f32.mrb[0].mxu0
        %v1926 = vpop.f32.mrb[0].mxu0
        %v1927 = vpop.f32.mrb[0].mxu0
        %1928 = vdwg.mxu0
        %1929 = vmatprep.subr.bf16.mxu0 %v1670
        %1930 = vmatpush1.bf16.xpose.msra.mxu0 %v1669
        %1931 = vmatprep.subr.bf16.mxu0 0
        %1932 = vmatpush1.bf16.xpose.msra.mxu0 0
        %1933 = vmatprep.subr.bf16.mxu0 0
        %1934 = vmatpush1.bf16.xpose.msra.mxu0 0
        %1935 = vmatprep.subr.bf16.mxu0 0
        %1936 = vmatpush1.bf16.xpose.msra.mxu0 0
        %1937 = vmatprep.subr.bf16.mxu0 0
        %1938 = vmatpush1.bf16.xpose.msra.mxu0 0
        %1939 = vmatprep.subr.bf16.mxu0 0
        %1940 = vmatpush1.bf16.xpose.msra.mxu0 0
        %1941 = vmatprep.subr.bf16.mxu0 0
        %1942 = vmatpush1.bf16.xpose.msra.mxu0 0
        %1943 = vmatprep.subr.bf16.mxu0 0
        %1944 = vmatpush1.bf16.xpose.msra.mxu0 0
        %1945 = vmatprep.subr.bf16.mxu0 0
        %1946 = vmatpush1.bf16.xpose.msra.mxu0 0
        %1947 = vmatprep.subr.bf16.mxu0 0
        %1948 = vmatpush1.bf16.xpose.msra.mxu0 0
        %1949 = vmatprep.subr.bf16.mxu0 0
        %1950 = vmatpush1.bf16.xpose.msra.mxu0 0
        %1951 = vmatprep.subr.bf16.mxu0 0
        %1952 = vmatpush1.bf16.xpose.msra.mxu0 0
        %1953 = vmatprep.subr.bf16.mxu0 0
        %1954 = vmatpush1.bf16.xpose.msra.mxu0 0
        %1955 = vmatprep.subr.bf16.mxu0 0
        %1956 = vmatpush1.bf16.xpose.msra.mxu0 0
        %1957 = vmatprep.subr.bf16.mxu0 0
        %1958 = vmatpush1.bf16.xpose.msra.mxu0 0
        %1959 = vmatprep.subr.bf16.mxu0 0
        %1960 = vmatpush1.bf16.xpose.msra.mxu0 0
        %1961 = vmatprep.mubr.bf16.mxu0 %v1589
        %1962 = vmatmul.mubr.bf16.gmra.mrb[0].mxu0 %v1588
        %v1963 = vpop.f32.mrb[0].mxu0
        %v1964 = vadd.f32 %v1924, %v1963
        %v1965 = vpop.f32.mrb[0].mxu0
        %v1966 = vpop.f32.mrb[0].mxu0
        %v1967 = vpop.f32.mrb[0].mxu0
        %1968 = vdwg.mxu0
        %1969 = vmatprep.subr.bf16.mxu0 %v1672
        %1970 = vmatpush1.bf16.xpose.msra.mxu0 %v1671
        %1971 = vmatprep.subr.bf16.mxu0 0
        %1972 = vmatpush1.bf16.xpose.msra.mxu0 0
        %1973 = vmatprep.subr.bf16.mxu0 0
        %1974 = vmatpush1.bf16.xpose.msra.mxu0 0
        %1975 = vmatprep.subr.bf16.mxu0 0
        %1976 = vmatpush1.bf16.xpose.msra.mxu0 0
        %1977 = vmatprep.subr.bf16.mxu0 0
        %1978 = vmatpush1.bf16.xpose.msra.mxu0 0
        %1979 = vmatprep.subr.bf16.mxu0 0
        %1980 = vmatpush1.bf16.xpose.msra.mxu0 0
        %1981 = vmatprep.subr.bf16.mxu0 0
        %1982 = vmatpush1.bf16.xpose.msra.mxu0 0
        %1983 = vmatprep.subr.bf16.mxu0 0
        %1984 = vmatpush1.bf16.xpose.msra.mxu0 0
        %1985 = vmatprep.subr.bf16.mxu0 0
        %1986 = vmatpush1.bf16.xpose.msra.mxu0 0
        %1987 = vmatprep.subr.bf16.mxu0 0
        %1988 = vmatpush1.bf16.xpose.msra.mxu0 0
        %1989 = vmatprep.subr.bf16.mxu0 0
        %1990 = vmatpush1.bf16.xpose.msra.mxu0 0
        %1991 = vmatprep.subr.bf16.mxu0 0
        %1992 = vmatpush1.bf16.xpose.msra.mxu0 0
        %1993 = vmatprep.subr.bf16.mxu0 0
        %1994 = vmatpush1.bf16.xpose.msra.mxu0 0
        %1995 = vmatprep.subr.bf16.mxu0 0
        %1996 = vmatpush1.bf16.xpose.msra.mxu0 0
        %1997 = vmatprep.subr.bf16.mxu0 0
        %1998 = vmatpush1.bf16.xpose.msra.mxu0 0
        %1999 = vmatprep.subr.bf16.mxu0 0
        %2000 = vmatpush1.bf16.xpose.msra.mxu0 0
        %2001 = vmatprep.mubr.bf16.mxu0 %v1591
        %2002 = vmatmul.mubr.bf16.gmra.mrb[0].mxu0 %v1590
        %v2003 = vpop.f32.mrb[0].mxu0
        %v2004 = vadd.f32 %v1964, %v2003
        %v2005 = vpop.f32.mrb[0].mxu0
        %v2006 = vpop.f32.mrb[0].mxu0
        %v2007 = vpop.f32.mrb[0].mxu0
        %2008 = vdwg.mxu0
        %v2009 = vadd.f32 %v1471, %v2004
        %v2010 = vsub.f32 %v384, 0.025
        %v2011 = vsub.f32 %v385, 0.025
        %v2012 = vsub.f32 %v386, 0.025
        %v2013 = vsub.f32 %v387, 0.025
        %v2014 = vmul.f32 %v2010, %v2010
        %v2015 = vmul.f32 %v2011, %v2011
        %v2016 = vmul.f32 %v2012, %v2012
        %v2017 = vmul.f32 %v2013, %v2013
        %v2018 = vmul.f32 %v2014, -800.0
        %v2019 = vmul.f32 %v2015, -800.0
        %v2020 = vmul.f32 %v2016, -800.0
        %v2021 = vmul.f32 %v2017, -800.0
        %v2022 = vmul.f32 %v2018, 1.442695
        %v2023 = vpow.pop %v2022
        %v2024 = vmul.f32 %v2019, 1.442695
        %v2025 = vpow.pop %v2024
        %v2026 = vmul.f32 %v2020, 1.442695
        %v2027 = vpow.pop %v2026
        %v2028 = vmul.f32 %v2021, 1.442695
        %v2029 = vpow.pop %v2028
        %v2034 = vcombine.high %v2023, %v2023
        %v2036 = vunpack.c.l.s4 1983009808
        %v2037 = vunpack.c.0.s8 %v2036
        %v2038 = vlaneseq
        %v2039 = vshrl.u32 %v2038, 7
        %v2040 = vsub.s32 %v2037, %v2039
        %v2041 = vrot.slane %v2023, %v2040
        %v2043 = vunpack.c.l.s4 1983009808
        %v2044 = vunpack.c.0.s8 %v2043
        %v2045 = vlaneseq
        %v2046 = vshrl.u32 %v2045, 7
        %v2047 = vsub.s32 %v2044, %v2046
        %v2048 = vrot.slane %v2034, %v2047
        %v2049 = vcombine.high %v2041, %v2041
        %v2050 = vcombine.high %v2048, %v2048
        %v2051 = vcombine.high %v2025, %v2025
        %v2053 = vunpack.c.l.s4 1983009808
        %v2054 = vunpack.c.0.s8 %v2053
        %v2055 = vlaneseq
        %v2056 = vshrl.u32 %v2055, 7
        %v2057 = vsub.s32 %v2054, %v2056
        %v2058 = vrot.slane %v2025, %v2057
        %v2060 = vunpack.c.l.s4 1983009808
        %v2061 = vunpack.c.0.s8 %v2060
        %v2062 = vlaneseq
        %v2063 = vshrl.u32 %v2062, 7
        %v2064 = vsub.s32 %v2061, %v2063
        %v2065 = vrot.slane %v2051, %v2064
        %v2066 = vcombine.high %v2058, %v2058
        %v2067 = vcombine.high %v2065, %v2065
        %v2068 = vcombine.high %v2027, %v2027
        %v2070 = vunpack.c.l.s4 1983009808
        %v2071 = vunpack.c.0.s8 %v2070
        %v2072 = vlaneseq
        %v2073 = vshrl.u32 %v2072, 7
        %v2074 = vsub.s32 %v2071, %v2073
        %v2075 = vrot.slane %v2027, %v2074
        %v2077 = vunpack.c.l.s4 1983009808
        %v2078 = vunpack.c.0.s8 %v2077
        %v2079 = vlaneseq
        %v2080 = vshrl.u32 %v2079, 7
        %v2081 = vsub.s32 %v2078, %v2080
        %v2082 = vrot.slane %v2068, %v2081
        %v2083 = vcombine.high %v2075, %v2075
        %v2084 = vcombine.high %v2082, %v2082
        %v2085 = vcombine.high %v2029, %v2029
        %v2087 = vunpack.c.l.s4 1983009808
        %v2088 = vunpack.c.0.s8 %v2087
        %v2089 = vlaneseq
        %v2090 = vshrl.u32 %v2089, 7
        %v2091 = vsub.s32 %v2088, %v2090
        %v2092 = vrot.slane %v2029, %v2091
        %v2094 = vunpack.c.l.s4 1983009808
        %v2095 = vunpack.c.0.s8 %v2094
        %v2096 = vlaneseq
        %v2097 = vshrl.u32 %v2096, 7
        %v2098 = vsub.s32 %v2095, %v2097
        %v2099 = vrot.slane %v2085, %v2098
        %v2100 = vcombine.high %v2092, %v2092
        %v2101 = vcombine.high %v2099, %v2099
        %v2118 = vpack.c.bf16 %v2041, %v2041
        %v2119 = vpack.c.bf16 %v2049, %v2049
        %v2120 = vpack.c.bf16 %v2048, %v2048
        %v2121 = vpack.c.bf16 %v2050, %v2050
        %v2122 = vpack.c.bf16 %v2058, %v2058
        %v2123 = vpack.c.bf16 %v2066, %v2066
        %v2124 = vpack.c.bf16 %v2065, %v2065
        %v2125 = vpack.c.bf16 %v2067, %v2067
        %v2126 = vpack.c.bf16 %v2075, %v2075
        %v2127 = vpack.c.bf16 %v2083, %v2083
        %v2128 = vpack.c.bf16 %v2082, %v2082
        %v2129 = vpack.c.bf16 %v2084, %v2084
        %v2130 = vpack.c.bf16 %v2092, %v2092
        %v2131 = vpack.c.bf16 %v2100, %v2100
        %v2132 = vpack.c.bf16 %v2099, %v2099
        %v2133 = vpack.c.bf16 %v2101, %v2101
        %s2134 = scalar_lea.vmem %s335, 384 [#allocation3]
        %v2135 = vld [vmem:[%s2134] sm:$0xff]
        %v2136 = vld [vmem:[%s2134 + $0x8] sm:$0xff]
        %v2137 = vld [vmem:[%s2134 + $0x10] sm:$0xff]
        %v2138 = vld [vmem:[%s2134 + $0x18] sm:$0xff]
        %v2139 = vld [vmem:[%s2134 + $0x20] sm:$0xff]
        %v2140 = vld [vmem:[%s2134 + $0x28] sm:$0xff]
        %v2141 = vld [vmem:[%s2134 + $0x30] sm:$0xff]
        %v2142 = vld [vmem:[%s2134 + $0x38] sm:$0xff]
        %v2143 = vld [vmem:[%s2134 + $0x40] sm:$0xff]
        %v2144 = vld [vmem:[%s2134 + $0x48] sm:$0xff]
        %v2145 = vld [vmem:[%s2134 + $0x50] sm:$0xff]
        %v2146 = vld [vmem:[%s2134 + $0x58] sm:$0xff]
        %v2147 = vld [vmem:[%s2134 + $0x60] sm:$0xff]
        %v2148 = vld [vmem:[%s2134 + $0x68] sm:$0xff]
        %v2149 = vld [vmem:[%s2134 + $0x70] sm:$0xff]
        %v2150 = vld [vmem:[%s2134 + $0x78] sm:$0xff]
        %v2167 = vunpack.c.l.b16 %v2135
        %v2168 = vunpack.c.h.b16 %v2135
        %v2169 = vunpack.c.l.b16 %v2136
        %v2170 = vunpack.c.h.b16 %v2136
        %v2171 = vunpack.c.l.b16 %v2137
        %v2172 = vunpack.c.h.b16 %v2137
        %v2173 = vunpack.c.l.b16 %v2138
        %v2174 = vunpack.c.h.b16 %v2138
        %v2175 = vunpack.c.l.b16 %v2139
        %v2176 = vunpack.c.h.b16 %v2139
        %v2177 = vunpack.c.l.b16 %v2140
        %v2178 = vunpack.c.h.b16 %v2140
        %v2179 = vunpack.c.l.b16 %v2141
        %v2180 = vunpack.c.h.b16 %v2141
        %v2181 = vunpack.c.l.b16 %v2142
        %v2182 = vunpack.c.h.b16 %v2142
        %v2183 = vunpack.c.l.b16 %v2143
        %v2184 = vunpack.c.h.b16 %v2143
        %v2185 = vunpack.c.l.b16 %v2144
        %v2186 = vunpack.c.h.b16 %v2144
        %v2187 = vunpack.c.l.b16 %v2145
        %v2188 = vunpack.c.h.b16 %v2145
        %v2189 = vunpack.c.l.b16 %v2146
        %v2190 = vunpack.c.h.b16 %v2146
        %v2191 = vunpack.c.l.b16 %v2147
        %v2192 = vunpack.c.h.b16 %v2147
        %v2193 = vunpack.c.l.b16 %v2148
        %v2194 = vunpack.c.h.b16 %v2148
        %v2195 = vunpack.c.l.b16 %v2149
        %v2196 = vunpack.c.h.b16 %v2149
        %v2197 = vunpack.c.l.b16 %v2150
        %v2198 = vunpack.c.h.b16 %v2150
        %v2199 = vpack.c.b16 %v2183, %v2167
        %v2200 = vpack.c.b16 %v2184, %v2168
        %v2201 = vpack.c.b16 %v2185, %v2169
        %v2202 = vpack.c.b16 %v2186, %v2170
        %v2203 = vpack.c.b16 %v2187, %v2171
        %v2204 = vpack.c.b16 %v2188, %v2172
        %v2205 = vpack.c.b16 %v2189, %v2173
        %v2206 = vpack.c.b16 %v2190, %v2174
        %v2207 = vpack.c.b16 %v2191, %v2175
        %v2208 = vpack.c.b16 %v2192, %v2176
        %v2209 = vpack.c.b16 %v2193, %v2177
        %v2210 = vpack.c.b16 %v2194, %v2178
        %v2211 = vpack.c.b16 %v2195, %v2179
        %v2212 = vpack.c.b16 %v2196, %v2180
        %v2213 = vpack.c.b16 %v2197, %v2181
        %v2214 = vpack.c.b16 %v2198, %v2182
        %2231 = vmatprep.subr.bf16.mxu0 %v2200
        %2232 = vmatpush1.bf16.xpose.msra.mxu0 %v2199
        %2233 = vmatprep.subr.bf16.mxu0 0
        %2234 = vmatpush1.bf16.xpose.msra.mxu0 0
        %2235 = vmatprep.subr.bf16.mxu0 0
        %2236 = vmatpush1.bf16.xpose.msra.mxu0 0
        %2237 = vmatprep.subr.bf16.mxu0 0
        %2238 = vmatpush1.bf16.xpose.msra.mxu0 0
        %2239 = vmatprep.subr.bf16.mxu0 0
        %2240 = vmatpush1.bf16.xpose.msra.mxu0 0
        %2241 = vmatprep.subr.bf16.mxu0 0
        %2242 = vmatpush1.bf16.xpose.msra.mxu0 0
        %2243 = vmatprep.subr.bf16.mxu0 0
        %2244 = vmatpush1.bf16.xpose.msra.mxu0 0
        %2245 = vmatprep.subr.bf16.mxu0 0
        %2246 = vmatpush1.bf16.xpose.msra.mxu0 0
        %2247 = vmatprep.subr.bf16.mxu0 0
        %2248 = vmatpush1.bf16.xpose.msra.mxu0 0
        %2249 = vmatprep.subr.bf16.mxu0 0
        %2250 = vmatpush1.bf16.xpose.msra.mxu0 0
        %2251 = vmatprep.subr.bf16.mxu0 0
        %2252 = vmatpush1.bf16.xpose.msra.mxu0 0
        %2253 = vmatprep.subr.bf16.mxu0 0
        %2254 = vmatpush1.bf16.xpose.msra.mxu0 0
        %2255 = vmatprep.subr.bf16.mxu0 0
        %2256 = vmatpush1.bf16.xpose.msra.mxu0 0
        %2257 = vmatprep.subr.bf16.mxu0 0
        %2258 = vmatpush1.bf16.xpose.msra.mxu0 0
        %2259 = vmatprep.subr.bf16.mxu0 0
        %2260 = vmatpush1.bf16.xpose.msra.mxu0 0
        %2261 = vmatprep.subr.bf16.mxu0 0
        %2262 = vmatpush1.bf16.xpose.msra.mxu0 0
        %2263 = vmatprep.mubr.bf16.mxu0 %v2119
        %2264 = vmatmul.mubr.bf16.gmra.mrb[0].mxu0 %v2118
        %v2265 = vpop.f32.mrb[0].mxu0
        %v2266 = vadd.f32 0.0, %v2265
        %v2267 = vpop.f32.mrb[0].mxu0
        %v2268 = vpop.f32.mrb[0].mxu0
        %v2269 = vpop.f32.mrb[0].mxu0
        %2270 = vdwg.mxu0
        %2271 = vmatprep.subr.bf16.mxu0 %v2202
        %2272 = vmatpush1.bf16.xpose.msra.mxu0 %v2201
        %2273 = vmatprep.subr.bf16.mxu0 0
        %2274 = vmatpush1.bf16.xpose.msra.mxu0 0
        %2275 = vmatprep.subr.bf16.mxu0 0
        %2276 = vmatpush1.bf16.xpose.msra.mxu0 0
        %2277 = vmatprep.subr.bf16.mxu0 0
        %2278 = vmatpush1.bf16.xpose.msra.mxu0 0
        %2279 = vmatprep.subr.bf16.mxu0 0
        %2280 = vmatpush1.bf16.xpose.msra.mxu0 0
        %2281 = vmatprep.subr.bf16.mxu0 0
        %2282 = vmatpush1.bf16.xpose.msra.mxu0 0
        %2283 = vmatprep.subr.bf16.mxu0 0
        %2284 = vmatpush1.bf16.xpose.msra.mxu0 0
        %2285 = vmatprep.subr.bf16.mxu0 0
        %2286 = vmatpush1.bf16.xpose.msra.mxu0 0
        %2287 = vmatprep.subr.bf16.mxu0 0
        %2288 = vmatpush1.bf16.xpose.msra.mxu0 0
        %2289 = vmatprep.subr.bf16.mxu0 0
        %2290 = vmatpush1.bf16.xpose.msra.mxu0 0
        %2291 = vmatprep.subr.bf16.mxu0 0
        %2292 = vmatpush1.bf16.xpose.msra.mxu0 0
        %2293 = vmatprep.subr.bf16.mxu0 0
        %2294 = vmatpush1.bf16.xpose.msra.mxu0 0
        %2295 = vmatprep.subr.bf16.mxu0 0
        %2296 = vmatpush1.bf16.xpose.msra.mxu0 0
        %2297 = vmatprep.subr.bf16.mxu0 0
        %2298 = vmatpush1.bf16.xpose.msra.mxu0 0
        %2299 = vmatprep.subr.bf16.mxu0 0
        %2300 = vmatpush1.bf16.xpose.msra.mxu0 0
        %2301 = vmatprep.subr.bf16.mxu0 0
        %2302 = vmatpush1.bf16.xpose.msra.mxu0 0
        %2303 = vmatprep.mubr.bf16.mxu0 %v2121
        %2304 = vmatmul.mubr.bf16.gmra.mrb[0].mxu0 %v2120
        %v2305 = vpop.f32.mrb[0].mxu0
        %v2306 = vadd.f32 %v2266, %v2305
        %v2307 = vpop.f32.mrb[0].mxu0
        %v2308 = vpop.f32.mrb[0].mxu0
        %v2309 = vpop.f32.mrb[0].mxu0
        %2310 = vdwg.mxu0
        %2311 = vmatprep.subr.bf16.mxu0 %v2204
        %2312 = vmatpush1.bf16.xpose.msra.mxu0 %v2203
        %2313 = vmatprep.subr.bf16.mxu0 0
        %2314 = vmatpush1.bf16.xpose.msra.mxu0 0
        %2315 = vmatprep.subr.bf16.mxu0 0
        %2316 = vmatpush1.bf16.xpose.msra.mxu0 0
        %2317 = vmatprep.subr.bf16.mxu0 0
        %2318 = vmatpush1.bf16.xpose.msra.mxu0 0
        %2319 = vmatprep.subr.bf16.mxu0 0
        %2320 = vmatpush1.bf16.xpose.msra.mxu0 0
        %2321 = vmatprep.subr.bf16.mxu0 0
        %2322 = vmatpush1.bf16.xpose.msra.mxu0 0
        %2323 = vmatprep.subr.bf16.mxu0 0
        %2324 = vmatpush1.bf16.xpose.msra.mxu0 0
        %2325 = vmatprep.subr.bf16.mxu0 0
        %2326 = vmatpush1.bf16.xpose.msra.mxu0 0
        %2327 = vmatprep.subr.bf16.mxu0 0
        %2328 = vmatpush1.bf16.xpose.msra.mxu0 0
        %2329 = vmatprep.subr.bf16.mxu0 0
        %2330 = vmatpush1.bf16.xpose.msra.mxu0 0
        %2331 = vmatprep.subr.bf16.mxu0 0
        %2332 = vmatpush1.bf16.xpose.msra.mxu0 0
        %2333 = vmatprep.subr.bf16.mxu0 0
        %2334 = vmatpush1.bf16.xpose.msra.mxu0 0
        %2335 = vmatprep.subr.bf16.mxu0 0
        %2336 = vmatpush1.bf16.xpose.msra.mxu0 0
        %2337 = vmatprep.subr.bf16.mxu0 0
        %2338 = vmatpush1.bf16.xpose.msra.mxu0 0
        %2339 = vmatprep.subr.bf16.mxu0 0
        %2340 = vmatpush1.bf16.xpose.msra.mxu0 0
        %2341 = vmatprep.subr.bf16.mxu0 0
        %2342 = vmatpush1.bf16.xpose.msra.mxu0 0
        %2343 = vmatprep.mubr.bf16.mxu0 %v2123
        %2344 = vmatmul.mubr.bf16.gmra.mrb[0].mxu0 %v2122
        %v2345 = vpop.f32.mrb[0].mxu0
        %v2346 = vadd.f32 %v2306, %v2345
        %v2347 = vpop.f32.mrb[0].mxu0
        %v2348 = vpop.f32.mrb[0].mxu0
        %v2349 = vpop.f32.mrb[0].mxu0
        %2350 = vdwg.mxu0
        %2351 = vmatprep.subr.bf16.mxu0 %v2206
        %2352 = vmatpush1.bf16.xpose.msra.mxu0 %v2205
        %2353 = vmatprep.subr.bf16.mxu0 0
        %2354 = vmatpush1.bf16.xpose.msra.mxu0 0
        %2355 = vmatprep.subr.bf16.mxu0 0
        %2356 = vmatpush1.bf16.xpose.msra.mxu0 0
        %2357 = vmatprep.subr.bf16.mxu0 0
        %2358 = vmatpush1.bf16.xpose.msra.mxu0 0
        %2359 = vmatprep.subr.bf16.mxu0 0
        %2360 = vmatpush1.bf16.xpose.msra.mxu0 0
        %2361 = vmatprep.subr.bf16.mxu0 0
        %2362 = vmatpush1.bf16.xpose.msra.mxu0 0
        %2363 = vmatprep.subr.bf16.mxu0 0
        %2364 = vmatpush1.bf16.xpose.msra.mxu0 0
        %2365 = vmatprep.subr.bf16.mxu0 0
        %2366 = vmatpush1.bf16.xpose.msra.mxu0 0
        %2367 = vmatprep.subr.bf16.mxu0 0
        %2368 = vmatpush1.bf16.xpose.msra.mxu0 0
        %2369 = vmatprep.subr.bf16.mxu0 0
        %2370 = vmatpush1.bf16.xpose.msra.mxu0 0
        %2371 = vmatprep.subr.bf16.mxu0 0
        %2372 = vmatpush1.bf16.xpose.msra.mxu0 0
        %2373 = vmatprep.subr.bf16.mxu0 0
        %2374 = vmatpush1.bf16.xpose.msra.mxu0 0
        %2375 = vmatprep.subr.bf16.mxu0 0
        %2376 = vmatpush1.bf16.xpose.msra.mxu0 0
        %2377 = vmatprep.subr.bf16.mxu0 0
        %2378 = vmatpush1.bf16.xpose.msra.mxu0 0
        %2379 = vmatprep.subr.bf16.mxu0 0
        %2380 = vmatpush1.bf16.xpose.msra.mxu0 0
        %2381 = vmatprep.subr.bf16.mxu0 0
        %2382 = vmatpush1.bf16.xpose.msra.mxu0 0
        %2383 = vmatprep.mubr.bf16.mxu0 %v2125
        %2384 = vmatmul.mubr.bf16.gmra.mrb[0].mxu0 %v2124
        %v2385 = vpop.f32.mrb[0].mxu0
        %v2386 = vadd.f32 %v2346, %v2385
        %v2387 = vpop.f32.mrb[0].mxu0
        %v2388 = vpop.f32.mrb[0].mxu0
        %v2389 = vpop.f32.mrb[0].mxu0
        %2390 = vdwg.mxu0
        %2391 = vmatprep.subr.bf16.mxu0 %v2208
        %2392 = vmatpush1.bf16.xpose.msra.mxu0 %v2207
        %2393 = vmatprep.subr.bf16.mxu0 0
        %2394 = vmatpush1.bf16.xpose.msra.mxu0 0
        %2395 = vmatprep.subr.bf16.mxu0 0
        %2396 = vmatpush1.bf16.xpose.msra.mxu0 0
        %2397 = vmatprep.subr.bf16.mxu0 0
        %2398 = vmatpush1.bf16.xpose.msra.mxu0 0
        %2399 = vmatprep.subr.bf16.mxu0 0
        %2400 = vmatpush1.bf16.xpose.msra.mxu0 0
        %2401 = vmatprep.subr.bf16.mxu0 0
        %2402 = vmatpush1.bf16.xpose.msra.mxu0 0
        %2403 = vmatprep.subr.bf16.mxu0 0
        %2404 = vmatpush1.bf16.xpose.msra.mxu0 0
        %2405 = vmatprep.subr.bf16.mxu0 0
        %2406 = vmatpush1.bf16.xpose.msra.mxu0 0
        %2407 = vmatprep.subr.bf16.mxu0 0
        %2408 = vmatpush1.bf16.xpose.msra.mxu0 0
        %2409 = vmatprep.subr.bf16.mxu0 0
        %2410 = vmatpush1.bf16.xpose.msra.mxu0 0
        %2411 = vmatprep.subr.bf16.mxu0 0
        %2412 = vmatpush1.bf16.xpose.msra.mxu0 0
        %2413 = vmatprep.subr.bf16.mxu0 0
        %2414 = vmatpush1.bf16.xpose.msra.mxu0 0
        %2415 = vmatprep.subr.bf16.mxu0 0
        %2416 = vmatpush1.bf16.xpose.msra.mxu0 0
        %2417 = vmatprep.subr.bf16.mxu0 0
        %2418 = vmatpush1.bf16.xpose.msra.mxu0 0
        %2419 = vmatprep.subr.bf16.mxu0 0
        %2420 = vmatpush1.bf16.xpose.msra.mxu0 0
        %2421 = vmatprep.subr.bf16.mxu0 0
        %2422 = vmatpush1.bf16.xpose.msra.mxu0 0
        %2423 = vmatprep.mubr.bf16.mxu0 %v2127
        %2424 = vmatmul.mubr.bf16.gmra.mrb[0].mxu0 %v2126
        %v2425 = vpop.f32.mrb[0].mxu0
        %v2426 = vadd.f32 %v2386, %v2425
        %v2427 = vpop.f32.mrb[0].mxu0
        %v2428 = vpop.f32.mrb[0].mxu0
        %v2429 = vpop.f32.mrb[0].mxu0
        %2430 = vdwg.mxu0
        %2431 = vmatprep.subr.bf16.mxu0 %v2210
        %2432 = vmatpush1.bf16.xpose.msra.mxu0 %v2209
        %2433 = vmatprep.subr.bf16.mxu0 0
        %2434 = vmatpush1.bf16.xpose.msra.mxu0 0
        %2435 = vmatprep.subr.bf16.mxu0 0
        %2436 = vmatpush1.bf16.xpose.msra.mxu0 0
        %2437 = vmatprep.subr.bf16.mxu0 0
        %2438 = vmatpush1.bf16.xpose.msra.mxu0 0
        %2439 = vmatprep.subr.bf16.mxu0 0
        %2440 = vmatpush1.bf16.xpose.msra.mxu0 0
        %2441 = vmatprep.subr.bf16.mxu0 0
        %2442 = vmatpush1.bf16.xpose.msra.mxu0 0
        %2443 = vmatprep.subr.bf16.mxu0 0
        %2444 = vmatpush1.bf16.xpose.msra.mxu0 0
        %2445 = vmatprep.subr.bf16.mxu0 0
        %2446 = vmatpush1.bf16.xpose.msra.mxu0 0
        %2447 = vmatprep.subr.bf16.mxu0 0
        %2448 = vmatpush1.bf16.xpose.msra.mxu0 0
        %2449 = vmatprep.subr.bf16.mxu0 0
        %2450 = vmatpush1.bf16.xpose.msra.mxu0 0
        %2451 = vmatprep.subr.bf16.mxu0 0
        %2452 = vmatpush1.bf16.xpose.msra.mxu0 0
        %2453 = vmatprep.subr.bf16.mxu0 0
        %2454 = vmatpush1.bf16.xpose.msra.mxu0 0
        %2455 = vmatprep.subr.bf16.mxu0 0
        %2456 = vmatpush1.bf16.xpose.msra.mxu0 0
        %2457 = vmatprep.subr.bf16.mxu0 0
        %2458 = vmatpush1.bf16.xpose.msra.mxu0 0
        %2459 = vmatprep.subr.bf16.mxu0 0
        %2460 = vmatpush1.bf16.xpose.msra.mxu0 0
        %2461 = vmatprep.subr.bf16.mxu0 0
        %2462 = vmatpush1.bf16.xpose.msra.mxu0 0
        %2463 = vmatprep.mubr.bf16.mxu0 %v2129
        %2464 = vmatmul.mubr.bf16.gmra.mrb[0].mxu0 %v2128
        %v2465 = vpop.f32.mrb[0].mxu0
        %v2466 = vadd.f32 %v2426, %v2465
        %v2467 = vpop.f32.mrb[0].mxu0
        %v2468 = vpop.f32.mrb[0].mxu0
        %v2469 = vpop.f32.mrb[0].mxu0
        %2470 = vdwg.mxu0
        %2471 = vmatprep.subr.bf16.mxu0 %v2212
        %2472 = vmatpush1.bf16.xpose.msra.mxu0 %v2211
        %2473 = vmatprep.subr.bf16.mxu0 0
        %2474 = vmatpush1.bf16.xpose.msra.mxu0 0
        %2475 = vmatprep.subr.bf16.mxu0 0
        %2476 = vmatpush1.bf16.xpose.msra.mxu0 0
        %2477 = vmatprep.subr.bf16.mxu0 0
        %2478 = vmatpush1.bf16.xpose.msra.mxu0 0
        %2479 = vmatprep.subr.bf16.mxu0 0
        %2480 = vmatpush1.bf16.xpose.msra.mxu0 0
        %2481 = vmatprep.subr.bf16.mxu0 0
        %2482 = vmatpush1.bf16.xpose.msra.mxu0 0
        %2483 = vmatprep.subr.bf16.mxu0 0
        %2484 = vmatpush1.bf16.xpose.msra.mxu0 0
        %2485 = vmatprep.subr.bf16.mxu0 0
        %2486 = vmatpush1.bf16.xpose.msra.mxu0 0
        %2487 = vmatprep.subr.bf16.mxu0 0
        %2488 = vmatpush1.bf16.xpose.msra.mxu0 0
        %2489 = vmatprep.subr.bf16.mxu0 0
        %2490 = vmatpush1.bf16.xpose.msra.mxu0 0
        %2491 = vmatprep.subr.bf16.mxu0 0
        %2492 = vmatpush1.bf16.xpose.msra.mxu0 0
        %2493 = vmatprep.subr.bf16.mxu0 0
        %2494 = vmatpush1.bf16.xpose.msra.mxu0 0
        %2495 = vmatprep.subr.bf16.mxu0 0
        %2496 = vmatpush1.bf16.xpose.msra.mxu0 0
        %2497 = vmatprep.subr.bf16.mxu0 0
        %2498 = vmatpush1.bf16.xpose.msra.mxu0 0
        %2499 = vmatprep.subr.bf16.mxu0 0
        %2500 = vmatpush1.bf16.xpose.msra.mxu0 0
        %2501 = vmatprep.subr.bf16.mxu0 0
        %2502 = vmatpush1.bf16.xpose.msra.mxu0 0
        %2503 = vmatprep.mubr.bf16.mxu0 %v2131
        %2504 = vmatmul.mubr.bf16.gmra.mrb[0].mxu0 %v2130
        %v2505 = vpop.f32.mrb[0].mxu0
        %v2506 = vadd.f32 %v2466, %v2505
        %v2507 = vpop.f32.mrb[0].mxu0
        %v2508 = vpop.f32.mrb[0].mxu0
        %v2509 = vpop.f32.mrb[0].mxu0
        %2510 = vdwg.mxu0
        %2511 = vmatprep.subr.bf16.mxu0 %v2214
        %2512 = vmatpush1.bf16.xpose.msra.mxu0 %v2213
        %2513 = vmatprep.subr.bf16.mxu0 0
        %2514 = vmatpush1.bf16.xpose.msra.mxu0 0
        %2515 = vmatprep.subr.bf16.mxu0 0
        %2516 = vmatpush1.bf16.xpose.msra.mxu0 0
        %2517 = vmatprep.subr.bf16.mxu0 0
        %2518 = vmatpush1.bf16.xpose.msra.mxu0 0
        %2519 = vmatprep.subr.bf16.mxu0 0
        %2520 = vmatpush1.bf16.xpose.msra.mxu0 0
        %2521 = vmatprep.subr.bf16.mxu0 0
        %2522 = vmatpush1.bf16.xpose.msra.mxu0 0
        %2523 = vmatprep.subr.bf16.mxu0 0
        %2524 = vmatpush1.bf16.xpose.msra.mxu0 0
        %2525 = vmatprep.subr.bf16.mxu0 0
        %2526 = vmatpush1.bf16.xpose.msra.mxu0 0
        %2527 = vmatprep.subr.bf16.mxu0 0
        %2528 = vmatpush1.bf16.xpose.msra.mxu0 0
        %2529 = vmatprep.subr.bf16.mxu0 0
        %2530 = vmatpush1.bf16.xpose.msra.mxu0 0
        %2531 = vmatprep.subr.bf16.mxu0 0
        %2532 = vmatpush1.bf16.xpose.msra.mxu0 0
        %2533 = vmatprep.subr.bf16.mxu0 0
        %2534 = vmatpush1.bf16.xpose.msra.mxu0 0
        %2535 = vmatprep.subr.bf16.mxu0 0
        %2536 = vmatpush1.bf16.xpose.msra.mxu0 0
        %2537 = vmatprep.subr.bf16.mxu0 0
        %2538 = vmatpush1.bf16.xpose.msra.mxu0 0
        %2539 = vmatprep.subr.bf16.mxu0 0
        %2540 = vmatpush1.bf16.xpose.msra.mxu0 0
        %2541 = vmatprep.subr.bf16.mxu0 0
        %2542 = vmatpush1.bf16.xpose.msra.mxu0 0
        %2543 = vmatprep.mubr.bf16.mxu0 %v2133
        %2544 = vmatmul.mubr.bf16.gmra.mrb[0].mxu0 %v2132
        %v2545 = vpop.f32.mrb[0].mxu0
        %v2546 = vadd.f32 %v2506, %v2545
        %v2547 = vpop.f32.mrb[0].mxu0
        %v2548 = vpop.f32.mrb[0].mxu0
        %v2549 = vpop.f32.mrb[0].mxu0
        %2550 = vdwg.mxu0
        %v2551 = vadd.f32 %v2009, %v2546
        %v2552 = vsub.f32 %v384, 0.05
        %v2553 = vsub.f32 %v385, 0.05
        %v2554 = vsub.f32 %v386, 0.05
        %v2555 = vsub.f32 %v387, 0.05
        %v2556 = vmul.f32 %v2552, %v2552
        %v2557 = vmul.f32 %v2553, %v2553
        %v2558 = vmul.f32 %v2554, %v2554
        %v2559 = vmul.f32 %v2555, %v2555
        %v2560 = vmul.f32 %v2556, -800.0
        %v2561 = vmul.f32 %v2557, -800.0
        %v2562 = vmul.f32 %v2558, -800.0
        %v2563 = vmul.f32 %v2559, -800.0
        %v2564 = vmul.f32 %v2560, 1.442695
        %v2565 = vpow.pop %v2564
        %v2566 = vmul.f32 %v2561, 1.442695
        %v2567 = vpow.pop %v2566
        %v2568 = vmul.f32 %v2562, 1.442695
        %v2569 = vpow.pop %v2568
        %v2570 = vmul.f32 %v2563, 1.442695
        %v2571 = vpow.pop %v2570
        %v2576 = vcombine.high %v2565, %v2565
        %v2578 = vunpack.c.l.s4 1983009808
        %v2579 = vunpack.c.0.s8 %v2578
        %v2580 = vlaneseq
        %v2581 = vshrl.u32 %v2580, 7
        %v2582 = vsub.s32 %v2579, %v2581
        %v2583 = vrot.slane %v2565, %v2582
        %v2585 = vunpack.c.l.s4 1983009808
        %v2586 = vunpack.c.0.s8 %v2585
        %v2587 = vlaneseq
        %v2588 = vshrl.u32 %v2587, 7
        %v2589 = vsub.s32 %v2586, %v2588
        %v2590 = vrot.slane %v2576, %v2589
        %v2591 = vcombine.high %v2583, %v2583
        %v2592 = vcombine.high %v2590, %v2590
        %v2593 = vcombine.high %v2567, %v2567
        %v2595 = vunpack.c.l.s4 1983009808
        %v2596 = vunpack.c.0.s8 %v2595
        %v2597 = vlaneseq
        %v2598 = vshrl.u32 %v2597, 7
        %v2599 = vsub.s32 %v2596, %v2598
        %v2600 = vrot.slane %v2567, %v2599
        %v2602 = vunpack.c.l.s4 1983009808
        %v2603 = vunpack.c.0.s8 %v2602
        %v2604 = vlaneseq
        %v2605 = vshrl.u32 %v2604, 7
        %v2606 = vsub.s32 %v2603, %v2605
        %v2607 = vrot.slane %v2593, %v2606
        %v2608 = vcombine.high %v2600, %v2600
        %v2609 = vcombine.high %v2607, %v2607
        %v2610 = vcombine.high %v2569, %v2569
        %v2612 = vunpack.c.l.s4 1983009808
        %v2613 = vunpack.c.0.s8 %v2612
        %v2614 = vlaneseq
        %v2615 = vshrl.u32 %v2614, 7
        %v2616 = vsub.s32 %v2613, %v2615
        %v2617 = vrot.slane %v2569, %v2616
        %v2619 = vunpack.c.l.s4 1983009808
        %v2620 = vunpack.c.0.s8 %v2619
        %v2621 = vlaneseq
        %v2622 = vshrl.u32 %v2621, 7
        %v2623 = vsub.s32 %v2620, %v2622
        %v2624 = vrot.slane %v2610, %v2623
        %v2625 = vcombine.high %v2617, %v2617
        %v2626 = vcombine.high %v2624, %v2624
        %v2627 = vcombine.high %v2571, %v2571
        %v2629 = vunpack.c.l.s4 1983009808
        %v2630 = vunpack.c.0.s8 %v2629
        %v2631 = vlaneseq
        %v2632 = vshrl.u32 %v2631, 7
        %v2633 = vsub.s32 %v2630, %v2632
        %v2634 = vrot.slane %v2571, %v2633
        %v2636 = vunpack.c.l.s4 1983009808
        %v2637 = vunpack.c.0.s8 %v2636
        %v2638 = vlaneseq
        %v2639 = vshrl.u32 %v2638, 7
        %v2640 = vsub.s32 %v2637, %v2639
        %v2641 = vrot.slane %v2627, %v2640
        %v2642 = vcombine.high %v2634, %v2634
        %v2643 = vcombine.high %v2641, %v2641
        %v2660 = vpack.c.bf16 %v2583, %v2583
        %v2661 = vpack.c.bf16 %v2591, %v2591
        %v2662 = vpack.c.bf16 %v2590, %v2590
        %v2663 = vpack.c.bf16 %v2592, %v2592
        %v2664 = vpack.c.bf16 %v2600, %v2600
        %v2665 = vpack.c.bf16 %v2608, %v2608
        %v2666 = vpack.c.bf16 %v2607, %v2607
        %v2667 = vpack.c.bf16 %v2609, %v2609
        %v2668 = vpack.c.bf16 %v2617, %v2617
        %v2669 = vpack.c.bf16 %v2625, %v2625
        %v2670 = vpack.c.bf16 %v2624, %v2624
        %v2671 = vpack.c.bf16 %v2626, %v2626
        %v2672 = vpack.c.bf16 %v2634, %v2634
        %v2673 = vpack.c.bf16 %v2642, %v2642
        %v2674 = vpack.c.bf16 %v2641, %v2641
        %v2675 = vpack.c.bf16 %v2643, %v2643
        %s2676 = scalar_lea.vmem %s335, 512 [#allocation3]
        %v2677 = vld [vmem:[%s2676] sm:$0xff]
        %v2678 = vld [vmem:[%s2676 + $0x8] sm:$0xff]
        %v2679 = vld [vmem:[%s2676 + $0x10] sm:$0xff]
        %v2680 = vld [vmem:[%s2676 + $0x18] sm:$0xff]
        %v2681 = vld [vmem:[%s2676 + $0x20] sm:$0xff]
        %v2682 = vld [vmem:[%s2676 + $0x28] sm:$0xff]
        %v2683 = vld [vmem:[%s2676 + $0x30] sm:$0xff]
        %v2684 = vld [vmem:[%s2676 + $0x38] sm:$0xff]
        %v2685 = vld [vmem:[%s2676 + $0x40] sm:$0xff]
        %v2686 = vld [vmem:[%s2676 + $0x48] sm:$0xff]
        %v2687 = vld [vmem:[%s2676 + $0x50] sm:$0xff]
        %v2688 = vld [vmem:[%s2676 + $0x58] sm:$0xff]
        %v2689 = vld [vmem:[%s2676 + $0x60] sm:$0xff]
        %v2690 = vld [vmem:[%s2676 + $0x68] sm:$0xff]
        %v2691 = vld [vmem:[%s2676 + $0x70] sm:$0xff]
        %v2692 = vld [vmem:[%s2676 + $0x78] sm:$0xff]
        %v2709 = vunpack.c.l.b16 %v2677
        %v2710 = vunpack.c.h.b16 %v2677
        %v2711 = vunpack.c.l.b16 %v2678
        %v2712 = vunpack.c.h.b16 %v2678
        %v2713 = vunpack.c.l.b16 %v2679
        %v2714 = vunpack.c.h.b16 %v2679
        %v2715 = vunpack.c.l.b16 %v2680
        %v2716 = vunpack.c.h.b16 %v2680
        %v2717 = vunpack.c.l.b16 %v2681
        %v2718 = vunpack.c.h.b16 %v2681
        %v2719 = vunpack.c.l.b16 %v2682
        %v2720 = vunpack.c.h.b16 %v2682
        %v2721 = vunpack.c.l.b16 %v2683
        %v2722 = vunpack.c.h.b16 %v2683
        %v2723 = vunpack.c.l.b16 %v2684
        %v2724 = vunpack.c.h.b16 %v2684
        %v2725 = vunpack.c.l.b16 %v2685
        %v2726 = vunpack.c.h.b16 %v2685
        %v2727 = vunpack.c.l.b16 %v2686
        %v2728 = vunpack.c.h.b16 %v2686
        %v2729 = vunpack.c.l.b16 %v2687
        %v2730 = vunpack.c.h.b16 %v2687
        %v2731 = vunpack.c.l.b16 %v2688
        %v2732 = vunpack.c.h.b16 %v2688
        %v2733 = vunpack.c.l.b16 %v2689
        %v2734 = vunpack.c.h.b16 %v2689
        %v2735 = vunpack.c.l.b16 %v2690
        %v2736 = vunpack.c.h.b16 %v2690
        %v2737 = vunpack.c.l.b16 %v2691
        %v2738 = vunpack.c.h.b16 %v2691
        %v2739 = vunpack.c.l.b16 %v2692
        %v2740 = vunpack.c.h.b16 %v2692
        %v2741 = vpack.c.b16 %v2725, %v2709
        %v2742 = vpack.c.b16 %v2726, %v2710
        %v2743 = vpack.c.b16 %v2727, %v2711
        %v2744 = vpack.c.b16 %v2728, %v2712
        %v2745 = vpack.c.b16 %v2729, %v2713
        %v2746 = vpack.c.b16 %v2730, %v2714
        %v2747 = vpack.c.b16 %v2731, %v2715
        %v2748 = vpack.c.b16 %v2732, %v2716
        %v2749 = vpack.c.b16 %v2733, %v2717
        %v2750 = vpack.c.b16 %v2734, %v2718
        %v2751 = vpack.c.b16 %v2735, %v2719
        %v2752 = vpack.c.b16 %v2736, %v2720
        %v2753 = vpack.c.b16 %v2737, %v2721
        %v2754 = vpack.c.b16 %v2738, %v2722
        %v2755 = vpack.c.b16 %v2739, %v2723
        %v2756 = vpack.c.b16 %v2740, %v2724
        %2773 = vmatprep.subr.bf16.mxu0 %v2742
        %2774 = vmatpush1.bf16.xpose.msra.mxu0 %v2741
        %2775 = vmatprep.subr.bf16.mxu0 0
        %2776 = vmatpush1.bf16.xpose.msra.mxu0 0
        %2777 = vmatprep.subr.bf16.mxu0 0
        %2778 = vmatpush1.bf16.xpose.msra.mxu0 0
        %2779 = vmatprep.subr.bf16.mxu0 0
        %2780 = vmatpush1.bf16.xpose.msra.mxu0 0
        %2781 = vmatprep.subr.bf16.mxu0 0
        %2782 = vmatpush1.bf16.xpose.msra.mxu0 0
        %2783 = vmatprep.subr.bf16.mxu0 0
        %2784 = vmatpush1.bf16.xpose.msra.mxu0 0
        %2785 = vmatprep.subr.bf16.mxu0 0
        %2786 = vmatpush1.bf16.xpose.msra.mxu0 0
        %2787 = vmatprep.subr.bf16.mxu0 0
        %2788 = vmatpush1.bf16.xpose.msra.mxu0 0
        %2789 = vmatprep.subr.bf16.mxu0 0
        %2790 = vmatpush1.bf16.xpose.msra.mxu0 0
        %2791 = vmatprep.subr.bf16.mxu0 0
        %2792 = vmatpush1.bf16.xpose.msra.mxu0 0
        %2793 = vmatprep.subr.bf16.mxu0 0
        %2794 = vmatpush1.bf16.xpose.msra.mxu0 0
        %2795 = vmatprep.subr.bf16.mxu0 0
        %2796 = vmatpush1.bf16.xpose.msra.mxu0 0
        %2797 = vmatprep.subr.bf16.mxu0 0
        %2798 = vmatpush1.bf16.xpose.msra.mxu0 0
        %2799 = vmatprep.subr.bf16.mxu0 0
        %2800 = vmatpush1.bf16.xpose.msra.mxu0 0
        %2801 = vmatprep.subr.bf16.mxu0 0
        %2802 = vmatpush1.bf16.xpose.msra.mxu0 0
        %2803 = vmatprep.subr.bf16.mxu0 0
        %2804 = vmatpush1.bf16.xpose.msra.mxu0 0
        %2805 = vmatprep.mubr.bf16.mxu0 %v2661
        %2806 = vmatmul.mubr.bf16.gmra.mrb[0].mxu0 %v2660
        %v2807 = vpop.f32.mrb[0].mxu0
        %v2808 = vadd.f32 0.0, %v2807
        %v2809 = vpop.f32.mrb[0].mxu0
        %v2810 = vpop.f32.mrb[0].mxu0
        %v2811 = vpop.f32.mrb[0].mxu0
        %2812 = vdwg.mxu0
        %2813 = vmatprep.subr.bf16.mxu0 %v2744
        %2814 = vmatpush1.bf16.xpose.msra.mxu0 %v2743
        %2815 = vmatprep.subr.bf16.mxu0 0
        %2816 = vmatpush1.bf16.xpose.msra.mxu0 0
        %2817 = vmatprep.subr.bf16.mxu0 0
        %2818 = vmatpush1.bf16.xpose.msra.mxu0 0
        %2819 = vmatprep.subr.bf16.mxu0 0
        %2820 = vmatpush1.bf16.xpose.msra.mxu0 0
        %2821 = vmatprep.subr.bf16.mxu0 0
        %2822 = vmatpush1.bf16.xpose.msra.mxu0 0
        %2823 = vmatprep.subr.bf16.mxu0 0
        %2824 = vmatpush1.bf16.xpose.msra.mxu0 0
        %2825 = vmatprep.subr.bf16.mxu0 0
        %2826 = vmatpush1.bf16.xpose.msra.mxu0 0
        %2827 = vmatprep.subr.bf16.mxu0 0
        %2828 = vmatpush1.bf16.xpose.msra.mxu0 0
        %2829 = vmatprep.subr.bf16.mxu0 0
        %2830 = vmatpush1.bf16.xpose.msra.mxu0 0
        %2831 = vmatprep.subr.bf16.mxu0 0
        %2832 = vmatpush1.bf16.xpose.msra.mxu0 0
        %2833 = vmatprep.subr.bf16.mxu0 0
        %2834 = vmatpush1.bf16.xpose.msra.mxu0 0
        %2835 = vmatprep.subr.bf16.mxu0 0
        %2836 = vmatpush1.bf16.xpose.msra.mxu0 0
        %2837 = vmatprep.subr.bf16.mxu0 0
        %2838 = vmatpush1.bf16.xpose.msra.mxu0 0
        %2839 = vmatprep.subr.bf16.mxu0 0
        %2840 = vmatpush1.bf16.xpose.msra.mxu0 0
        %2841 = vmatprep.subr.bf16.mxu0 0
        %2842 = vmatpush1.bf16.xpose.msra.mxu0 0
        %2843 = vmatprep.subr.bf16.mxu0 0
        %2844 = vmatpush1.bf16.xpose.msra.mxu0 0
        %2845 = vmatprep.mubr.bf16.mxu0 %v2663
        %2846 = vmatmul.mubr.bf16.gmra.mrb[0].mxu0 %v2662
        %v2847 = vpop.f32.mrb[0].mxu0
        %v2848 = vadd.f32 %v2808, %v2847
        %v2849 = vpop.f32.mrb[0].mxu0
        %v2850 = vpop.f32.mrb[0].mxu0
        %v2851 = vpop.f32.mrb[0].mxu0
        %2852 = vdwg.mxu0
        %2853 = vmatprep.subr.bf16.mxu0 %v2746
        %2854 = vmatpush1.bf16.xpose.msra.mxu0 %v2745
        %2855 = vmatprep.subr.bf16.mxu0 0
        %2856 = vmatpush1.bf16.xpose.msra.mxu0 0
        %2857 = vmatprep.subr.bf16.mxu0 0
        %2858 = vmatpush1.bf16.xpose.msra.mxu0 0
        %2859 = vmatprep.subr.bf16.mxu0 0
        %2860 = vmatpush1.bf16.xpose.msra.mxu0 0
        %2861 = vmatprep.subr.bf16.mxu0 0
        %2862 = vmatpush1.bf16.xpose.msra.mxu0 0
        %2863 = vmatprep.subr.bf16.mxu0 0
        %2864 = vmatpush1.bf16.xpose.msra.mxu0 0
        %2865 = vmatprep.subr.bf16.mxu0 0
        %2866 = vmatpush1.bf16.xpose.msra.mxu0 0
        %2867 = vmatprep.subr.bf16.mxu0 0
        %2868 = vmatpush1.bf16.xpose.msra.mxu0 0
        %2869 = vmatprep.subr.bf16.mxu0 0
        %2870 = vmatpush1.bf16.xpose.msra.mxu0 0
        %2871 = vmatprep.subr.bf16.mxu0 0
        %2872 = vmatpush1.bf16.xpose.msra.mxu0 0
        %2873 = vmatprep.subr.bf16.mxu0 0
        %2874 = vmatpush1.bf16.xpose.msra.mxu0 0
        %2875 = vmatprep.subr.bf16.mxu0 0
        %2876 = vmatpush1.bf16.xpose.msra.mxu0 0
        %2877 = vmatprep.subr.bf16.mxu0 0
        %2878 = vmatpush1.bf16.xpose.msra.mxu0 0
        %2879 = vmatprep.subr.bf16.mxu0 0
        %2880 = vmatpush1.bf16.xpose.msra.mxu0 0
        %2881 = vmatprep.subr.bf16.mxu0 0
        %2882 = vmatpush1.bf16.xpose.msra.mxu0 0
        %2883 = vmatprep.subr.bf16.mxu0 0
        %2884 = vmatpush1.bf16.xpose.msra.mxu0 0
        %2885 = vmatprep.mubr.bf16.mxu0 %v2665
        %2886 = vmatmul.mubr.bf16.gmra.mrb[0].mxu0 %v2664
        %v2887 = vpop.f32.mrb[0].mxu0
        %v2888 = vadd.f32 %v2848, %v2887
        %v2889 = vpop.f32.mrb[0].mxu0
        %v2890 = vpop.f32.mrb[0].mxu0
        %v2891 = vpop.f32.mrb[0].mxu0
        %2892 = vdwg.mxu0
        %2893 = vmatprep.subr.bf16.mxu0 %v2748
        %2894 = vmatpush1.bf16.xpose.msra.mxu0 %v2747
        %2895 = vmatprep.subr.bf16.mxu0 0
        %2896 = vmatpush1.bf16.xpose.msra.mxu0 0
        %2897 = vmatprep.subr.bf16.mxu0 0
        %2898 = vmatpush1.bf16.xpose.msra.mxu0 0
        %2899 = vmatprep.subr.bf16.mxu0 0
        %2900 = vmatpush1.bf16.xpose.msra.mxu0 0
        %2901 = vmatprep.subr.bf16.mxu0 0
        %2902 = vmatpush1.bf16.xpose.msra.mxu0 0
        %2903 = vmatprep.subr.bf16.mxu0 0
        %2904 = vmatpush1.bf16.xpose.msra.mxu0 0
        %2905 = vmatprep.subr.bf16.mxu0 0
        %2906 = vmatpush1.bf16.xpose.msra.mxu0 0
        %2907 = vmatprep.subr.bf16.mxu0 0
        %2908 = vmatpush1.bf16.xpose.msra.mxu0 0
        %2909 = vmatprep.subr.bf16.mxu0 0
        %2910 = vmatpush1.bf16.xpose.msra.mxu0 0
        %2911 = vmatprep.subr.bf16.mxu0 0
        %2912 = vmatpush1.bf16.xpose.msra.mxu0 0
        %2913 = vmatprep.subr.bf16.mxu0 0
        %2914 = vmatpush1.bf16.xpose.msra.mxu0 0
        %2915 = vmatprep.subr.bf16.mxu0 0
        %2916 = vmatpush1.bf16.xpose.msra.mxu0 0
        %2917 = vmatprep.subr.bf16.mxu0 0
        %2918 = vmatpush1.bf16.xpose.msra.mxu0 0
        %2919 = vmatprep.subr.bf16.mxu0 0
        %2920 = vmatpush1.bf16.xpose.msra.mxu0 0
        %2921 = vmatprep.subr.bf16.mxu0 0
        %2922 = vmatpush1.bf16.xpose.msra.mxu0 0
        %2923 = vmatprep.subr.bf16.mxu0 0
        %2924 = vmatpush1.bf16.xpose.msra.mxu0 0
        %2925 = vmatprep.mubr.bf16.mxu0 %v2667
        %2926 = vmatmul.mubr.bf16.gmra.mrb[0].mxu0 %v2666
        %v2927 = vpop.f32.mrb[0].mxu0
        %v2928 = vadd.f32 %v2888, %v2927
        %v2929 = vpop.f32.mrb[0].mxu0
        %v2930 = vpop.f32.mrb[0].mxu0
        %v2931 = vpop.f32.mrb[0].mxu0
        %2932 = vdwg.mxu0
        %2933 = vmatprep.subr.bf16.mxu0 %v2750
        %2934 = vmatpush1.bf16.xpose.msra.mxu0 %v2749
        %2935 = vmatprep.subr.bf16.mxu0 0
        %2936 = vmatpush1.bf16.xpose.msra.mxu0 0
        %2937 = vmatprep.subr.bf16.mxu0 0
        %2938 = vmatpush1.bf16.xpose.msra.mxu0 0
        %2939 = vmatprep.subr.bf16.mxu0 0
        %2940 = vmatpush1.bf16.xpose.msra.mxu0 0
        %2941 = vmatprep.subr.bf16.mxu0 0
        %2942 = vmatpush1.bf16.xpose.msra.mxu0 0
        %2943 = vmatprep.subr.bf16.mxu0 0
        %2944 = vmatpush1.bf16.xpose.msra.mxu0 0
        %2945 = vmatprep.subr.bf16.mxu0 0
        %2946 = vmatpush1.bf16.xpose.msra.mxu0 0
        %2947 = vmatprep.subr.bf16.mxu0 0
        %2948 = vmatpush1.bf16.xpose.msra.mxu0 0
        %2949 = vmatprep.subr.bf16.mxu0 0
        %2950 = vmatpush1.bf16.xpose.msra.mxu0 0
        %2951 = vmatprep.subr.bf16.mxu0 0
        %2952 = vmatpush1.bf16.xpose.msra.mxu0 0
        %2953 = vmatprep.subr.bf16.mxu0 0
        %2954 = vmatpush1.bf16.xpose.msra.mxu0 0
        %2955 = vmatprep.subr.bf16.mxu0 0
        %2956 = vmatpush1.bf16.xpose.msra.mxu0 0
        %2957 = vmatprep.subr.bf16.mxu0 0
        %2958 = vmatpush1.bf16.xpose.msra.mxu0 0
        %2959 = vmatprep.subr.bf16.mxu0 0
        %2960 = vmatpush1.bf16.xpose.msra.mxu0 0
        %2961 = vmatprep.subr.bf16.mxu0 0
        %2962 = vmatpush1.bf16.xpose.msra.mxu0 0
        %2963 = vmatprep.subr.bf16.mxu0 0
        %2964 = vmatpush1.bf16.xpose.msra.mxu0 0
        %2965 = vmatprep.mubr.bf16.mxu0 %v2669
        %2966 = vmatmul.mubr.bf16.gmra.mrb[0].mxu0 %v2668
        %v2967 = vpop.f32.mrb[0].mxu0
        %v2968 = vadd.f32 %v2928, %v2967
        %v2969 = vpop.f32.mrb[0].mxu0
        %v2970 = vpop.f32.mrb[0].mxu0
        %v2971 = vpop.f32.mrb[0].mxu0
        %2972 = vdwg.mxu0
        %2973 = vmatprep.subr.bf16.mxu0 %v2752
        %2974 = vmatpush1.bf16.xpose.msra.mxu0 %v2751
        %2975 = vmatprep.subr.bf16.mxu0 0
        %2976 = vmatpush1.bf16.xpose.msra.mxu0 0
        %2977 = vmatprep.subr.bf16.mxu0 0
        %2978 = vmatpush1.bf16.xpose.msra.mxu0 0
        %2979 = vmatprep.subr.bf16.mxu0 0
        %2980 = vmatpush1.bf16.xpose.msra.mxu0 0
        %2981 = vmatprep.subr.bf16.mxu0 0
        %2982 = vmatpush1.bf16.xpose.msra.mxu0 0
        %2983 = vmatprep.subr.bf16.mxu0 0
        %2984 = vmatpush1.bf16.xpose.msra.mxu0 0
        %2985 = vmatprep.subr.bf16.mxu0 0
        %2986 = vmatpush1.bf16.xpose.msra.mxu0 0
        %2987 = vmatprep.subr.bf16.mxu0 0
        %2988 = vmatpush1.bf16.xpose.msra.mxu0 0
        %2989 = vmatprep.subr.bf16.mxu0 0
        %2990 = vmatpush1.bf16.xpose.msra.mxu0 0
        %2991 = vmatprep.subr.bf16.mxu0 0
        %2992 = vmatpush1.bf16.xpose.msra.mxu0 0
        %2993 = vmatprep.subr.bf16.mxu0 0
        %2994 = vmatpush1.bf16.xpose.msra.mxu0 0
        %2995 = vmatprep.subr.bf16.mxu0 0
        %2996 = vmatpush1.bf16.xpose.msra.mxu0 0
        %2997 = vmatprep.subr.bf16.mxu0 0
        %2998 = vmatpush1.bf16.xpose.msra.mxu0 0
        %2999 = vmatprep.subr.bf16.mxu0 0
        %3000 = vmatpush1.bf16.xpose.msra.mxu0 0
        %3001 = vmatprep.subr.bf16.mxu0 0
        %3002 = vmatpush1.bf16.xpose.msra.mxu0 0
        %3003 = vmatprep.subr.bf16.mxu0 0
        %3004 = vmatpush1.bf16.xpose.msra.mxu0 0
        %3005 = vmatprep.mubr.bf16.mxu0 %v2671
        %3006 = vmatmul.mubr.bf16.gmra.mrb[0].mxu0 %v2670
        %v3007 = vpop.f32.mrb[0].mxu0
        %v3008 = vadd.f32 %v2968, %v3007
        %v3009 = vpop.f32.mrb[0].mxu0
        %v3010 = vpop.f32.mrb[0].mxu0
        %v3011 = vpop.f32.mrb[0].mxu0
        %3012 = vdwg.mxu0
        %3013 = vmatprep.subr.bf16.mxu0 %v2754
        %3014 = vmatpush1.bf16.xpose.msra.mxu0 %v2753
        %3015 = vmatprep.subr.bf16.mxu0 0
        %3016 = vmatpush1.bf16.xpose.msra.mxu0 0
        %3017 = vmatprep.subr.bf16.mxu0 0
        %3018 = vmatpush1.bf16.xpose.msra.mxu0 0
        %3019 = vmatprep.subr.bf16.mxu0 0
        %3020 = vmatpush1.bf16.xpose.msra.mxu0 0
        %3021 = vmatprep.subr.bf16.mxu0 0
        %3022 = vmatpush1.bf16.xpose.msra.mxu0 0
        %3023 = vmatprep.subr.bf16.mxu0 0
        %3024 = vmatpush1.bf16.xpose.msra.mxu0 0
        %3025 = vmatprep.subr.bf16.mxu0 0
        %3026 = vmatpush1.bf16.xpose.msra.mxu0 0
        %3027 = vmatprep.subr.bf16.mxu0 0
        %3028 = vmatpush1.bf16.xpose.msra.mxu0 0
        %3029 = vmatprep.subr.bf16.mxu0 0
        %3030 = vmatpush1.bf16.xpose.msra.mxu0 0
        %3031 = vmatprep.subr.bf16.mxu0 0
        %3032 = vmatpush1.bf16.xpose.msra.mxu0 0
        %3033 = vmatprep.subr.bf16.mxu0 0
        %3034 = vmatpush1.bf16.xpose.msra.mxu0 0
        %3035 = vmatprep.subr.bf16.mxu0 0
        %3036 = vmatpush1.bf16.xpose.msra.mxu0 0
        %3037 = vmatprep.subr.bf16.mxu0 0
        %3038 = vmatpush1.bf16.xpose.msra.mxu0 0
        %3039 = vmatprep.subr.bf16.mxu0 0
        %3040 = vmatpush1.bf16.xpose.msra.mxu0 0
        %3041 = vmatprep.subr.bf16.mxu0 0
        %3042 = vmatpush1.bf16.xpose.msra.mxu0 0
        %3043 = vmatprep.subr.bf16.mxu0 0
        %3044 = vmatpush1.bf16.xpose.msra.mxu0 0
        %3045 = vmatprep.mubr.bf16.mxu0 %v2673
        %3046 = vmatmul.mubr.bf16.gmra.mrb[0].mxu0 %v2672
        %v3047 = vpop.f32.mrb[0].mxu0
        %v3048 = vadd.f32 %v3008, %v3047
        %v3049 = vpop.f32.mrb[0].mxu0
        %v3050 = vpop.f32.mrb[0].mxu0
        %v3051 = vpop.f32.mrb[0].mxu0
        %3052 = vdwg.mxu0
        %3053 = vmatprep.subr.bf16.mxu0 %v2756
        %3054 = vmatpush1.bf16.xpose.msra.mxu0 %v2755
        %3055 = vmatprep.subr.bf16.mxu0 0
        %3056 = vmatpush1.bf16.xpose.msra.mxu0 0
        %3057 = vmatprep.subr.bf16.mxu0 0
        %3058 = vmatpush1.bf16.xpose.msra.mxu0 0
        %3059 = vmatprep.subr.bf16.mxu0 0
        %3060 = vmatpush1.bf16.xpose.msra.mxu0 0
        %3061 = vmatprep.subr.bf16.mxu0 0
        %3062 = vmatpush1.bf16.xpose.msra.mxu0 0
        %3063 = vmatprep.subr.bf16.mxu0 0
        %3064 = vmatpush1.bf16.xpose.msra.mxu0 0
        %3065 = vmatprep.subr.bf16.mxu0 0
        %3066 = vmatpush1.bf16.xpose.msra.mxu0 0
        %3067 = vmatprep.subr.bf16.mxu0 0
        %3068 = vmatpush1.bf16.xpose.msra.mxu0 0
        %3069 = vmatprep.subr.bf16.mxu0 0
        %3070 = vmatpush1.bf16.xpose.msra.mxu0 0
        %3071 = vmatprep.subr.bf16.mxu0 0
        %3072 = vmatpush1.bf16.xpose.msra.mxu0 0
        %3073 = vmatprep.subr.bf16.mxu0 0
        %3074 = vmatpush1.bf16.xpose.msra.mxu0 0
        %3075 = vmatprep.subr.bf16.mxu0 0
        %3076 = vmatpush1.bf16.xpose.msra.mxu0 0
        %3077 = vmatprep.subr.bf16.mxu0 0
        %3078 = vmatpush1.bf16.xpose.msra.mxu0 0
        %3079 = vmatprep.subr.bf16.mxu0 0
        %3080 = vmatpush1.bf16.xpose.msra.mxu0 0
        %3081 = vmatprep.subr.bf16.mxu0 0
        %3082 = vmatpush1.bf16.xpose.msra.mxu0 0
        %3083 = vmatprep.subr.bf16.mxu0 0
        %3084 = vmatpush1.bf16.xpose.msra.mxu0 0
        %3085 = vmatprep.mubr.bf16.mxu0 %v2675
        %3086 = vmatmul.mubr.bf16.gmra.mrb[0].mxu0 %v2674
        %v3087 = vpop.f32.mrb[0].mxu0
        %v3088 = vadd.f32 %v3048, %v3087
        %v3089 = vpop.f32.mrb[0].mxu0
        %v3090 = vpop.f32.mrb[0].mxu0
        %v3091 = vpop.f32.mrb[0].mxu0
        %3092 = vdwg.mxu0
        %v3093 = vadd.f32 %v2551, %v3088
        %vm3094 = vcmask 123904
        %3095 = vst.msk [vmem:[#allocation2] sm:$0x3] %vm3094, %v3093
        %p3096 = scmp.eq.s32.totalorder %s18, 1
        // Predicated region
        $region56: #{dbcnn_forward.8} parent=46 // pred_check
          %p3097 = pneg %p3096
        $region57: #{dbcnn_forward.8} parent=46 // pred_check_branch
          %3099 = sbr.rel (%p3097) target = $region59
        $region58: #{dbcnn_forward.8} parent=46 // pred_region
          %v3100 = vld [vmem:[#allocation2] sm:$0x3]
          %3101 = vst.msk [vmem:[%s376] sm:$0x3] %vm3094, %v3100
        $region59: #{dbcnn_forward.8} parent=46 // pred_fallthru
          _
        %p3102 = scmp.lt.s32.totalorder %s17, 1
        %s3103 = scalar_select %p3102, %s17, 1
        %s3104 = smul.addr %s3103, 2
        %s3105 = scalar_lea.vmem %s2, %s3104
        // Predicated region
        $region60: #{dbcnn_forward.8} parent=46 // pred_check
          %p3106 = pneg %p103
        $region61: #{dbcnn_forward.8} parent=46 // pred_check_branch
          %3108 = sbr.rel (%p3106) target = $region63
        $region62: #{dbcnn_forward.8} parent=46 // pred_region
          _
        $region63: #{dbcnn_forward.8} parent=46 // pred_fallthru
          _
      $region47: #{dbcnn_forward.8} parent=5 // pred_fallthru
        _
      %p3109 = scmp.le.s32.totalorder 2, %s8
      // Predicated region
      $region64: #{dbcnn_forward.8} parent=5 // pred_check
        %p3110 = pneg %p3109
      $region65: #{dbcnn_forward.8} parent=5 // pred_check_branch
        %3112 = sbr.rel (%p3110) target = $region67
      $region66: #{dbcnn_forward.8} parent=5 // pred_region
        %s3113 = ssub.s32 %s8, 2
        // Predicated region
        $region68: #{dbcnn_forward.8} parent=66 // pred_check
          %p3114 = pneg %p109
        $region69: #{dbcnn_forward.8} parent=66 // pred_check_branch
          %3116 = sbr.rel (%p3114) target = $region71
        $region70: #{dbcnn_forward.8} parent=66 // pred_region
          %p3117 = scmp.lt.s32.totalorder %s19, 1
          %s3118 = scalar_select %p3117, %s19, 1
          %s3119 = smul.addr %s3118, 2
          %s3120 = scalar_lea.vmem %s2, %s3119
        $region71: #{dbcnn_forward.8} parent=66 // pred_fallthru
          _
      $region67: #{dbcnn_forward.8} parent=5 // pred_fallthru
        _
    $region6: #{dbcnn_forward.8} parent=1 // loop_footer
      %s12 = sadd.s32 1, %s8
    $region7: #{dbcnn_forward.8} parent=1 // loop_footer_branch
      %7 = sbr.rel target = $region3
    $region8: #{dbcnn_forward.8} parent=1 // loop_exit
      _

</llo_original>
